<compile_context>
chip_gen: v6e
topology: v6e:2x2x1
jax: 0.10.0
libtpu: 0.0.40
codegen_flags: <defaults>
</compile_context>

<pallas_src>
import math
from functools import partial

import jax
import jax.numpy as jnp
from jax.experimental import pallas as pl
from jax.experimental.pallas import tpu as pltpu

BN_EPS = 1e-5
F32 = jnp.float32
BF16 = jnp.bfloat16


# ---------------------------------------------------------------------------
# small helpers
# ---------------------------------------------------------------------------
def _cparams(*sem):
    return pltpu.CompilerParams(
        dimension_semantics=sem,
        vmem_limit_bytes=32 * 1024 * 1024,   # modest; leaves headroom on v7x (64 MiB/TC)
    )


def _batch_spec(L, D):
    return pl.BlockSpec((1, L, D), lambda b: (b, 0, 0))


def _stat_spec(D):
    return pl.BlockSpec((1, 1, D), lambda b: (b, 0, 0))


def _const_spec(shape):
    zeros = (0,) * len(shape)
    return pl.BlockSpec(shape, lambda b: zeros)


def _bn_from_partials(sum_ref, sq_ref, gamma, beta, inv_n):
    """Finalize BatchNorm from per-batch partial sums; returns (mean, scale, shift)
    so that x_norm = (x - mean) * scale + shift  (minimal f32 VALU ops)."""
    mean = jnp.sum(sum_ref[...], axis=0) * inv_n                 # (1, D)
    var = jnp.sum(sq_ref[...], axis=0) * inv_n - mean * mean     # biased, like torch
    rstd = jax.lax.rsqrt(var + BN_EPS)
    return mean, rstd * gamma, beta


def _emit_with_stats(val_f32, out_ref, sum_ref, sq_ref):
    """Store bf16 activation tile and emit BN partial sums of the stored value."""
    v_bf = val_f32.astype(BF16)
    out_ref[0] = v_bf
    vf = v_bf.astype(F32)
    sum_ref[0] = jnp.sum(vf, axis=0, keepdims=True)
    sq_ref[0] = jnp.sum(vf * vf, axis=0, keepdims=True)


def _mhsa(q_all, k_all, v_all, wo, n_heads, dh):
    """Multi-head attention on a lane-dense (L, D) layout.
    Heads are static lane slices; output projection is accumulated per head into a
    lane-dense (L, D) f32 tile (no transposes, no concatenates).
    Softmax scale is already folded into the Q projection weights."""
    L, D = q_all.shape
    acc = jnp.zeros((L, D), F32)
    for h in range(n_heads):
        sl = slice(h * dh, (h + 1) * dh)
        # q @ k^T without an explicit transpose: contract last dims of both.
        s = jax.lax.dot_general(q_all[:, sl], k_all[:, sl],
                                (((1,), (1,)), ((), ())),
                                preferred_element_type=F32)       # (L, L) f32
        s = s - jnp.max(s, axis=-1, keepdims=True)
        p = jnp.exp(s)
        p = p * pl.reciprocal(jnp.sum(p, axis=-1, keepdims=True), approx=True)
        ctx = jnp.dot(p.astype(BF16), v_all[:, sl],
                      preferred_element_type=F32)                 # (L, dh)
        acc = acc + jnp.dot(ctx.astype(BF16), wo[sl, :],
                            preferred_element_type=F32)           # (L, D)
    return acc


# ---------------------------------------------------------------------------
# Kernel 1: x1 = x + self_attention(x, x, x)  (+ BN1 partial sums)
# ---------------------------------------------------------------------------
def _self_attn_kernel(x_ref, wqkv_ref, bqkv_ref, wo_ref, bo_ref,
                      x1_ref, s1_ref, q1_ref, *, n_heads):
    x = x_ref[0]                                                  # (L, D) f32
    D = x.shape[-1]
    dh = D // n_heads
    qkv = jnp.dot(x.astype(BF16), wqkv_ref[...],
                  preferred_element_type=F32) + bqkv_ref[...]     # (L, 3D) f32
    q_all = qkv[:, :D].astype(BF16)
    k_all = qkv[:, D:2 * D].astype(BF16)
    v_all = qkv[:, 2 * D:].astype(BF16)
    acc = _mhsa(q_all, k_all, v_all, wo_ref[...], n_heads, dh)
    x1 = x + acc + bo_ref[...]
    _emit_with_stats(x1, x1_ref, s1_ref, q1_ref)


# ---------------------------------------------------------------------------
# Kernel 2: x3 = t2v_attention(BN1(x1), ..., x_date, y_date)   (no residual)
# ---------------------------------------------------------------------------
def _t2v_attn_kernel(x1_ref, xd_ref, yd_ref, s1_ref, q1_ref,
                     bng_ref, bnb_ref,
                     wqkv_ref, bqkv_ref, wqd_ref, wkd_ref, wo_ref, bo_ref,
                     x3_ref, s2_ref, q2_ref, *, n_heads, n_rows):
    x1 = x1_ref[0].astype(F32)                                    # (L, D)
    D = x1.shape[-1]
    dh = D // n_heads
    mean, scale, shift = _bn_from_partials(s1_ref, q1_ref,
                                           bng_ref[...], bnb_ref[...], 1.0 / n_rows)
    xn = ((x1 - mean) * scale + shift).astype(BF16)               # fused norm1
    qkv = jnp.dot(xn, wqkv_ref[...],
                  preferred_element_type=F32) + bqkv_ref[...]     # (L, 3D) f32
    qd = jnp.dot(yd_ref[0].astype(BF16), wqd_ref[...], preferred_element_type=F32)
    kd = jnp.dot(xd_ref[0].astype(BF16), wkd_ref[...], preferred_element_type=F32)
    q_all = (qkv[:, :D] + qd).astype(BF16)
    k_all = (qkv[:, D:2 * D] + kd).astype(BF16)
    v_all = qkv[:, 2 * D:].astype(BF16)
    acc = _mhsa(q_all, k_all, v_all, wo_ref[...], n_heads, dh)
    x3 = acc + bo_ref[...]                                        # NO residual
    _emit_with_stats(x3, x3_ref, s2_ref, q2_ref)


# ---------------------------------------------------------------------------
# Kernel 3: z = x3 + conv2(relu(conv1(BN2(x3))))   (1x1 convs == linears)
# ---------------------------------------------------------------------------
def _ffn_kernel(x3_ref, s2_ref, q2_ref, bng_ref, bnb_ref,
                w1_ref, b1_ref, w2_ref, b2_ref,
                z_ref, s3_ref, q3_ref, *, n_rows):
    x3 = x3_ref[0].astype(F32)                                    # (L, D)
    mean, scale, shift = _bn_from_partials(s2_ref, q2_ref,
                                           bng_ref[...], bnb_ref[...], 1.0 / n_rows)
    y = ((x3 - mean) * scale + shift).astype(BF16)
    h = jnp.dot(y, w1_ref[...], preferred_element_type=F32) + b1_ref[...]
    h = jnp.maximum(h, 0.0).astype(BF16)                          # relu
    out = jnp.dot(h, w2_ref[...], preferred_element_type=F32) + b2_ref[...]
    z = x3 + out
    _emit_with_stats(z, z_ref, s3_ref, q3_ref)


# ---------------------------------------------------------------------------
# Kernel 4: out = BN3(z)
# ---------------------------------------------------------------------------
def _bn3_kernel(z_ref, s3_ref, q3_ref, bng_ref, bnb_ref, o_ref, *, n_rows):
    z = z_ref[0].astype(F32)
    mean, scale, shift = _bn_from_partials(s3_ref, q3_ref,
                                           bng_ref[...], bnb_ref[...], 1.0 / n_rows)
    o_ref[0] = (z - mean) * scale + shift


# ---------------------------------------------------------------------------
# Full T2V_DecoderLayer forward (4 fused pallas_calls, grid over batch)
# ---------------------------------------------------------------------------
def t2v_decoder_layer(x, x_date, y_date, params, *, n_heads):
    B, L, D = x.shape
    dd = x_date.shape[-1]
    n_rows = float(B * L)
    p = params

    act = _batch_spec(L, D)
    stat = _stat_spec(D)
    date = pl.BlockSpec((1, L, dd), lambda b: (b, 0, 0))
    stat_out = (jax.ShapeDtypeStruct((B, 1, D), F32),
                jax.ShapeDtypeStruct((B, 1, D), F32))

    # ---- 1) x1 = x + self_attention(x, x, x), emit BN1 partials ----
    consts1 = (p["sa_wqkv"], p["sa_bqkv"], p["sa_wo"], p["sa_bo"])
    x1, s1, q1 = pl.pallas_call(
        partial(_self_attn_kernel, n_heads=n_heads),
        grid=(B,),
        in_specs=[act] + [_const_spec(a.shape) for a in consts1],
        out_specs=(act, stat, stat),
        out_shape=(jax.ShapeDtypeStruct((B, L, D), BF16),) + stat_out,
        compiler_params=_cparams("parallel"),
    )(x, *consts1)

    # ---- 2) x3 = t2v_attention(BN1(x1), ..., x_date, y_date), emit BN2 partials ----
    consts2 = (p["bn1_g"], p["bn1_b"], p["t2v_wqkv"], p["t2v_bqkv"],
               p["t2v_wqd"], p["t2v_wkd"], p["t2v_wo"], p["t2v_bo"])
    x3, s2, q2 = pl.pallas_call(
        partial(_t2v_attn_kernel, n_heads=n_heads, n_rows=n_rows),
        grid=(B,),
        in_specs=[act, date, date, _const_spec(s1.shape), _const_spec(q1.shape)]
                 + [_const_spec(a.shape) for a in consts2],
        out_specs=(act, stat, stat),
        out_shape=(jax.ShapeDtypeStruct((B, L, D), BF16),) + stat_out,
        compiler_params=_cparams("parallel"),
    )(x1, x_date, y_date, s1, q1, *consts2)

    # ---- 3) z = x3 + FFN(BN2(x3)), emit BN3 partials ----
    consts3 = (p["bn2_g"], p["bn2_b"], p["w1"], p["b1"], p["w2"], p["b2"])
    z, s3, q3 = pl.pallas_call(
        partial(_ffn_kernel, n_rows=n_rows),
        grid=(B,),
        in_specs=[act, _const_spec(s2.shape), _const_spec(q2.shape)]
                 + [_const_spec(a.shape) for a in consts3],
        out_specs=(act, stat, stat),
        out_shape=(jax.ShapeDtypeStruct((B, L, D), BF16),) + stat_out,
        compiler_params=_cparams("parallel"),
    )(x3, s2, q2, *consts3)

    # ---- 4) out = BN3(z) ----
    consts4 = (p["bn3_g"], p["bn3_b"])
    out = pl.pallas_call(
        partial(_bn3_kernel, n_rows=n_rows),
        grid=(B,),
        in_specs=[act, _const_spec(s3.shape), _const_spec(q3.shape)]
                 + [_const_spec(a.shape) for a in consts4],
        out_specs=act,
        out_shape=jax.ShapeDtypeStruct((B, L, D), F32),
        compiler_params=_cparams("parallel"),
    )(z, s3, q3, *consts4)

    return out


# ---------------------------------------------------------------------------
# Deterministic synthetic parameters.
# Weights are stored (in, out) and pre-fused:
#   * W_q | W_k | W_v concatenated into one (D, 3D) bf16 matrix,
#   * softmax scale 1/sqrt(d_head) folded into the Q block (and date-Q weight).
# ---------------------------------------------------------------------------
def init_params(key, d_model, d_ff, d_date, n_heads):
    D, Fh, dd = d_model, d_ff, d_date
    scale = 1.0 / math.sqrt(D // n_heads)
    sd = 0.02
    ks = jax.random.split(key, 12)

    def w(k, shape):
        return sd * jax.random.normal(k, shape, F32)

    sa_wq, sa_wk, sa_wv, sa_wo = (w(ks[i], (D, D)) for i in range(4))
    t_wq, t_wk, t_wv, t_wo = (w(ks[i], (D, D)) for i in range(4, 8))
    t_wqd, t_wkd = w(ks[8], (dd, D)), w(ks[9], (dd, D))
    w1, w2 = w(ks[10], (D, Fh)), w(ks[11], (Fh, D))

    zD = jnp.zeros((1, D), F32)
    return dict(
        # injected self_attention: standard MHSA
        sa_wqkv=jnp.concatenate([sa_wq * scale, sa_wk, sa_wv], axis=1).astype(BF16),
        sa_bqkv=jnp.zeros((1, 3 * D), F32),
        sa_wo=sa_wo.astype(BF16), sa_bo=zD,
        # injected t2v_attention: MHSA + additive date conditioning on Q/K
        t2v_wqkv=jnp.concatenate([t_wq * scale, t_wk, t_wv], axis=1).astype(BF16),
        t2v_bqkv=jnp.zeros((1, 3 * D), F32),
        t2v_wqd=(t_wqd * scale).astype(BF16), t2v_wkd=t_wkd.astype(BF16),
        t2v_wo=t_wo.astype(BF16), t2v_bo=zD,
        # conv1 / conv2 (kernel_size=1 -> per-position linear)
        w1=w1.astype(BF16), b1=jnp.zeros((1, Fh), F32),
        w2=w2.astype(BF16), b2=zD,
        # BatchNorm affine params (norm1/2/3)
        bn1_g=jnp.ones((1, D), F32), bn1_b=zD,
        bn2_g=jnp.ones((1, D), F32), bn2_b=zD,
        bn3_g=jnp.ones((1, D), F32), bn3_b=zD,
    )


if __name__ == "__main__":
    B, L, D, H, D_DATE = 2, 16, 128, 4, 4          # lane-dense d_model
    D_FF = 4 * D                                   # PyTorch default d_ff = 4 * d_model

    key = jax.random.PRNGKey(0)
    kx, kxd, kyd, kp = jax.random.split(key, 4)
    x = jax.random.normal(kx, (B, L, D), F32)
    x_date = jax.random.normal(kxd, (B, L, D_DATE), F32)
    y_date = jax.random.normal(kyd, (B, L, D_DATE), F32)
    params = init_params(kp, D, D_FF, D_DATE, H)

    fwd = jax.jit(partial(t2v_decoder_layer, n_heads=H))
    y = fwd(x, x_date, y_date, params)
    jax.block_until_ready(y)
    assert y.shape == (B, L, D) and y.dtype == jnp.float32
    assert bool(jnp.isfinite(y).all())
    print("KERNEL_OK")
</pallas_src>

<mosaic_0001>
module attributes {stable_mosaic.version = 11 : i64} {
  func.func @_self_attn_kernel(%arg0: i32, %arg1: memref<1x16x128xf32, #tpu.memory_space<vmem>>, %arg2: memref<128x384xbf16, #tpu.memory_space<vmem>>, %arg3: memref<1x384xf32, #tpu.memory_space<vmem>>, %arg4: memref<128x128xbf16, #tpu.memory_space<vmem>>, %arg5: memref<1x128xf32, #tpu.memory_space<vmem>>, %arg6: memref<1x16x128xbf16, #tpu.memory_space<vmem>>, %arg7: memref<1x1x128xf32, #tpu.memory_space<vmem>>, %arg8: memref<1x1x128xf32, #tpu.memory_space<vmem>>) attributes {dimension_semantics = [#tpu.dimension_semantics<parallel>], iteration_bounds = array<i64: 2>, scalar_prefetch = 0 : i64, scratch_operands = 0 : i64, tpu.core_type = #tpu.core_type<tc>, window_params = [{transform_indices = @transform_0, window_bounds = array<i64: 1, 16, 128>}, {pipeline_mode = #tpu.pipeline_mode<synchronous>, transform_indices = @transform_1, window_bounds = array<i64: 128, 384>}, {pipeline_mode = #tpu.pipeline_mode<synchronous>, transform_indices = @transform_2, window_bounds = array<i64: 1, 384>}, {pipeline_mode = #tpu.pipeline_mode<synchronous>, transform_indices = @transform_3, window_bounds = array<i64: 128, 128>}, {pipeline_mode = #tpu.pipeline_mode<synchronous>, transform_indices = @transform_4, window_bounds = array<i64: 1, 128>}, {transform_indices = @transform_5, window_bounds = array<i64: 1, 16, 128>}, {transform_indices = @transform_6, window_bounds = array<i64: 1, 1, 128>}, {transform_indices = @transform_7, window_bounds = array<i64: 1, 1, 128>}]} {
    %c0 = arith.constant 0 : index
    %c0_0 = arith.constant 0 : index
    %c0_1 = arith.constant 0 : index
    %0 = vector.load %arg1[%c0, %c0_0, %c0_1] : memref<1x16x128xf32, #tpu.memory_space<vmem>>, vector<1x16x128xf32>
    %1 = vector.shape_cast %0 : vector<1x16x128xf32> to vector<16x128xf32>
    %2 = arith.truncf %1 : vector<16x128xf32> to vector<16x128xbf16>
    %c0_2 = arith.constant 0 : index
    %c0_3 = arith.constant 0 : index
    %3 = vector.load %arg2[%c0_2, %c0_3] : memref<128x384xbf16, #tpu.memory_space<vmem>>, vector<128x384xbf16>
    %cst = arith.constant dense<0.000000e+00> : vector<16x384xf32>
    %4 = tpu.matmul %2, %3, %cst {dimension_numbers = #tpu.dot_dimension_numbers<[1], [0], [0], [1], [0, 0, 1, 1], [], []>} : vector<16x128xbf16>, vector<128x384xbf16>, vector<16x384xf32> -> vector<16x384xf32>
    %c0_4 = arith.constant 0 : index
    %c0_5 = arith.constant 0 : index
    %5 = vector.load %arg3[%c0_4, %c0_5] : memref<1x384xf32, #tpu.memory_space<vmem>>, vector<1x384xf32>
    %6 = vector.broadcast %5 : vector<1x384xf32> to vector<16x384xf32>
    %7 = arith.addf %4, %6 : vector<16x384xf32>
    %8 = vector.extract_strided_slice %7 {offsets = [0, 0], sizes = [16, 128], strides = [1, 1]} : vector<16x384xf32> to vector<16x128xf32>
    %9 = arith.truncf %8 : vector<16x128xf32> to vector<16x128xbf16>
    %10 = vector.extract_strided_slice %7 {offsets = [0, 128], sizes = [16, 128], strides = [1, 1]} : vector<16x384xf32> to vector<16x128xf32>
    %11 = arith.truncf %10 : vector<16x128xf32> to vector<16x128xbf16>
    %12 = vector.extract_strided_slice %7 {offsets = [0, 256], sizes = [16, 128], strides = [1, 1]} : vector<16x384xf32> to vector<16x128xf32>
    %13 = arith.truncf %12 : vector<16x128xf32> to vector<16x128xbf16>
    %c0_6 = arith.constant 0 : index
    %c0_7 = arith.constant 0 : index
    %14 = vector.load %arg4[%c0_6, %c0_7] : memref<128x128xbf16, #tpu.memory_space<vmem>>, vector<128x128xbf16>
    %cst_8 = arith.constant 0.000000e+00 : f32
    %15 = vector.broadcast %cst_8 : f32 to vector<16x128xf32>
    %16 = vector.extract_strided_slice %9 {offsets = [0, 0], sizes = [16, 32], strides = [1, 1]} : vector<16x128xbf16> to vector<16x32xbf16>
    %17 = vector.extract_strided_slice %11 {offsets = [0, 0], sizes = [16, 32], strides = [1, 1]} : vector<16x128xbf16> to vector<16x32xbf16>
    %cst_9 = arith.constant dense<0.000000e+00> : vector<16x16xf32>
    %18 = tpu.matmul %16, %17, %cst_9 {dimension_numbers = #tpu.dot_dimension_numbers<[1], [1], [0], [0], [0, 0, 1, 0], [], []>} : vector<16x32xbf16>, vector<16x32xbf16>, vector<16x16xf32> -> vector<16x16xf32>
    %cst_10 = arith.constant dense<0xFF800000> : vector<16xf32>
    %19 = vector.multi_reduction <maximumf>, %18, %cst_10 [1] : vector<16x16xf32> to vector<16xf32>
    %20 = vector.shape_cast %19 : vector<16xf32> to vector<16x1xf32>
    %21 = vector.broadcast %20 : vector<16x1xf32> to vector<16x16xf32>
    %22 = arith.subf %18, %21 : vector<16x16xf32>
    %23 = math.exp %22 : vector<16x16xf32>
    %cst_11 = arith.constant dense<0.000000e+00> : vector<16xf32>
    %24 = vector.multi_reduction <add>, %23, %cst_11 [1] : vector<16x16xf32> to vector<16xf32>
    %25 = vector.shape_cast %24 : vector<16xf32> to vector<16x1xf32>
    %26 = tpu.reciprocal %25 {approx = true} : vector<16x1xf32> -> vector<16x1xf32>
    %27 = vector.broadcast %26 : vector<16x1xf32> to vector<16x16xf32>
    %28 = arith.mulf %23, %27 : vector<16x16xf32>
    %29 = arith.truncf %28 : vector<16x16xf32> to vector<16x16xbf16>
    %30 = vector.extract_strided_slice %13 {offsets = [0, 0], sizes = [16, 32], strides = [1, 1]} : vector<16x128xbf16> to vector<16x32xbf16>
    %cst_12 = arith.constant dense<0.000000e+00> : vector<16x32xf32>
    %31 = tpu.matmul %29, %30, %cst_12 {dimension_numbers = #tpu.dot_dimension_numbers<[1], [0], [0], [1], [0, 0, 1, 1], [], []>} : vector<16x16xbf16>, vector<16x32xbf16>, vector<16x32xf32> -> vector<16x32xf32>
    %32 = arith.truncf %31 : vector<16x32xf32> to vector<16x32xbf16>
    %33 = vector.extract_strided_slice %14 {offsets = [0, 0], sizes = [32, 128], strides = [1, 1]} : vector<128x128xbf16> to vector<32x128xbf16>
    %cst_13 = arith.constant dense<0.000000e+00> : vector<16x128xf32>
    %34 = tpu.matmul %32, %33, %cst_13 {dimension_numbers = #tpu.dot_dimension_numbers<[1], [0], [0], [1], [0, 0, 1, 1], [], []>} : vector<16x32xbf16>, vector<32x128xbf16>, vector<16x128xf32> -> vector<16x128xf32>
    %35 = arith.addf %15, %34 : vector<16x128xf32>
    %36 = vector.extract_strided_slice %9 {offsets = [0, 32], sizes = [16, 32], strides = [1, 1]} : vector<16x128xbf16> to vector<16x32xbf16>
    %37 = vector.extract_strided_slice %11 {offsets = [0, 32], sizes = [16, 32], strides = [1, 1]} : vector<16x128xbf16> to vector<16x32xbf16>
    %cst_14 = arith.constant dense<0.000000e+00> : vector<16x16xf32>
    %38 = tpu.matmul %36, %37, %cst_14 {dimension_numbers = #tpu.dot_dimension_numbers<[1], [1], [0], [0], [0, 0, 1, 0], [], []>} : vector<16x32xbf16>, vector<16x32xbf16>, vector<16x16xf32> -> vector<16x16xf32>
    %cst_15 = arith.constant dense<0xFF800000> : vector<16xf32>
    %39 = vector.multi_reduction <maximumf>, %38, %cst_15 [1] : vector<16x16xf32> to vector<16xf32>
    %40 = vector.shape_cast %39 : vector<16xf32> to vector<16x1xf32>
    %41 = vector.broadcast %40 : vector<16x1xf32> to vector<16x16xf32>
    %42 = arith.subf %38, %41 : vector<16x16xf32>
    %43 = math.exp %42 : vector<16x16xf32>
    %cst_16 = arith.constant dense<0.000000e+00> : vector<16xf32>
    %44 = vector.multi_reduction <add>, %43, %cst_16 [1] : vector<16x16xf32> to vector<16xf32>
    %45 = vector.shape_cast %44 : vector<16xf32> to vector<16x1xf32>
    %46 = tpu.reciprocal %45 {approx = true} : vector<16x1xf32> -> vector<16x1xf32>
    %47 = vector.broadcast %46 : vector<16x1xf32> to vector<16x16xf32>
    %48 = arith.mulf %43, %47 : vector<16x16xf32>
    %49 = arith.truncf %48 : vector<16x16xf32> to vector<16x16xbf16>
    %50 = vector.extract_strided_slice %13 {offsets = [0, 32], sizes = [16, 32], strides = [1, 1]} : vector<16x128xbf16> to vector<16x32xbf16>
    %cst_17 = arith.constant dense<0.000000e+00> : vector<16x32xf32>
    %51 = tpu.matmul %49, %50, %cst_17 {dimension_numbers = #tpu.dot_dimension_numbers<[1], [0], [0], [1], [0, 0, 1, 1], [], []>} : vector<16x16xbf16>, vector<16x32xbf16>, vector<16x32xf32> -> vector<16x32xf32>
    %52 = arith.truncf %51 : vector<16x32xf32> to vector<16x32xbf16>
    %53 = vector.extract_strided_slice %14 {offsets = [32, 0], sizes = [32, 128], strides = [1, 1]} : vector<128x128xbf16> to vector<32x128xbf16>
    %cst_18 = arith.constant dense<0.000000e+00> : vector<16x128xf32>
    %54 = tpu.matmul %52, %53, %cst_18 {dimension_numbers = #tpu.dot_dimension_numbers<[1], [0], [0], [1], [0, 0, 1, 1], [], []>} : vector<16x32xbf16>, vector<32x128xbf16>, vector<16x128xf32> -> vector<16x128xf32>
    %55 = arith.addf %35, %54 : vector<16x128xf32>
    %56 = vector.extract_strided_slice %9 {offsets = [0, 64], sizes = [16, 32], strides = [1, 1]} : vector<16x128xbf16> to vector<16x32xbf16>
    %57 = vector.extract_strided_slice %11 {offsets = [0, 64], sizes = [16, 32], strides = [1, 1]} : vector<16x128xbf16> to vector<16x32xbf16>
    %cst_19 = arith.constant dense<0.000000e+00> : vector<16x16xf32>
    %58 = tpu.matmul %56, %57, %cst_19 {dimension_numbers = #tpu.dot_dimension_numbers<[1], [1], [0], [0], [0, 0, 1, 0], [], []>} : vector<16x32xbf16>, vector<16x32xbf16>, vector<16x16xf32> -> vector<16x16xf32>
    %cst_20 = arith.constant dense<0xFF800000> : vector<16xf32>
    %59 = vector.multi_reduction <maximumf>, %58, %cst_20 [1] : vector<16x16xf32> to vector<16xf32>
    %60 = vector.shape_cast %59 : vector<16xf32> to vector<16x1xf32>
    %61 = vector.broadcast %60 : vector<16x1xf32> to vector<16x16xf32>
    %62 = arith.subf %58, %61 : vector<16x16xf32>
    %63 = math.exp %62 : vector<16x16xf32>
    %cst_21 = arith.constant dense<0.000000e+00> : vector<16xf32>
    %64 = vector.multi_reduction <add>, %63, %cst_21 [1] : vector<16x16xf32> to vector<16xf32>
    %65 = vector.shape_cast %64 : vector<16xf32> to vector<16x1xf32>
    %66 = tpu.reciprocal %65 {approx = true} : vector<16x1xf32> -> vector<16x1xf32>
    %67 = vector.broadcast %66 : vector<16x1xf32> to vector<16x16xf32>
    %68 = arith.mulf %63, %67 : vector<16x16xf32>
    %69 = arith.truncf %68 : vector<16x16xf32> to vector<16x16xbf16>
    %70 = vector.extract_strided_slice %13 {offsets = [0, 64], sizes = [16, 32], strides = [1, 1]} : vector<16x128xbf16> to vector<16x32xbf16>
    %cst_22 = arith.constant dense<0.000000e+00> : vector<16x32xf32>
    %71 = tpu.matmul %69, %70, %cst_22 {dimension_numbers = #tpu.dot_dimension_numbers<[1], [0], [0], [1], [0, 0, 1, 1], [], []>} : vector<16x16xbf16>, vector<16x32xbf16>, vector<16x32xf32> -> vector<16x32xf32>
    %72 = arith.truncf %71 : vector<16x32xf32> to vector<16x32xbf16>
    %73 = vector.extract_strided_slice %14 {offsets = [64, 0], sizes = [32, 128], strides = [1, 1]} : vector<128x128xbf16> to vector<32x128xbf16>
    %cst_23 = arith.constant dense<0.000000e+00> : vector<16x128xf32>
    %74 = tpu.matmul %72, %73, %cst_23 {dimension_numbers = #tpu.dot_dimension_numbers<[1], [0], [0], [1], [0, 0, 1, 1], [], []>} : vector<16x32xbf16>, vector<32x128xbf16>, vector<16x128xf32> -> vector<16x128xf32>
    %75 = arith.addf %55, %74 : vector<16x128xf32>
    %76 = vector.extract_strided_slice %9 {offsets = [0, 96], sizes = [16, 32], strides = [1, 1]} : vector<16x128xbf16> to vector<16x32xbf16>
    %77 = vector.extract_strided_slice %11 {offsets = [0, 96], sizes = [16, 32], strides = [1, 1]} : vector<16x128xbf16> to vector<16x32xbf16>
    %cst_24 = arith.constant dense<0.000000e+00> : vector<16x16xf32>
    %78 = tpu.matmul %76, %77, %cst_24 {dimension_numbers = #tpu.dot_dimension_numbers<[1], [1], [0], [0], [0, 0, 1, 0], [], []>} : vector<16x32xbf16>, vector<16x32xbf16>, vector<16x16xf32> -> vector<16x16xf32>
    %cst_25 = arith.constant dense<0xFF800000> : vector<16xf32>
    %79 = vector.multi_reduction <maximumf>, %78, %cst_25 [1] : vector<16x16xf32> to vector<16xf32>
    %80 = vector.shape_cast %79 : vector<16xf32> to vector<16x1xf32>
    %81 = vector.broadcast %80 : vector<16x1xf32> to vector<16x16xf32>
    %82 = arith.subf %78, %81 : vector<16x16xf32>
    %83 = math.exp %82 : vector<16x16xf32>
    %cst_26 = arith.constant dense<0.000000e+00> : vector<16xf32>
    %84 = vector.multi_reduction <add>, %83, %cst_26 [1] : vector<16x16xf32> to vector<16xf32>
    %85 = vector.shape_cast %84 : vector<16xf32> to vector<16x1xf32>
    %86 = tpu.reciprocal %85 {approx = true} : vector<16x1xf32> -> vector<16x1xf32>
    %87 = vector.broadcast %86 : vector<16x1xf32> to vector<16x16xf32>
    %88 = arith.mulf %83, %87 : vector<16x16xf32>
    %89 = arith.truncf %88 : vector<16x16xf32> to vector<16x16xbf16>
    %90 = vector.extract_strided_slice %13 {offsets = [0, 96], sizes = [16, 32], strides = [1, 1]} : vector<16x128xbf16> to vector<16x32xbf16>
    %cst_27 = arith.constant dense<0.000000e+00> : vector<16x32xf32>
    %91 = tpu.matmul %89, %90, %cst_27 {dimension_numbers = #tpu.dot_dimension_numbers<[1], [0], [0], [1], [0, 0, 1, 1], [], []>} : vector<16x16xbf16>, vector<16x32xbf16>, vector<16x32xf32> -> vector<16x32xf32>
    %92 = arith.truncf %91 : vector<16x32xf32> to vector<16x32xbf16>
    %93 = vector.extract_strided_slice %14 {offsets = [96, 0], sizes = [32, 128], strides = [1, 1]} : vector<128x128xbf16> to vector<32x128xbf16>
    %cst_28 = arith.constant dense<0.000000e+00> : vector<16x128xf32>
    %94 = tpu.matmul %92, %93, %cst_28 {dimension_numbers = #tpu.dot_dimension_numbers<[1], [0], [0], [1], [0, 0, 1, 1], [], []>} : vector<16x32xbf16>, vector<32x128xbf16>, vector<16x128xf32> -> vector<16x128xf32>
    %95 = arith.addf %75, %94 : vector<16x128xf32>
    %96 = arith.addf %1, %95 : vector<16x128xf32>
    %c0_29 = arith.constant 0 : index
    %c0_30 = arith.constant 0 : index
    %97 = vector.load %arg5[%c0_29, %c0_30] : memref<1x128xf32, #tpu.memory_space<vmem>>, vector<1x128xf32>
    %98 = vector.broadcast %97 : vector<1x128xf32> to vector<16x128xf32>
    %99 = arith.addf %96, %98 : vector<16x128xf32>
    %100 = arith.truncf %99 : vector<16x128xf32> to vector<16x128xbf16>
    %c0_31 = arith.constant 0 : index
    %c0_32 = arith.constant 0 : index
    %c0_33 = arith.constant 0 : index
    %101 = vector.load %arg6[%c0_31, %c0_32, %c0_33] : memref<1x16x128xbf16, #tpu.memory_space<vmem>>, vector<1x16x128xbf16>
    %102 = vector.shape_cast %101 : vector<1x16x128xbf16> to vector<16x128xbf16>
    %103 = vector.shape_cast %100 : vector<16x128xbf16> to vector<1x16x128xbf16>
    tpu.vector_store %arg6[%c0_31, %c0_32, %c0_33], %103 {strides = array<i32>} : memref<1x16x128xbf16, #tpu.memory_space<vmem>>, vector<1x16x128xbf16>,
    %104 = arith.extf %100 : vector<16x128xbf16> to vector<16x128xf32>
    %cst_34 = arith.constant dense<0.000000e+00> : vector<128xf32>
    %105 = vector.multi_reduction <add>, %104, %cst_34 [0] : vector<16x128xf32> to vector<128xf32>
    %106 = vector.shape_cast %105 : vector<128xf32> to vector<1x128xf32>
    %c0_35 = arith.constant 0 : index
    %c0_36 = arith.constant 0 : index
    %c0_37 = arith.constant 0 : index
    %107 = vector.load %arg7[%c0_35, %c0_36, %c0_37] : memref<1x1x128xf32, #tpu.memory_space<vmem>>, vector<1x1x128xf32>
    %108 = vector.shape_cast %107 : vector<1x1x128xf32> to vector<1x128xf32>
    %109 = vector.shape_cast %106 : vector<1x128xf32> to vector<1x1x128xf32>
    tpu.vector_store %arg7[%c0_35, %c0_36, %c0_37], %109 {strides = array<i32>} : memref<1x1x128xf32, #tpu.memory_space<vmem>>, vector<1x1x128xf32>,
    %110 = arith.mulf %104, %104 : vector<16x128xf32>
    %cst_38 = arith.constant dense<0.000000e+00> : vector<128xf32>
    %111 = vector.multi_reduction <add>, %110, %cst_38 [0] : vector<16x128xf32> to vector<128xf32>
    %112 = vector.shape_cast %111 : vector<128xf32> to vector<1x128xf32>
    %c0_39 = arith.constant 0 : index
    %c0_40 = arith.constant 0 : index
    %c0_41 = arith.constant 0 : index
    %113 = vector.load %arg8[%c0_39, %c0_40, %c0_41] : memref<1x1x128xf32, #tpu.memory_space<vmem>>, vector<1x1x128xf32>
    %114 = vector.shape_cast %113 : vector<1x1x128xf32> to vector<1x128xf32>
    %115 = vector.shape_cast %112 : vector<1x128xf32> to vector<1x1x128xf32>
    tpu.vector_store %arg8[%c0_39, %c0_40, %c0_41], %115 {strides = array<i32>} : memref<1x1x128xf32, #tpu.memory_space<vmem>>, vector<1x1x128xf32>,
    return
  }
  func.func @transform_0(%arg0: i32) -> (i32, i32, i32) {
    %c0_i32 = arith.constant 0 : i32
    %c0_i32_0 = arith.constant 0 : i32
    %c0_i32_1 = arith.constant 0 : i32
    return %arg0, %c0_i32, %c0_i32_0 : i32, i32, i32
  }
  func.func @transform_1(%arg0: i32) -> (i32, i32) {
    %c0_i32 = arith.constant 0 : i32
    %c0_i32_0 = arith.constant 0 : i32
    %c0_i32_1 = arith.constant 0 : i32
    return %c0_i32, %c0_i32_0 : i32, i32
  }
  func.func @transform_2(%arg0: i32) -> (i32, i32) {
    %c0_i32 = arith.constant 0 : i32
    %c0_i32_0 = arith.constant 0 : i32
    %c0_i32_1 = arith.constant 0 : i32
    return %c0_i32, %c0_i32_0 : i32, i32
  }
  func.func @transform_3(%arg0: i32) -> (i32, i32) {
    %c0_i32 = arith.constant 0 : i32
    %c0_i32_0 = arith.constant 0 : i32
    %c0_i32_1 = arith.constant 0 : i32
    return %c0_i32, %c0_i32_0 : i32, i32
  }
  func.func @transform_4(%arg0: i32) -> (i32, i32) {
    %c0_i32 = arith.constant 0 : i32
    %c0_i32_0 = arith.constant 0 : i32
    %c0_i32_1 = arith.constant 0 : i32
    return %c0_i32, %c0_i32_0 : i32, i32
  }
  func.func @transform_5(%arg0: i32) -> (i32, i32, i32) {
    %c0_i32 = arith.constant 0 : i32
    %c0_i32_0 = arith.constant 0 : i32
    %c0_i32_1 = arith.constant 0 : i32
    return %arg0, %c0_i32, %c0_i32_0 : i32, i32, i32
  }
  func.func @transform_6(%arg0: i32) -> (i32, i32, i32) {
    %c0_i32 = arith.constant 0 : i32
    %c0_i32_0 = arith.constant 0 : i32
    %c0_i32_1 = arith.constant 0 : i32
    return %arg0, %c0_i32, %c0_i32_0 : i32, i32, i32
  }
  func.func @transform_7(%arg0: i32) -> (i32, i32, i32) {
    %c0_i32 = arith.constant 0 : i32
    %c0_i32_0 = arith.constant 0 : i32
    %c0_i32_1 = arith.constant 0 : i32
    return %arg0, %c0_i32, %c0_i32_0 : i32, i32, i32
  }
}

module attributes {stable_mosaic.version = 11 : i64} {
  func.func @_ffn_kernel(%arg0: i32, %arg1: memref<1x16x128xbf16, #tpu.memory_space<vmem>>, %arg2: memref<2x1x128xf32, #tpu.memory_space<vmem>>, %arg3: memref<2x1x128xf32, #tpu.memory_space<vmem>>, %arg4: memref<1x128xf32, #tpu.memory_space<vmem>>, %arg5: memref<1x128xf32, #tpu.memory_space<vmem>>, %arg6: memref<128x512xbf16, #tpu.memory_space<vmem>>, %arg7: memref<1x512xf32, #tpu.memory_space<vmem>>, %arg8: memref<512x128xbf16, #tpu.memory_space<vmem>>, %arg9: memref<1x128xf32, #tpu.memory_space<vmem>>, %arg10: memref<1x16x128xbf16, #tpu.memory_space<vmem>>, %arg11: memref<1x1x128xf32, #tpu.memory_space<vmem>>, %arg12: memref<1x1x128xf32, #tpu.memory_space<vmem>>) attributes {dimension_semantics = [#tpu.dimension_semantics<parallel>], iteration_bounds = array<i64: 2>, scalar_prefetch = 0 : i64, scratch_operands = 0 : i64, tpu.core_type = #tpu.core_type<tc>, window_params = [{transform_indices = @transform_0, window_bounds = array<i64: 1, 16, 128>}, {pipeline_mode = #tpu.pipeline_mode<synchronous>, transform_indices = @transform_1, window_bounds = array<i64: 2, 1, 128>}, {pipeline_mode = #tpu.pipeline_mode<synchronous>, transform_indices = @transform_2, window_bounds = array<i64: 2, 1, 128>}, {pipeline_mode = #tpu.pipeline_mode<synchronous>, transform_indices = @transform_3, window_bounds = array<i64: 1, 128>}, {pipeline_mode = #tpu.pipeline_mode<synchronous>, transform_indices = @transform_4, window_bounds = array<i64: 1, 128>}, {pipeline_mode = #tpu.pipeline_mode<synchronous>, transform_indices = @transform_5, window_bounds = array<i64: 128, 512>}, {pipeline_mode = #tpu.pipeline_mode<synchronous>, transform_indices = @transform_6, window_bounds = array<i64: 1, 512>}, {pipeline_mode = #tpu.pipeline_mode<synchronous>, transform_indices = @transform_7, window_bounds = array<i64: 512, 128>}, {pipeline_mode = #tpu.pipeline_mode<synchronous>, transform_indices = @transform_8, window_bounds = array<i64: 1, 128>}, {transform_indices = @transform_9, window_bounds = array<i64: 1, 16, 128>}, {transform_indices = @transform_10, window_bounds = array<i64: 1, 1, 128>}, {transform_indices = @transform_11, window_bounds = array<i64: 1, 1, 128>}]} {
    %c0 = arith.constant 0 : index
    %c0_0 = arith.constant 0 : index
    %c0_1 = arith.constant 0 : index
    %0 = vector.load %arg1[%c0, %c0_0, %c0_1] : memref<1x16x128xbf16, #tpu.memory_space<vmem>>, vector<1x16x128xbf16>
    %1 = vector.shape_cast %0 : vector<1x16x128xbf16> to vector<16x128xbf16>
    %2 = arith.extf %1 : vector<16x128xbf16> to vector<16x128xf32>
    %c0_2 = arith.constant 0 : index
    %c0_3 = arith.constant 0 : index
    %3 = vector.load %arg4[%c0_2, %c0_3] : memref<1x128xf32, #tpu.memory_space<vmem>>, vector<1x128xf32>
    %c0_4 = arith.constant 0 : index
    %c0_5 = arith.constant 0 : index
    %4 = vector.load %arg5[%c0_4, %c0_5] : memref<1x128xf32, #tpu.memory_space<vmem>>, vector<1x128xf32>
    %c0_6 = arith.constant 0 : index
    %c0_7 = arith.constant 0 : index
    %c0_8 = arith.constant 0 : index
    %5 = vector.load %arg2[%c0_6, %c0_7, %c0_8] : memref<2x1x128xf32, #tpu.memory_space<vmem>>, vector<2x1x128xf32>
    %cst = arith.constant dense<0.000000e+00> : vector<1x128xf32>
    %6 = vector.multi_reduction <add>, %5, %cst [0] : vector<2x1x128xf32> to vector<1x128xf32>
    %cst_9 = arith.constant 3.125000e-02 : f32
    %7 = vector.broadcast %cst_9 : f32 to vector<1x128xf32>
    %8 = arith.mulf %6, %7 : vector<1x128xf32>
    %c0_10 = arith.constant 0 : index
    %c0_11 = arith.constant 0 : index
    %c0_12 = arith.constant 0 : index
    %9 = vector.load %arg3[%c0_10, %c0_11, %c0_12] : memref<2x1x128xf32, #tpu.memory_space<vmem>>, vector<2x1x128xf32>
    %cst_13 = arith.constant dense<0.000000e+00> : vector<1x128xf32>
    %10 = vector.multi_reduction <add>, %9, %cst_13 [0] : vector<2x1x128xf32> to vector<1x128xf32>
    %cst_14 = arith.constant 3.125000e-02 : f32
    %11 = vector.broadcast %cst_14 : f32 to vector<1x128xf32>
    %12 = arith.mulf %10, %11 : vector<1x128xf32>
    %13 = arith.mulf %8, %8 : vector<1x128xf32>
    %14 = arith.subf %12, %13 : vector<1x128xf32>
    %cst_15 = arith.constant 9.99999974E-6 : f32
    %15 = vector.broadcast %cst_15 : f32 to vector<1x128xf32>
    %16 = arith.addf %14, %15 : vector<1x128xf32>
    %17 = math.rsqrt %16 : vector<1x128xf32>
    %18 = arith.mulf %17, %3 : vector<1x128xf32>
    %19 = vector.broadcast %8 : vector<1x128xf32> to vector<16x128xf32>
    %20 = arith.subf %2, %19 : vector<16x128xf32>
    %21 = vector.broadcast %18 : vector<1x128xf32> to vector<16x128xf32>
    %22 = arith.mulf %20, %21 : vector<16x128xf32>
    %23 = vector.broadcast %4 : vector<1x128xf32> to vector<16x128xf32>
    %24 = arith.addf %22, %23 : vector<16x128xf32>
    %25 = arith.truncf %24 : vector<16x128xf32> to vector<16x128xbf16>
    %c0_16 = arith.constant 0 : index
    %c0_17 = arith.constant 0 : index
    %26 = vector.load %arg6[%c0_16, %c0_17] : memref<128x512xbf16, #tpu.memory_space<vmem>>, vector<128x512xbf16>
    %cst_18 = arith.constant dense<0.000000e+00> : vector<16x512xf32>
    %27 = tpu.matmul %25, %26, %cst_18 {dimension_numbers = #tpu.dot_dimension_numbers<[1], [0], [0], [1], [0, 0, 1, 1], [], []>} : vector<16x128xbf16>, vector<128x512xbf16>, vector<16x512xf32> -> vector<16x512xf32>
    %c0_19 = arith.constant 0 : index
    %c0_20 = arith.constant 0 : index
    %28 = vector.load %arg7[%c0_19, %c0_20] : memref<1x512xf32, #tpu.memory_space<vmem>>, vector<1x512xf32>
    %29 = vector.broadcast %28 : vector<1x512xf32> to vector<16x512xf32>
    %30 = arith.addf %27, %29 : vector<16x512xf32>
    %cst_21 = arith.constant 0.000000e+00 : f32
    %31 = vector.broadcast %cst_21 : f32 to vector<16x512xf32>
    %32 = arith.maximumf %30, %31 : vector<16x512xf32>
    %33 = arith.truncf %32 : vector<16x512xf32> to vector<16x512xbf16>
    %c0_22 = arith.constant 0 : index
    %c0_23 = arith.constant 0 : index
    %34 = vector.load %arg8[%c0_22, %c0_23] : memref<512x128xbf16, #tpu.memory_space<vmem>>, vector<512x128xbf16>
    %cst_24 = arith.constant dense<0.000000e+00> : vector<16x128xf32>
    %35 = tpu.matmul %33, %34, %cst_24 {dimension_numbers = #tpu.dot_dimension_numbers<[1], [0], [0], [1], [0, 0, 1, 1], [], []>} : vector<16x512xbf16>, vector<512x128xbf16>, vector<16x128xf32> -> vector<16x128xf32>
    %c0_25 = arith.constant 0 : index
    %c0_26 = arith.constant 0 : index
    %36 = vector.load %arg9[%c0_25, %c0_26] : memref<1x128xf32, #tpu.memory_space<vmem>>, vector<1x128xf32>
    %37 = vector.broadcast %36 : vector<1x128xf32> to vector<16x128xf32>
    %38 = arith.addf %35, %37 : vector<16x128xf32>
    %39 = arith.addf %2, %38 : vector<16x128xf32>
    %40 = arith.truncf %39 : vector<16x128xf32> to vector<16x128xbf16>
    %c0_27 = arith.constant 0 : index
    %c0_28 = arith.constant 0 : index
    %c0_29 = arith.constant 0 : index
    %41 = vector.load %arg10[%c0_27, %c0_28, %c0_29] : memref<1x16x128xbf16, #tpu.memory_space<vmem>>, vector<1x16x128xbf16>
    %42 = vector.shape_cast %41 : vector<1x16x128xbf16> to vector<16x128xbf16>
    %43 = vector.shape_cast %40 : vector<16x128xbf16> to vector<1x16x128xbf16>
    tpu.vector_store %arg10[%c0_27, %c0_28, %c0_29], %43 {strides = array<i32>} : memref<1x16x128xbf16, #tpu.memory_space<vmem>>, vector<1x16x128xbf16>,
    %44 = arith.extf %40 : vector<16x128xbf16> to vector<16x128xf32>
    %cst_30 = arith.constant dense<0.000000e+00> : vector<128xf32>
    %45 = vector.multi_reduction <add>, %44, %cst_30 [0] : vector<16x128xf32> to vector<128xf32>
    %46 = vector.shape_cast %45 : vector<128xf32> to vector<1x128xf32>
    %c0_31 = arith.constant 0 : index
    %c0_32 = arith.constant 0 : index
    %c0_33 = arith.constant 0 : index
    %47 = vector.load %arg11[%c0_31, %c0_32, %c0_33] : memref<1x1x128xf32, #tpu.memory_space<vmem>>, vector<1x1x128xf32>
    %48 = vector.shape_cast %47 : vector<1x1x128xf32> to vector<1x128xf32>
    %49 = vector.shape_cast %46 : vector<1x128xf32> to vector<1x1x128xf32>
    tpu.vector_store %arg11[%c0_31, %c0_32, %c0_33], %49 {strides = array<i32>} : memref<1x1x128xf32, #tpu.memory_space<vmem>>, vector<1x1x128xf32>,
    %50 = arith.mulf %44, %44 : vector<16x128xf32>
    %cst_34 = arith.constant dense<0.000000e+00> : vector<128xf32>
    %51 = vector.multi_reduction <add>, %50, %cst_34 [0] : vector<16x128xf32> to vector<128xf32>
    %52 = vector.shape_cast %51 : vector<128xf32> to vector<1x128xf32>
    %c0_35 = arith.constant 0 : index
    %c0_36 = arith.constant 0 : index
    %c0_37 = arith.constant 0 : index
    %53 = vector.load %arg12[%c0_35, %c0_36, %c0_37] : memref<1x1x128xf32, #tpu.memory_space<vmem>>, vector<1x1x128xf32>
    %54 = vector.shape_cast %53 : vector<1x1x128xf32> to vector<1x128xf32>
    %55 = vector.shape_cast %52 : vector<1x128xf32> to vector<1x1x128xf32>
    tpu.vector_store %arg12[%c0_35, %c0_36, %c0_37], %55 {strides = array<i32>} : memref<1x1x128xf32, #tpu.memory_space<vmem>>, vector<1x1x128xf32>,
    return
  }
  func.func @transform_0(%arg0: i32) -> (i32, i32, i32) {
    %c0_i32 = arith.constant 0 : i32
    %c0_i32_0 = arith.constant 0 : i32
    %c0_i32_1 = arith.constant 0 : i32
    return %arg0, %c0_i32, %c0_i32_0 : i32, i32, i32
  }
  func.func @transform_1(%arg0: i32) -> (i32, i32, i32) {
    %c0_i32 = arith.constant 0 : i32
    %c0_i32_0 = arith.constant 0 : i32
    %c0_i32_1 = arith.constant 0 : i32
    %c0_i32_2 = arith.constant 0 : i32
    return %c0_i32, %c0_i32_0, %c0_i32_1 : i32, i32, i32
  }
  func.func @transform_2(%arg0: i32) -> (i32, i32, i32) {
    %c0_i32 = arith.constant 0 : i32
    %c0_i32_0 = arith.constant 0 : i32
    %c0_i32_1 = arith.constant 0 : i32
    %c0_i32_2 = arith.constant 0 : i32
    return %c0_i32, %c0_i32_0, %c0_i32_1 : i32, i32, i32
  }
  func.func @transform_3(%arg0: i32) -> (i32, i32) {
    %c0_i32 = arith.constant 0 : i32
    %c0_i32_0 = arith.constant 0 : i32
    %c0_i32_1 = arith.constant 0 : i32
    return %c0_i32, %c0_i32_0 : i32, i32
  }
  func.func @transform_4(%arg0: i32) -> (i32, i32) {
    %c0_i32 = arith.constant 0 : i32
    %c0_i32_0 = arith.constant 0 : i32
    %c0_i32_1 = arith.constant 0 : i32
    return %c0_i32, %c0_i32_0 : i32, i32
  }
  func.func @transform_5(%arg0: i32) -> (i32, i32) {
    %c0_i32 = arith.constant 0 : i32
    %c0_i32_0 = arith.constant 0 : i32
    %c0_i32_1 = arith.constant 0 : i32
    return %c0_i32, %c0_i32_0 : i32, i32
  }
  func.func @transform_6(%arg0: i32) -> (i32, i32) {
    %c0_i32 = arith.constant 0 : i32
    %c0_i32_0 = arith.constant 0 : i32
    %c0_i32_1 = arith.constant 0 : i32
    return %c0_i32, %c0_i32_0 : i32, i32
  }
  func.func @transform_7(%arg0: i32) -> (i32, i32) {
    %c0_i32 = arith.constant 0 : i32
    %c0_i32_0 = arith.constant 0 : i32
    %c0_i32_1 = arith.constant 0 : i32
    return %c0_i32, %c0_i32_0 : i32, i32
  }
  func.func @transform_8(%arg0: i32) -> (i32, i32) {
    %c0_i32 = arith.constant 0 : i32
    %c0_i32_0 = arith.constant 0 : i32
    %c0_i32_1 = arith.constant 0 : i32
    return %c0_i32, %c0_i32_0 : i32, i32
  }
  func.func @transform_9(%arg0: i32) -> (i32, i32, i32) {
    %c0_i32 = arith.constant 0 : i32
    %c0_i32_0 = arith.constant 0 : i32
    %c0_i32_1 = arith.constant 0 : i32
    return %arg0, %c0_i32, %c0_i32_0 : i32, i32, i32
  }
  func.func @transform_10(%arg0: i32) -> (i32, i32, i32) {
    %c0_i32 = arith.constant 0 : i32
    %c0_i32_0 = arith.constant 0 : i32
    %c0_i32_1 = arith.constant 0 : i32
    return %arg0, %c0_i32, %c0_i32_0 : i32, i32, i32
  }
  func.func @transform_11(%arg0: i32) -> (i32, i32, i32) {
    %c0_i32 = arith.constant 0 : i32
    %c0_i32_0 = arith.constant 0 : i32
    %c0_i32_1 = arith.constant 0 : i32
    return %arg0, %c0_i32, %c0_i32_0 : i32, i32, i32
  }
}

module attributes {stable_mosaic.version = 11 : i64} {
  func.func @_t2v_attn_kernel(%arg0: i32, %arg1: memref<1x16x128xbf16, #tpu.memory_space<vmem>>, %arg2: memref<1x16x4xf32, #tpu.memory_space<vmem>>, %arg3: memref<1x16x4xf32, #tpu.memory_space<vmem>>, %arg4: memref<2x1x128xf32, #tpu.memory_space<vmem>>, %arg5: memref<2x1x128xf32, #tpu.memory_space<vmem>>, %arg6: memref<1x128xf32, #tpu.memory_space<vmem>>, %arg7: memref<1x128xf32, #tpu.memory_space<vmem>>, %arg8: memref<128x384xbf16, #tpu.memory_space<vmem>>, %arg9: memref<1x384xf32, #tpu.memory_space<vmem>>, %arg10: memref<4x128xbf16, #tpu.memory_space<vmem>>, %arg11: memref<4x128xbf16, #tpu.memory_space<vmem>>, %arg12: memref<128x128xbf16, #tpu.memory_space<vmem>>, %arg13: memref<1x128xf32, #tpu.memory_space<vmem>>, %arg14: memref<1x16x128xbf16, #tpu.memory_space<vmem>>, %arg15: memref<1x1x128xf32, #tpu.memory_space<vmem>>, %arg16: memref<1x1x128xf32, #tpu.memory_space<vmem>>) attributes {dimension_semantics = [#tpu.dimension_semantics<parallel>], iteration_bounds = array<i64: 2>, scalar_prefetch = 0 : i64, scratch_operands = 0 : i64, tpu.core_type = #tpu.core_type<tc>, window_params = [{transform_indices = @transform_0, window_bounds = array<i64: 1, 16, 128>}, {transform_indices = @transform_1, window_bounds = array<i64: 1, 16, 4>}, {transform_indices = @transform_2, window_bounds = array<i64: 1, 16, 4>}, {pipeline_mode = #tpu.pipeline_mode<synchronous>, transform_indices = @transform_3, window_bounds = array<i64: 2, 1, 128>}, {pipeline_mode = #tpu.pipeline_mode<synchronous>, transform_indices = @transform_4, window_bounds = array<i64: 2, 1, 128>}, {pipeline_mode = #tpu.pipeline_mode<synchronous>, transform_indices = @transform_5, window_bounds = array<i64: 1, 128>}, {pipeline_mode = #tpu.pipeline_mode<synchronous>, transform_indices = @transform_6, window_bounds = array<i64: 1, 128>}, {pipeline_mode = #tpu.pipeline_mode<synchronous>, transform_indices = @transform_7, window_bounds = array<i64: 128, 384>}, {pipeline_mode = #tpu.pipeline_mode<synchronous>, transform_indices = @transform_8, window_bounds = array<i64: 1, 384>}, {pipeline_mode = #tpu.pipeline_mode<synchronous>, transform_indices = @transform_9, window_bounds = array<i64: 4, 128>}, {pipeline_mode = #tpu.pipeline_mode<synchronous>, transform_indices = @transform_10, window_bounds = array<i64: 4, 128>}, {pipeline_mode = #tpu.pipeline_mode<synchronous>, transform_indices = @transform_11, window_bounds = array<i64: 128, 128>}, {pipeline_mode = #tpu.pipeline_mode<synchronous>, transform_indices = @transform_12, window_bounds = array<i64: 1, 128>}, {transform_indices = @transform_13, window_bounds = array<i64: 1, 16, 128>}, {transform_indices = @transform_14, window_bounds = array<i64: 1, 1, 128>}, {transform_indices = @transform_15, window_bounds = array<i64: 1, 1, 128>}]} {
    %c0 = arith.constant 0 : index
    %c0_0 = arith.constant 0 : index
    %c0_1 = arith.constant 0 : index
    %0 = vector.load %arg1[%c0, %c0_0, %c0_1] : memref<1x16x128xbf16, #tpu.memory_space<vmem>>, vector<1x16x128xbf16>
    %1 = vector.shape_cast %0 : vector<1x16x128xbf16> to vector<16x128xbf16>
    %2 = arith.extf %1 : vector<16x128xbf16> to vector<16x128xf32>
    %c0_2 = arith.constant 0 : index
    %c0_3 = arith.constant 0 : index
    %3 = vector.load %arg6[%c0_2, %c0_3] : memref<1x128xf32, #tpu.memory_space<vmem>>, vector<1x128xf32>
    %c0_4 = arith.constant 0 : index
    %c0_5 = arith.constant 0 : index
    %4 = vector.load %arg7[%c0_4, %c0_5] : memref<1x128xf32, #tpu.memory_space<vmem>>, vector<1x128xf32>
    %c0_6 = arith.constant 0 : index
    %c0_7 = arith.constant 0 : index
    %c0_8 = arith.constant 0 : index
    %5 = vector.load %arg4[%c0_6, %c0_7, %c0_8] : memref<2x1x128xf32, #tpu.memory_space<vmem>>, vector<2x1x128xf32>
    %cst = arith.constant dense<0.000000e+00> : vector<1x128xf32>
    %6 = vector.multi_reduction <add>, %5, %cst [0] : vector<2x1x128xf32> to vector<1x128xf32>
    %cst_9 = arith.constant 3.125000e-02 : f32
    %7 = vector.broadcast %cst_9 : f32 to vector<1x128xf32>
    %8 = arith.mulf %6, %7 : vector<1x128xf32>
    %c0_10 = arith.constant 0 : index
    %c0_11 = arith.constant 0 : index
    %c0_12 = arith.constant 0 : index
    %9 = vector.load %arg5[%c0_10, %c0_11, %c0_12] : memref<2x1x128xf32, #tpu.memory_space<vmem>>, vector<2x1x128xf32>
    %cst_13 = arith.constant dense<0.000000e+00> : vector<1x128xf32>
    %10 = vector.multi_reduction <add>, %9, %cst_13 [0] : vector<2x1x128xf32> to vector<1x128xf32>
    %cst_14 = arith.constant 3.125000e-02 : f32
    %11 = vector.broadcast %cst_14 : f32 to vector<1x128xf32>
    %12 = arith.mulf %10, %11 : vector<1x128xf32>
    %13 = arith.mulf %8, %8 : vector<1x128xf32>
    %14 = arith.subf %12, %13 : vector<1x128xf32>
    %cst_15 = arith.constant 9.99999974E-6 : f32
    %15 = vector.broadcast %cst_15 : f32 to vector<1x128xf32>
    %16 = arith.addf %14, %15 : vector<1x128xf32>
    %17 = math.rsqrt %16 : vector<1x128xf32>
    %18 = arith.mulf %17, %3 : vector<1x128xf32>
    %19 = vector.broadcast %8 : vector<1x128xf32> to vector<16x128xf32>
    %20 = arith.subf %2, %19 : vector<16x128xf32>
    %21 = vector.broadcast %18 : vector<1x128xf32> to vector<16x128xf32>
    %22 = arith.mulf %20, %21 : vector<16x128xf32>
    %23 = vector.broadcast %4 : vector<1x128xf32> to vector<16x128xf32>
    %24 = arith.addf %22, %23 : vector<16x128xf32>
    %25 = arith.truncf %24 : vector<16x128xf32> to vector<16x128xbf16>
    %c0_16 = arith.constant 0 : index
    %c0_17 = arith.constant 0 : index
    %26 = vector.load %arg8[%c0_16, %c0_17] : memref<128x384xbf16, #tpu.memory_space<vmem>>, vector<128x384xbf16>
    %cst_18 = arith.constant dense<0.000000e+00> : vector<16x384xf32>
    %27 = tpu.matmul %25, %26, %cst_18 {dimension_numbers = #tpu.dot_dimension_numbers<[1], [0], [0], [1], [0, 0, 1, 1], [], []>} : vector<16x128xbf16>, vector<128x384xbf16>, vector<16x384xf32> -> vector<16x384xf32>
    %c0_19 = arith.constant 0 : index
    %c0_20 = arith.constant 0 : index
    %28 = vector.load %arg9[%c0_19, %c0_20] : memref<1x384xf32, #tpu.memory_space<vmem>>, vector<1x384xf32>
    %29 = vector.broadcast %28 : vector<1x384xf32> to vector<16x384xf32>
    %30 = arith.addf %27, %29 : vector<16x384xf32>
    %c0_21 = arith.constant 0 : index
    %c0_22 = arith.constant 0 : index
    %c0_23 = arith.constant 0 : index
    %31 = vector.load %arg3[%c0_21, %c0_22, %c0_23] : memref<1x16x4xf32, #tpu.memory_space<vmem>>, vector<1x16x4xf32>
    %32 = vector.shape_cast %31 : vector<1x16x4xf32> to vector<16x4xf32>
    %33 = arith.truncf %32 : vector<16x4xf32> to vector<16x4xbf16>
    %c0_24 = arith.constant 0 : index
    %c0_25 = arith.constant 0 : index
    %34 = vector.load %arg10[%c0_24, %c0_25] : memref<4x128xbf16, #tpu.memory_space<vmem>>, vector<4x128xbf16>
    %cst_26 = arith.constant dense<0.000000e+00> : vector<16x128xf32>
    %35 = tpu.matmul %33, %34, %cst_26 {dimension_numbers = #tpu.dot_dimension_numbers<[1], [0], [0], [1], [0, 0, 1, 1], [], []>} : vector<16x4xbf16>, vector<4x128xbf16>, vector<16x128xf32> -> vector<16x128xf32>
    %c0_27 = arith.constant 0 : index
    %c0_28 = arith.constant 0 : index
    %c0_29 = arith.constant 0 : index
    %36 = vector.load %arg2[%c0_27, %c0_28, %c0_29] : memref<1x16x4xf32, #tpu.memory_space<vmem>>, vector<1x16x4xf32>
    %37 = vector.shape_cast %36 : vector<1x16x4xf32> to vector<16x4xf32>
    %38 = arith.truncf %37 : vector<16x4xf32> to vector<16x4xbf16>
    %c0_30 = arith.constant 0 : index
    %c0_31 = arith.constant 0 : index
    %39 = vector.load %arg11[%c0_30, %c0_31] : memref<4x128xbf16, #tpu.memory_space<vmem>>, vector<4x128xbf16>
    %cst_32 = arith.constant dense<0.000000e+00> : vector<16x128xf32>
    %40 = tpu.matmul %38, %39, %cst_32 {dimension_numbers = #tpu.dot_dimension_numbers<[1], [0], [0], [1], [0, 0, 1, 1], [], []>} : vector<16x4xbf16>, vector<4x128xbf16>, vector<16x128xf32> -> vector<16x128xf32>
    %41 = vector.extract_strided_slice %30 {offsets = [0, 0], sizes = [16, 128], strides = [1, 1]} : vector<16x384xf32> to vector<16x128xf32>
    %42 = arith.addf %41, %35 : vector<16x128xf32>
    %43 = arith.truncf %42 : vector<16x128xf32> to vector<16x128xbf16>
    %44 = vector.extract_strided_slice %30 {offsets = [0, 128], sizes = [16, 128], strides = [1, 1]} : vector<16x384xf32> to vector<16x128xf32>
    %45 = arith.addf %44, %40 : vector<16x128xf32>
    %46 = arith.truncf %45 : vector<16x128xf32> to vector<16x128xbf16>
    %47 = vector.extract_strided_slice %30 {offsets = [0, 256], sizes = [16, 128], strides = [1, 1]} : vector<16x384xf32> to vector<16x128xf32>
    %48 = arith.truncf %47 : vector<16x128xf32> to vector<16x128xbf16>
    %c0_33 = arith.constant 0 : index
    %c0_34 = arith.constant 0 : index
    %49 = vector.load %arg12[%c0_33, %c0_34] : memref<128x128xbf16, #tpu.memory_space<vmem>>, vector<128x128xbf16>
    %cst_35 = arith.constant 0.000000e+00 : f32
    %50 = vector.broadcast %cst_35 : f32 to vector<16x128xf32>
    %51 = vector.extract_strided_slice %43 {offsets = [0, 0], sizes = [16, 32], strides = [1, 1]} : vector<16x128xbf16> to vector<16x32xbf16>
    %52 = vector.extract_strided_slice %46 {offsets = [0, 0], sizes = [16, 32], strides = [1, 1]} : vector<16x128xbf16> to vector<16x32xbf16>
    %cst_36 = arith.constant dense<0.000000e+00> : vector<16x16xf32>
    %53 = tpu.matmul %51, %52, %cst_36 {dimension_numbers = #tpu.dot_dimension_numbers<[1], [1], [0], [0], [0, 0, 1, 0], [], []>} : vector<16x32xbf16>, vector<16x32xbf16>, vector<16x16xf32> -> vector<16x16xf32>
    %cst_37 = arith.constant dense<0xFF800000> : vector<16xf32>
    %54 = vector.multi_reduction <maximumf>, %53, %cst_37 [1] : vector<16x16xf32> to vector<16xf32>
    %55 = vector.shape_cast %54 : vector<16xf32> to vector<16x1xf32>
    %56 = vector.broadcast %55 : vector<16x1xf32> to vector<16x16xf32>
    %57 = arith.subf %53, %56 : vector<16x16xf32>
    %58 = math.exp %57 : vector<16x16xf32>
    %cst_38 = arith.constant dense<0.000000e+00> : vector<16xf32>
    %59 = vector.multi_reduction <add>, %58, %cst_38 [1] : vector<16x16xf32> to vector<16xf32>
    %60 = vector.shape_cast %59 : vector<16xf32> to vector<16x1xf32>
    %61 = tpu.reciprocal %60 {approx = true} : vector<16x1xf32> -> vector<16x1xf32>
    %62 = vector.broadcast %61 : vector<16x1xf32> to vector<16x16xf32>
    %63 = arith.mulf %58, %62 : vector<16x16xf32>
    %64 = arith.truncf %63 : vector<16x16xf32> to vector<16x16xbf16>
    %65 = vector.extract_strided_slice %48 {offsets = [0, 0], sizes = [16, 32], strides = [1, 1]} : vector<16x128xbf16> to vector<16x32xbf16>
    %cst_39 = arith.constant dense<0.000000e+00> : vector<16x32xf32>
    %66 = tpu.matmul %64, %65, %cst_39 {dimension_numbers = #tpu.dot_dimension_numbers<[1], [0], [0], [1], [0, 0, 1, 1], [], []>} : vector<16x16xbf16>, vector<16x32xbf16>, vector<16x32xf32> -> vector<16x32xf32>
    %67 = arith.truncf %66 : vector<16x32xf32> to vector<16x32xbf16>
    %68 = vector.extract_strided_slice %49 {offsets = [0, 0], sizes = [32, 128], strides = [1, 1]} : vector<128x128xbf16> to vector<32x128xbf16>
    %cst_40 = arith.constant dense<0.000000e+00> : vector<16x128xf32>
    %69 = tpu.matmul %67, %68, %cst_40 {dimension_numbers = #tpu.dot_dimension_numbers<[1], [0], [0], [1], [0, 0, 1, 1], [], []>} : vector<16x32xbf16>, vector<32x128xbf16>, vector<16x128xf32> -> vector<16x128xf32>
    %70 = arith.addf %50, %69 : vector<16x128xf32>
    %71 = vector.extract_strided_slice %43 {offsets = [0, 32], sizes = [16, 32], strides = [1, 1]} : vector<16x128xbf16> to vector<16x32xbf16>
    %72 = vector.extract_strided_slice %46 {offsets = [0, 32], sizes = [16, 32], strides = [1, 1]} : vector<16x128xbf16> to vector<16x32xbf16>
    %cst_41 = arith.constant dense<0.000000e+00> : vector<16x16xf32>
    %73 = tpu.matmul %71, %72, %cst_41 {dimension_numbers = #tpu.dot_dimension_numbers<[1], [1], [0], [0], [0, 0, 1, 0], [], []>} : vector<16x32xbf16>, vector<16x32xbf16>, vector<16x16xf32> -> vector<16x16xf32>
    %cst_42 = arith.constant dense<0xFF800000> : vector<16xf32>
    %74 = vector.multi_reduction <maximumf>, %73, %cst_42 [1] : vector<16x16xf32> to vector<16xf32>
    %75 = vector.shape_cast %74 : vector<16xf32> to vector<16x1xf32>
    %76 = vector.broadcast %75 : vector<16x1xf32> to vector<16x16xf32>
    %77 = arith.subf %73, %76 : vector<16x16xf32>
    %78 = math.exp %77 : vector<16x16xf32>
    %cst_43 = arith.constant dense<0.000000e+00> : vector<16xf32>
    %79 = vector.multi_reduction <add>, %78, %cst_43 [1] : vector<16x16xf32> to vector<16xf32>
    %80 = vector.shape_cast %79 : vector<16xf32> to vector<16x1xf32>
    %81 = tpu.reciprocal %80 {approx = true} : vector<16x1xf32> -> vector<16x1xf32>
    %82 = vector.broadcast %81 : vector<16x1xf32> to vector<16x16xf32>
    %83 = arith.mulf %78, %82 : vector<16x16xf32>
    %84 = arith.truncf %83 : vector<16x16xf32> to vector<16x16xbf16>
    %85 = vector.extract_strided_slice %48 {offsets = [0, 32], sizes = [16, 32], strides = [1, 1]} : vector<16x128xbf16> to vector<16x32xbf16>
    %cst_44 = arith.constant dense<0.000000e+00> : vector<16x32xf32>
    %86 = tpu.matmul %84, %85, %cst_44 {dimension_numbers = #tpu.dot_dimension_numbers<[1], [0], [0], [1], [0, 0, 1, 1], [], []>} : vector<16x16xbf16>, vector<16x32xbf16>, vector<16x32xf32> -> vector<16x32xf32>
    %87 = arith.truncf %86 : vector<16x32xf32> to vector<16x32xbf16>
    %88 = vector.extract_strided_slice %49 {offsets = [32, 0], sizes = [32, 128], strides = [1, 1]} : vector<128x128xbf16> to vector<32x128xbf16>
    %cst_45 = arith.constant dense<0.000000e+00> : vector<16x128xf32>
    %89 = tpu.matmul %87, %88, %cst_45 {dimension_numbers = #tpu.dot_dimension_numbers<[1], [0], [0], [1], [0, 0, 1, 1], [], []>} : vector<16x32xbf16>, vector<32x128xbf16>, vector<16x128xf32> -> vector<16x128xf32>
    %90 = arith.addf %70, %89 : vector<16x128xf32>
    %91 = vector.extract_strided_slice %43 {offsets = [0, 64], sizes = [16, 32], strides = [1, 1]} : vector<16x128xbf16> to vector<16x32xbf16>
    %92 = vector.extract_strided_slice %46 {offsets = [0, 64], sizes = [16, 32], strides = [1, 1]} : vector<16x128xbf16> to vector<16x32xbf16>
    %cst_46 = arith.constant dense<0.000000e+00> : vector<16x16xf32>
    %93 = tpu.matmul %91, %92, %cst_46 {dimension_numbers = #tpu.dot_dimension_numbers<[1], [1], [0], [0], [0, 0, 1, 0], [], []>} : vector<16x32xbf16>, vector<16x32xbf16>, vector<16x16xf32> -> vector<16x16xf32>
    %cst_47 = arith.constant dense<0xFF800000> : vector<16xf32>
    %94 = vector.multi_reduction <maximumf>, %93, %cst_47 [1] : vector<16x16xf32> to vector<16xf32>
    %95 = vector.shape_cast %94 : vector<16xf32> to vector<16x1xf32>
    %96 = vector.broadcast %95 : vector<16x1xf32> to vector<16x16xf32>
    %97 = arith.subf %93, %96 : vector<16x16xf32>
    %98 = math.exp %97 : vector<16x16xf32>
    %cst_48 = arith.constant dense<0.000000e+00> : vector<16xf32>
    %99 = vector.multi_reduction <add>, %98, %cst_48 [1] : vector<16x16xf32> to vector<16xf32>
    %100 = vector.shape_cast %99 : vector<16xf32> to vector<16x1xf32>
    %101 = tpu.reciprocal %100 {approx = true} : vector<16x1xf32> -> vector<16x1xf32>
    %102 = vector.broadcast %101 : vector<16x1xf32> to vector<16x16xf32>
    %103 = arith.mulf %98, %102 : vector<16x16xf32>
    %104 = arith.truncf %103 : vector<16x16xf32> to vector<16x16xbf16>
    %105 = vector.extract_strided_slice %48 {offsets = [0, 64], sizes = [16, 32], strides = [1, 1]} : vector<16x128xbf16> to vector<16x32xbf16>
    %cst_49 = arith.constant dense<0.000000e+00> : vector<16x32xf32>
    %106 = tpu.matmul %104, %105, %cst_49 {dimension_numbers = #tpu.dot_dimension_numbers<[1], [0], [0], [1], [0, 0, 1, 1], [], []>} : vector<16x16xbf16>, vector<16x32xbf16>, vector<16x32xf32> -> vector<16x32xf32>
    %107 = arith.truncf %106 : vector<16x32xf32> to vector<16x32xbf16>
    %108 = vector.extract_strided_slice %49 {offsets = [64, 0], sizes = [32, 128], strides = [1, 1]} : vector<128x128xbf16> to vector<32x128xbf16>
    %cst_50 = arith.constant dense<0.000000e+00> : vector<16x128xf32>
    %109 = tpu.matmul %107, %108, %cst_50 {dimension_numbers = #tpu.dot_dimension_numbers<[1], [0], [0], [1], [0, 0, 1, 1], [], []>} : vector<16x32xbf16>, vector<32x128xbf16>, vector<16x128xf32> -> vector<16x128xf32>
    %110 = arith.addf %90, %109 : vector<16x128xf32>
    %111 = vector.extract_strided_slice %43 {offsets = [0, 96], sizes = [16, 32], strides = [1, 1]} : vector<16x128xbf16> to vector<16x32xbf16>
    %112 = vector.extract_strided_slice %46 {offsets = [0, 96], sizes = [16, 32], strides = [1, 1]} : vector<16x128xbf16> to vector<16x32xbf16>
    %cst_51 = arith.constant dense<0.000000e+00> : vector<16x16xf32>
    %113 = tpu.matmul %111, %112, %cst_51 {dimension_numbers = #tpu.dot_dimension_numbers<[1], [1], [0], [0], [0, 0, 1, 0], [], []>} : vector<16x32xbf16>, vector<16x32xbf16>, vector<16x16xf32> -> vector<16x16xf32>
    %cst_52 = arith.constant dense<0xFF800000> : vector<16xf32>
    %114 = vector.multi_reduction <maximumf>, %113, %cst_52 [1] : vector<16x16xf32> to vector<16xf32>
    %115 = vector.shape_cast %114 : vector<16xf32> to vector<16x1xf32>
    %116 = vector.broadcast %115 : vector<16x1xf32> to vector<16x16xf32>
    %117 = arith.subf %113, %116 : vector<16x16xf32>
    %118 = math.exp %117 : vector<16x16xf32>
    %cst_53 = arith.constant dense<0.000000e+00> : vector<16xf32>
    %119 = vector.multi_reduction <add>, %118, %cst_53 [1] : vector<16x16xf32> to vector<16xf32>
    %120 = vector.shape_cast %119 : vector<16xf32> to vector<16x1xf32>
    %121 = tpu.reciprocal %120 {approx = true} : vector<16x1xf32> -> vector<16x1xf32>
    %122 = vector.broadcast %121 : vector<16x1xf32> to vector<16x16xf32>
    %123 = arith.mulf %118, %122 : vector<16x16xf32>
    %124 = arith.truncf %123 : vector<16x16xf32> to vector<16x16xbf16>
    %125 = vector.extract_strided_slice %48 {offsets = [0, 96], sizes = [16, 32], strides = [1, 1]} : vector<16x128xbf16> to vector<16x32xbf16>
    %cst_54 = arith.constant dense<0.000000e+00> : vector<16x32xf32>
    %126 = tpu.matmul %124, %125, %cst_54 {dimension_numbers = #tpu.dot_dimension_numbers<[1], [0], [0], [1], [0, 0, 1, 1], [], []>} : vector<16x16xbf16>, vector<16x32xbf16>, vector<16x32xf32> -> vector<16x32xf32>
    %127 = arith.truncf %126 : vector<16x32xf32> to vector<16x32xbf16>
    %128 = vector.extract_strided_slice %49 {offsets = [96, 0], sizes = [32, 128], strides = [1, 1]} : vector<128x128xbf16> to vector<32x128xbf16>
    %cst_55 = arith.constant dense<0.000000e+00> : vector<16x128xf32>
    %129 = tpu.matmul %127, %128, %cst_55 {dimension_numbers = #tpu.dot_dimension_numbers<[1], [0], [0], [1], [0, 0, 1, 1], [], []>} : vector<16x32xbf16>, vector<32x128xbf16>, vector<16x128xf32> -> vector<16x128xf32>
    %130 = arith.addf %110, %129 : vector<16x128xf32>
    %c0_56 = arith.constant 0 : index
    %c0_57 = arith.constant 0 : index
    %131 = vector.load %arg13[%c0_56, %c0_57] : memref<1x128xf32, #tpu.memory_space<vmem>>, vector<1x128xf32>
    %132 = vector.broadcast %131 : vector<1x128xf32> to vector<16x128xf32>
    %133 = arith.addf %130, %132 : vector<16x128xf32>
    %134 = arith.truncf %133 : vector<16x128xf32> to vector<16x128xbf16>
    %c0_58 = arith.constant 0 : index
    %c0_59 = arith.constant 0 : index
    %c0_60 = arith.constant 0 : index
    %135 = vector.load %arg14[%c0_58, %c0_59, %c0_60] : memref<1x16x128xbf16, #tpu.memory_space<vmem>>, vector<1x16x128xbf16>
    %136 = vector.shape_cast %135 : vector<1x16x128xbf16> to vector<16x128xbf16>
    %137 = vector.shape_cast %134 : vector<16x128xbf16> to vector<1x16x128xbf16>
    tpu.vector_store %arg14[%c0_58, %c0_59, %c0_60], %137 {strides = array<i32>} : memref<1x16x128xbf16, #tpu.memory_space<vmem>>, vector<1x16x128xbf16>,
    %138 = arith.extf %134 : vector<16x128xbf16> to vector<16x128xf32>
    %cst_61 = arith.constant dense<0.000000e+00> : vector<128xf32>
    %139 = vector.multi_reduction <add>, %138, %cst_61 [0] : vector<16x128xf32> to vector<128xf32>
    %140 = vector.shape_cast %139 : vector<128xf32> to vector<1x128xf32>
    %c0_62 = arith.constant 0 : index
    %c0_63 = arith.constant 0 : index
    %c0_64 = arith.constant 0 : index
    %141 = vector.load %arg15[%c0_62, %c0_63, %c0_64] : memref<1x1x128xf32, #tpu.memory_space<vmem>>, vector<1x1x128xf32>
    %142 = vector.shape_cast %141 : vector<1x1x128xf32> to vector<1x128xf32>
    %143 = vector.shape_cast %140 : vector<1x128xf32> to vector<1x1x128xf32>
    tpu.vector_store %arg15[%c0_62, %c0_63, %c0_64], %143 {strides = array<i32>} : memref<1x1x128xf32, #tpu.memory_space<vmem>>, vector<1x1x128xf32>,
    %144 = arith.mulf %138, %138 : vector<16x128xf32>
    %cst_65 = arith.constant dense<0.000000e+00> : vector<128xf32>
    %145 = vector.multi_reduction <add>, %144, %cst_65 [0] : vector<16x128xf32> to vector<128xf32>
    %146 = vector.shape_cast %145 : vector<128xf32> to vector<1x128xf32>
    %c0_66 = arith.constant 0 : index
    %c0_67 = arith.constant 0 : index
    %c0_68 = arith.constant 0 : index
    %147 = vector.load %arg16[%c0_66, %c0_67, %c0_68] : memref<1x1x128xf32, #tpu.memory_space<vmem>>, vector<1x1x128xf32>
    %148 = vector.shape_cast %147 : vector<1x1x128xf32> to vector<1x128xf32>
    %149 = vector.shape_cast %146 : vector<1x128xf32> to vector<1x1x128xf32>
    tpu.vector_store %arg16[%c0_66, %c0_67, %c0_68], %149 {strides = array<i32>} : memref<1x1x128xf32, #tpu.memory_space<vmem>>, vector<1x1x128xf32>,
    return
  }
  func.func @transform_0(%arg0: i32) -> (i32, i32, i32) {
    %c0_i32 = arith.constant 0 : i32
    %c0_i32_0 = arith.constant 0 : i32
    %c0_i32_1 = arith.constant 0 : i32
    return %arg0, %c0_i32, %c0_i32_0 : i32, i32, i32
  }
  func.func @transform_1(%arg0: i32) -> (i32, i32, i32) {
    %c0_i32 = arith.constant 0 : i32
    %c0_i32_0 = arith.constant 0 : i32
    %c0_i32_1 = arith.constant 0 : i32
    return %arg0, %c0_i32, %c0_i32_0 : i32, i32, i32
  }
  func.func @transform_2(%arg0: i32) -> (i32, i32, i32) {
    %c0_i32 = arith.constant 0 : i32
    %c0_i32_0 = arith.constant 0 : i32
    %c0_i32_1 = arith.constant 0 : i32
    return %arg0, %c0_i32, %c0_i32_0 : i32, i32, i32
  }
  func.func @transform_3(%arg0: i32) -> (i32, i32, i32) {
    %c0_i32 = arith.constant 0 : i32
    %c0_i32_0 = arith.constant 0 : i32
    %c0_i32_1 = arith.constant 0 : i32
    %c0_i32_2 = arith.constant 0 : i32
    return %c0_i32, %c0_i32_0, %c0_i32_1 : i32, i32, i32
  }
  func.func @transform_4(%arg0: i32) -> (i32, i32, i32) {
    %c0_i32 = arith.constant 0 : i32
    %c0_i32_0 = arith.constant 0 : i32
    %c0_i32_1 = arith.constant 0 : i32
    %c0_i32_2 = arith.constant 0 : i32
    return %c0_i32, %c0_i32_0, %c0_i32_1 : i32, i32, i32
  }
  func.func @transform_5(%arg0: i32) -> (i32, i32) {
    %c0_i32 = arith.constant 0 : i32
    %c0_i32_0 = arith.constant 0 : i32
    %c0_i32_1 = arith.constant 0 : i32
    return %c0_i32, %c0_i32_0 : i32, i32
  }
  func.func @transform_6(%arg0: i32) -> (i32, i32) {
    %c0_i32 = arith.constant 0 : i32
    %c0_i32_0 = arith.constant 0 : i32
    %c0_i32_1 = arith.constant 0 : i32
    return %c0_i32, %c0_i32_0 : i32, i32
  }
  func.func @transform_7(%arg0: i32) -> (i32, i32) {
    %c0_i32 = arith.constant 0 : i32
    %c0_i32_0 = arith.constant 0 : i32
    %c0_i32_1 = arith.constant 0 : i32
    return %c0_i32, %c0_i32_0 : i32, i32
  }
  func.func @transform_8(%arg0: i32) -> (i32, i32) {
    %c0_i32 = arith.constant 0 : i32
    %c0_i32_0 = arith.constant 0 : i32
    %c0_i32_1 = arith.constant 0 : i32
    return %c0_i32, %c0_i32_0 : i32, i32
  }
  func.func @transform_9(%arg0: i32) -> (i32, i32) {
    %c0_i32 = arith.constant 0 : i32
    %c0_i32_0 = arith.constant 0 : i32
    %c0_i32_1 = arith.constant 0 : i32
    return %c0_i32, %c0_i32_0 : i32, i32
  }
  func.func @transform_10(%arg0: i32) -> (i32, i32) {
    %c0_i32 = arith.constant 0 : i32
    %c0_i32_0 = arith.constant 0 : i32
    %c0_i32_1 = arith.constant 0 : i32
    return %c0_i32, %c0_i32_0 : i32, i32
  }
  func.func @transform_11(%arg0: i32) -> (i32, i32) {
    %c0_i32 = arith.constant 0 : i32
    %c0_i32_0 = arith.constant 0 : i32
    %c0_i32_1 = arith.constant 0 : i32
    return %c0_i32, %c0_i32_0 : i32, i32
  }
  func.func @transform_12(%arg0: i32) -> (i32, i32) {
    %c0_i32 = arith.constant 0 : i32
    %c0_i32_0 = arith.constant 0 : i32
    %c0_i32_1 = arith.constant 0 : i32
    return %c0_i32, %c0_i32_0 : i32, i32
  }
  func.func @transform_13(%arg0: i32) -> (i32, i32, i32) {
    %c0_i32 = arith.constant 0 : i32
    %c0_i32_0 = arith.constant 0 : i32
    %c0_i32_1 = arith.constant 0 : i32
    return %arg0, %c0_i32, %c0_i32_0 : i32, i32, i32
  }
  func.func @transform_14(%arg0: i32) -> (i32, i32, i32) {
    %c0_i32 = arith.constant 0 : i32
    %c0_i32_0 = arith.constant 0 : i32
    %c0_i32_1 = arith.constant 0 : i32
    return %arg0, %c0_i32, %c0_i32_0 : i32, i32, i32
  }
  func.func @transform_15(%arg0: i32) -> (i32, i32, i32) {
    %c0_i32 = arith.constant 0 : i32
    %c0_i32_0 = arith.constant 0 : i32
    %c0_i32_1 = arith.constant 0 : i32
    return %arg0, %c0_i32, %c0_i32_0 : i32, i32, i32
  }
}

module attributes {stable_mosaic.version = 11 : i64} {
  func.func @_bn3_kernel(%arg0: i32, %arg1: memref<1x16x128xbf16, #tpu.memory_space<vmem>>, %arg2: memref<2x1x128xf32, #tpu.memory_space<vmem>>, %arg3: memref<2x1x128xf32, #tpu.memory_space<vmem>>, %arg4: memref<1x128xf32, #tpu.memory_space<vmem>>, %arg5: memref<1x128xf32, #tpu.memory_space<vmem>>, %arg6: memref<1x16x128xf32, #tpu.memory_space<vmem>>) attributes {dimension_semantics = [#tpu.dimension_semantics<parallel>], iteration_bounds = array<i64: 2>, scalar_prefetch = 0 : i64, scratch_operands = 0 : i64, tpu.core_type = #tpu.core_type<tc>, window_params = [{transform_indices = @transform_0, window_bounds = array<i64: 1, 16, 128>}, {pipeline_mode = #tpu.pipeline_mode<synchronous>, transform_indices = @transform_1, window_bounds = array<i64: 2, 1, 128>}, {pipeline_mode = #tpu.pipeline_mode<synchronous>, transform_indices = @transform_2, window_bounds = array<i64: 2, 1, 128>}, {pipeline_mode = #tpu.pipeline_mode<synchronous>, transform_indices = @transform_3, window_bounds = array<i64: 1, 128>}, {pipeline_mode = #tpu.pipeline_mode<synchronous>, transform_indices = @transform_4, window_bounds = array<i64: 1, 128>}, {transform_indices = @transform_5, window_bounds = array<i64: 1, 16, 128>}]} {
    %c0 = arith.constant 0 : index
    %c0_0 = arith.constant 0 : index
    %c0_1 = arith.constant 0 : index
    %0 = vector.load %arg1[%c0, %c0_0, %c0_1] : memref<1x16x128xbf16, #tpu.memory_space<vmem>>, vector<1x16x128xbf16>
    %1 = vector.shape_cast %0 : vector<1x16x128xbf16> to vector<16x128xbf16>
    %2 = arith.extf %1 : vector<16x128xbf16> to vector<16x128xf32>
    %c0_2 = arith.constant 0 : index
    %c0_3 = arith.constant 0 : index
    %3 = vector.load %arg4[%c0_2, %c0_3] : memref<1x128xf32, #tpu.memory_space<vmem>>, vector<1x128xf32>
    %c0_4 = arith.constant 0 : index
    %c0_5 = arith.constant 0 : index
    %4 = vector.load %arg5[%c0_4, %c0_5] : memref<1x128xf32, #tpu.memory_space<vmem>>, vector<1x128xf32>
    %c0_6 = arith.constant 0 : index
    %c0_7 = arith.constant 0 : index
    %c0_8 = arith.constant 0 : index
    %5 = vector.load %arg2[%c0_6, %c0_7, %c0_8] : memref<2x1x128xf32, #tpu.memory_space<vmem>>, vector<2x1x128xf32>
    %cst = arith.constant dense<0.000000e+00> : vector<1x128xf32>
    %6 = vector.multi_reduction <add>, %5, %cst [0] : vector<2x1x128xf32> to vector<1x128xf32>
    %cst_9 = arith.constant 3.125000e-02 : f32
    %7 = vector.broadcast %cst_9 : f32 to vector<1x128xf32>
    %8 = arith.mulf %6, %7 : vector<1x128xf32>
    %c0_10 = arith.constant 0 : index
    %c0_11 = arith.constant 0 : index
    %c0_12 = arith.constant 0 : index
    %9 = vector.load %arg3[%c0_10, %c0_11, %c0_12] : memref<2x1x128xf32, #tpu.memory_space<vmem>>, vector<2x1x128xf32>
    %cst_13 = arith.constant dense<0.000000e+00> : vector<1x128xf32>
    %10 = vector.multi_reduction <add>, %9, %cst_13 [0] : vector<2x1x128xf32> to vector<1x128xf32>
    %cst_14 = arith.constant 3.125000e-02 : f32
    %11 = vector.broadcast %cst_14 : f32 to vector<1x128xf32>
    %12 = arith.mulf %10, %11 : vector<1x128xf32>
    %13 = arith.mulf %8, %8 : vector<1x128xf32>
    %14 = arith.subf %12, %13 : vector<1x128xf32>
    %cst_15 = arith.constant 9.99999974E-6 : f32
    %15 = vector.broadcast %cst_15 : f32 to vector<1x128xf32>
    %16 = arith.addf %14, %15 : vector<1x128xf32>
    %17 = math.rsqrt %16 : vector<1x128xf32>
    %18 = arith.mulf %17, %3 : vector<1x128xf32>
    %19 = vector.broadcast %8 : vector<1x128xf32> to vector<16x128xf32>
    %20 = arith.subf %2, %19 : vector<16x128xf32>
    %21 = vector.broadcast %18 : vector<1x128xf32> to vector<16x128xf32>
    %22 = arith.mulf %20, %21 : vector<16x128xf32>
    %23 = vector.broadcast %4 : vector<1x128xf32> to vector<16x128xf32>
    %24 = arith.addf %22, %23 : vector<16x128xf32>
    %c0_16 = arith.constant 0 : index
    %c0_17 = arith.constant 0 : index
    %c0_18 = arith.constant 0 : index
    %25 = vector.load %arg6[%c0_16, %c0_17, %c0_18] : memref<1x16x128xf32, #tpu.memory_space<vmem>>, vector<1x16x128xf32>
    %26 = vector.shape_cast %25 : vector<1x16x128xf32> to vector<16x128xf32>
    %27 = vector.shape_cast %24 : vector<16x128xf32> to vector<1x16x128xf32>
    tpu.vector_store %arg6[%c0_16, %c0_17, %c0_18], %27 {strides = array<i32>} : memref<1x16x128xf32, #tpu.memory_space<vmem>>, vector<1x16x128xf32>,
    return
  }
  func.func @transform_0(%arg0: i32) -> (i32, i32, i32) {
    %c0_i32 = arith.constant 0 : i32
    %c0_i32_0 = arith.constant 0 : i32
    %c0_i32_1 = arith.constant 0 : i32
    return %arg0, %c0_i32, %c0_i32_0 : i32, i32, i32
  }
  func.func @transform_1(%arg0: i32) -> (i32, i32, i32) {
    %c0_i32 = arith.constant 0 : i32
    %c0_i32_0 = arith.constant 0 : i32
    %c0_i32_1 = arith.constant 0 : i32
    %c0_i32_2 = arith.constant 0 : i32
    return %c0_i32, %c0_i32_0, %c0_i32_1 : i32, i32, i32
  }
  func.func @transform_2(%arg0: i32) -> (i32, i32, i32) {
    %c0_i32 = arith.constant 0 : i32
    %c0_i32_0 = arith.constant 0 : i32
    %c0_i32_1 = arith.constant 0 : i32
    %c0_i32_2 = arith.constant 0 : i32
    return %c0_i32, %c0_i32_0, %c0_i32_1 : i32, i32, i32
  }
  func.func @transform_3(%arg0: i32) -> (i32, i32) {
    %c0_i32 = arith.constant 0 : i32
    %c0_i32_0 = arith.constant 0 : i32
    %c0_i32_1 = arith.constant 0 : i32
    return %c0_i32, %c0_i32_0 : i32, i32
  }
  func.func @transform_4(%arg0: i32) -> (i32, i32) {
    %c0_i32 = arith.constant 0 : i32
    %c0_i32_0 = arith.constant 0 : i32
    %c0_i32_1 = arith.constant 0 : i32
    return %c0_i32, %c0_i32_0 : i32, i32
  }
  func.func @transform_5(%arg0: i32) -> (i32, i32, i32) {
    %c0_i32 = arith.constant 0 : i32
    %c0_i32_0 = arith.constant 0 : i32
    %c0_i32_1 = arith.constant 0 : i32
    return %arg0, %c0_i32, %c0_i32_0 : i32, i32, i32
  }
}

</mosaic_0001>

<llo_original>
// kernel: t2v_decoder_layer.7
$region0: #{t2v_decoder_layer.7}
  #allocation0 [shape = 'u32[]', space=smem, size = 0x4, offset = 0x4, fixed_abs, tag = 'smem constant byte address 0x4 - core index']
  #allocation1 [shape = 'u32[144,128]{1,0:T(1,128)}', space=vmem, size = 0x12000, scoped, tag = 'internal scratch']
  %s0 = inlined_call_operand.vmem [shape: bf16[2,16,128], index: 0, kind: input, shape index: {}]
  %s1 = inlined_call_operand.vmem [shape: f32[2,1,128], index: 1, kind: input, shape index: {}]
  %s2 = inlined_call_operand.vmem [shape: f32[2,1,128], index: 2, kind: input, shape index: {}]
  %s3 = inlined_call_operand.vmem [shape: f32[1,128], index: 3, kind: input, shape index: {}]
  %s4 = inlined_call_operand.vmem [shape: f32[1,128], index: 4, kind: input, shape index: {}]
  %s5 = inlined_call_operand.hbm [shape: f32[2,16,128], index: 5, kind: output, shape index: {}]
  %s6 = sld [smem:[#allocation0]]
  $region53: #{t2v_decoder_layer.7} parent=0
    _
  %s8 = ssub.s32 1, %s6
  %s9 = scalar_select 0, %s8, %s6
  $region1: #{t2v_decoder_layer.7} parent=0
    #allocation2 [shape = 'u8[16384]{0}', space=vmem, size = 0x4000, scoped, tag = 'output window, operand 0']
    #allocation3 [shape = 's32[2]{0}', space=sflag, size = 0x8, scoped, tag = 'scoped memory for t2v_decoder_layer.7']
    %10 = vsyncpa [#allocation3], 0
    %s11 = scalar_lea.sflag [#allocation3], 1
    %12 = vsyncpa %s11, 0
    loop: start=0, step=1, limit=4
    $region2: #{t2v_decoder_layer.7} parent=1 // loop_pre_header
      _
    $region3: #{t2v_decoder_layer.7} parent=1 // loop_header
      %s14 = sphi 0, %s18
      %p15 = scmp.ge.s32.totalorder %s14, 4
      %s24 = sphi 0, %s26
      %s27 = sphi 0, %s24
      %s28 = sphi 0, %s27
      %s44 = sphi 0, %s28
      %s48 = sphi 0, %s48
      %s50 = sphi 0, %s48
      %s51 = sphi 0, %s50
      %s65 = sphi 0, %s51
      %s69 = sphi 0, %s69
      %s71 = sphi 0, %s69
      %s72 = sphi 0, %s71
      %s86 = sphi 0, %s72
      %s90 = sphi 0, %s90
      %s92 = sphi 0, %s90
      %s93 = sphi 0, %s92
      %s107 = sphi 0, %s93
      %s111 = sphi 0, %s111
      %s113 = sphi 0, %s111
      %s114 = sphi 0, %s113
      %s128 = sphi 0, %s114
      %s134 = sphi 0, %s136
      %s137 = sphi 0, %s134
      %s138 = sphi 0, %s137
      %s154 = sphi 0, %s138
    $region4: #{t2v_decoder_layer.7} parent=1 // loop_header_branch
      %17 = sbr.rel (%p15) target = $region8
    $region5: #{t2v_decoder_layer.7} parent=1 // loop_body
      %s19 = ssub.s32 %s14, 1
      %s20 = ssub.s32 %s14, 2
      %s21 = sadd.s32 %s14, 1
      %s22 = ssub.s32 %s14, %s21
      %p23 = scmp.eq.s32.totalorder %s22, 0
      %s25 = sadd.s32 %s24, 1
      %s26 = scalar_select %p23, %s24, %s25
      %p29 = pneg %p23
      %p30 = scmp.eq.s32.totalorder %s14, 1
      %p31 = por %p29, %p30
      %p32 = scmp.ne.s32.totalorder %s24, %s27
      %p33 = scmp.eq.s32.totalorder %s14, 0
      %p34 = por %p32, %p33
      %p35 = scmp.ne.s32.totalorder %s24, %s27
      %p36 = scmp.eq.s32.totalorder %s19, 1
      %p37 = por %p35, %p36
      %p38 = scmp.ne.s32.totalorder %s27, %s28
      %p39 = scmp.eq.s32.totalorder %s19, 0
      %p40 = por %p38, %p39
      %p41 = scmp.ne.s32.totalorder %s27, %s28
      %p42 = scmp.eq.s32.totalorder %s20, 1
      %p43 = por %p41, %p42
      %p45 = scmp.ne.s32.totalorder %s28, %s44
      %p46 = scmp.eq.s32.totalorder %s20, 0
      %p47 = por %p45, %p46
      %s49 = sadd.s32 %s48, 1
      %p52 = scmp.eq.s32.totalorder %s14, 1
      %p53 = scmp.ne.s32.totalorder %s48, %s50
      %p54 = scmp.eq.s32.totalorder %s14, 0
      %p55 = por %p53, %p54
      %p56 = scmp.ne.s32.totalorder %s48, %s50
      %p57 = scmp.eq.s32.totalorder %s19, 1
      %p58 = por %p56, %p57
      %p59 = scmp.ne.s32.totalorder %s50, %s51
      %p60 = scmp.eq.s32.totalorder %s19, 0
      %p61 = por %p59, %p60
      %p62 = scmp.ne.s32.totalorder %s50, %s51
      %p63 = scmp.eq.s32.totalorder %s20, 1
      %p64 = por %p62, %p63
      %p66 = scmp.ne.s32.totalorder %s51, %s65
      %p67 = scmp.eq.s32.totalorder %s20, 0
      %p68 = por %p66, %p67
      %s70 = sadd.s32 %s69, 1
      %p73 = scmp.eq.s32.totalorder %s14, 1
      %p74 = scmp.ne.s32.totalorder %s69, %s71
      %p75 = scmp.eq.s32.totalorder %s14, 0
      %p76 = por %p74, %p75
      %p77 = scmp.ne.s32.totalorder %s69, %s71
      %p78 = scmp.eq.s32.totalorder %s19, 1
      %p79 = por %p77, %p78
      %p80 = scmp.ne.s32.totalorder %s71, %s72
      %p81 = scmp.eq.s32.totalorder %s19, 0
      %p82 = por %p80, %p81
      %p83 = scmp.ne.s32.totalorder %s71, %s72
      %p84 = scmp.eq.s32.totalorder %s20, 1
      %p85 = por %p83, %p84
      %p87 = scmp.ne.s32.totalorder %s72, %s86
      %p88 = scmp.eq.s32.totalorder %s20, 0
      %p89 = por %p87, %p88
      %s91 = sadd.s32 %s90, 1
      %p94 = scmp.eq.s32.totalorder %s14, 1
      %p95 = scmp.ne.s32.totalorder %s90, %s92
      %p96 = scmp.eq.s32.totalorder %s14, 0
      %p97 = por %p95, %p96
      %p98 = scmp.ne.s32.totalorder %s90, %s92
      %p99 = scmp.eq.s32.totalorder %s19, 1
      %p100 = por %p98, %p99
      %p101 = scmp.ne.s32.totalorder %s92, %s93
      %p102 = scmp.eq.s32.totalorder %s19, 0
      %p103 = por %p101, %p102
      %p104 = scmp.ne.s32.totalorder %s92, %s93
      %p105 = scmp.eq.s32.totalorder %s20, 1
      %p106 = por %p104, %p105
      %p108 = scmp.ne.s32.totalorder %s93, %s107
      %p109 = scmp.eq.s32.totalorder %s20, 0
      %p110 = por %p108, %p109
      %s112 = sadd.s32 %s111, 1
      %p115 = scmp.eq.s32.totalorder %s14, 1
      %p116 = scmp.ne.s32.totalorder %s111, %s113
      %p117 = scmp.eq.s32.totalorder %s14, 0
      %p118 = por %p116, %p117
      %p119 = scmp.ne.s32.totalorder %s111, %s113
      %p120 = scmp.eq.s32.totalorder %s19, 1
      %p121 = por %p119, %p120
      %p122 = scmp.ne.s32.totalorder %s113, %s114
      %p123 = scmp.eq.s32.totalorder %s19, 0
      %p124 = por %p122, %p123
      %p125 = scmp.ne.s32.totalorder %s113, %s114
      %p126 = scmp.eq.s32.totalorder %s20, 1
      %p127 = por %p125, %p126
      %p129 = scmp.ne.s32.totalorder %s114, %s128
      %p130 = scmp.eq.s32.totalorder %s20, 0
      %p131 = por %p129, %p130
      %s132 = ssub.s32 %s14, %s21
      %p133 = scmp.eq.s32.totalorder %s132, 0
      %s135 = sadd.s32 %s134, 1
      %s136 = scalar_select %p133, %s134, %s135
      %p139 = pneg %p133
      %p140 = scmp.eq.s32.totalorder %s14, 1
      %p141 = por %p139, %p140
      %p142 = scmp.ne.s32.totalorder %s134, %s137
      %p143 = scmp.eq.s32.totalorder %s14, 0
      %p144 = por %p142, %p143
      %p145 = scmp.ne.s32.totalorder %s134, %s137
      %p146 = scmp.eq.s32.totalorder %s19, 1
      %p147 = por %p145, %p146
      %p148 = scmp.ne.s32.totalorder %s137, %s138
      %p149 = scmp.eq.s32.totalorder %s19, 0
      %p150 = por %p148, %p149
      %p151 = scmp.ne.s32.totalorder %s137, %s138
      %p152 = scmp.eq.s32.totalorder %s20, 1
      %p153 = por %p151, %p152
      %p155 = scmp.ne.s32.totalorder %s138, %s154
      %p156 = scmp.eq.s32.totalorder %s20, 0
      %p157 = por %p155, %p156
      %p158 = scmp.le.s32.totalorder 1, %s14
      %p159 = scmp.lt.s32.totalorder %s14, 3
      %p160 = pnand %p158, %p159
      %p161 = pneg %p160
      // Predicated region
      $region9: #{t2v_decoder_layer.7} parent=5 // pred_check
        _
      $region10: #{t2v_decoder_layer.7} parent=5 // pred_check_branch
        %163 = sbr.rel (%p160) target = $region12
      $region11: #{t2v_decoder_layer.7} parent=5 // pred_region
        %s164 = ssub.s32 %s14, 1
        // Predicated region
        $region13: #{t2v_decoder_layer.7} parent=11 // pred_check
          %p165 = pneg %p61
        $region14: #{t2v_decoder_layer.7} parent=11 // pred_check_branch
          %167 = sbr.rel (%p165) target = $region16
        $region15: #{t2v_decoder_layer.7} parent=11 // pred_region
          _
        $region16: #{t2v_decoder_layer.7} parent=11 // pred_fallthru
          _
        // Predicated region
        $region17: #{t2v_decoder_layer.7} parent=11 // pred_check
          %p168 = pneg %p82
        $region18: #{t2v_decoder_layer.7} parent=11 // pred_check_branch
          %170 = sbr.rel (%p168) target = $region20
        $region19: #{t2v_decoder_layer.7} parent=11 // pred_region
          _
        $region20: #{t2v_decoder_layer.7} parent=11 // pred_fallthru
          _
        // Predicated region
        $region21: #{t2v_decoder_layer.7} parent=11 // pred_check
          %p171 = pneg %p103
        $region22: #{t2v_decoder_layer.7} parent=11 // pred_check_branch
          %173 = sbr.rel (%p171) target = $region24
        $region23: #{t2v_decoder_layer.7} parent=11 // pred_region
          _
        $region24: #{t2v_decoder_layer.7} parent=11 // pred_fallthru
          _
        // Predicated region
        $region25: #{t2v_decoder_layer.7} parent=11 // pred_check
          %p174 = pneg %p124
        $region26: #{t2v_decoder_layer.7} parent=11 // pred_check_branch
          %176 = sbr.rel (%p174) target = $region28
        $region27: #{t2v_decoder_layer.7} parent=11 // pred_region
          _
        $region28: #{t2v_decoder_layer.7} parent=11 // pred_fallthru
          _
      $region12: #{t2v_decoder_layer.7} parent=5 // pred_fallthru
        _
      %p177 = scmp.lt.s32.totalorder %s14, 2
      // Predicated region
      $region29: #{t2v_decoder_layer.7} parent=5 // pred_check
        %p178 = pneg %p177
      $region30: #{t2v_decoder_layer.7} parent=5 // pred_check_branch
        %180 = sbr.rel (%p178) target = $region32
      $region31: #{t2v_decoder_layer.7} parent=5 // pred_region
        // Predicated region
        $region33: #{t2v_decoder_layer.7} parent=31 // pred_check
          %p181 = pneg %p34
        $region34: #{t2v_decoder_layer.7} parent=31 // pred_check_branch
          %183 = sbr.rel (%p181) target = $region36
        $region35: #{t2v_decoder_layer.7} parent=31 // pred_region
          %p184 = scmp.lt.s32.totalorder %s14, 1
          %s185 = scalar_select %p184, %s14, 1
          %s186 = smul.addr %s185, 2
          %s187 = smul.addr %s186, 4
          %s188 = scalar_lea.vmem %s0, %s187
        $region36: #{t2v_decoder_layer.7} parent=31 // pred_fallthru
          _
      $region32: #{t2v_decoder_layer.7} parent=5 // pred_fallthru
        _
      %p189 = scmp.le.s32.totalorder 1, %s14
      %p190 = scmp.lt.s32.totalorder %s14, 3
      %p191 = pnand %p189, %p190
      %p192 = pneg %p191
      // Predicated region
      $region37: #{t2v_decoder_layer.7} parent=5 // pred_check
        _
      $region38: #{t2v_decoder_layer.7} parent=5 // pred_check_branch
        %194 = sbr.rel (%p191) target = $region40
      $region39: #{t2v_decoder_layer.7} parent=5 // pred_region
        %s195 = ssub.s32 %s14, 1
        %p196 = scmp.lt.s32.totalorder %s19, 1
        %s197 = scalar_select %p196, %s19, 1
        %s198 = smul.addr %s197, 2
        %s199 = smul.addr %s198, 4
        %s200 = scalar_lea.vmem %s0, %s199
        %p201 = pneg %p40
        %p202 = pneg %p37
        %p203 = pneg %p61
        %p204 = pneg %p58
        %p205 = pneg %p82
        %p206 = pneg %p79
        %p207 = pneg %p103
        %p208 = pneg %p100
        %p209 = pneg %p124
        %p210 = pneg %p121
        %p211 = pneg %p150
        %p212 = pneg %p147
        %s213 = sand.u32 %s137, 1
        %s214 = scalar_lea.sflag [#allocation3], %s213
        %s215 = sand.u32 %s137, 1
        %s216 = smul.addr %s215, 16
        %s217 = scalar_lea.vmem [#allocation2], %s216
        %p218 = scmp.lt.s32.totalorder %s19, 1
        %s219 = scalar_select %p218, %s19, 1
        %s220 = smul.addr %s219, 2
        %s221 = smul.addr %s220, 4
        %s222 = scalar_lea.vmem %s0, %s221
        %v223 = vld [vmem:[%s222] sm:$0xf]
        %v224 = vld [vmem:[%s222 + $0x4] sm:$0xf]
        %v225 = vunpack.c.l.bf16 %v223
        %v226 = vunpack.c.l.bf16 %v224
        %v227 = vld [vmem:[%s3] sm:$0x1]
        %v228 = vld [vmem:[%s4] sm:$0x1]
        %v229 = vld [vmem:[%s1] sm:$0x1]
        %v230 = vld [vmem:[%s1 + $0x1] sm:$0x1]
        %vm231 = vcmask 1040384
        %v232 = vsel %vm231, %v229, 0.0
        %v233 = vsel %vm231, %v230, 0.0
        %v234 = vadd.f32 %v232, %v233
        %v235 = vmul.f32 %v234, 0.03125
        %v236 = vld [vmem:[%s2] sm:$0x1]
        %v237 = vld [vmem:[%s2 + $0x1] sm:$0x1]
        %v238 = vsel %vm231, %v236, 0.0
        %v239 = vsel %vm231, %v237, 0.0
        %v240 = vadd.f32 %v238, %v239
        %v241 = vmul.f32 %v240, 0.03125
        %v242 = vmul.f32 %v235, %v235
        %v243 = vsub.f32 %v241, %v242
        %v244 = vadd.f32 %v243, 1e-05
        %v245 = vrsqrt.pop %v244
        %v246 = vmul.f32 %v245, %v227
        %v247 = vlaneseq
        %v248 = vshrl.u32 %v247, 7
        %v249 = vsub.s32 0, %v248
        %v250 = vrot.slane %v235, %v249
        %v251 = vsub.f32 %v225, %v250
        %v252 = vsub.f32 %v226, %v250
        %v253 = vlaneseq
        %v254 = vshrl.u32 %v253, 7
        %v255 = vsub.s32 0, %v254
        %v256 = vrot.slane %v246, %v255
        %v257 = vmul.f32 %v251, %v256
        %v258 = vmul.f32 %v252, %v256
        %v260 = vlaneseq
        %v261 = vshrl.u32 %v260, 7
        %v262 = vsub.s32 0, %v261
        %v263 = vrot.slane %v228, %v262
        %v265 = vadd.f32 %v257, %v263
        %v266 = vadd.f32 %v258, %v263
        %267 = vst [vmem:[%s217] sm:$0xff] %v265
        %268 = vst [vmem:[%s217 + $0x8] sm:$0xff] %v266
        %s269 = sand.u32 %s137, 1
        %s270 = scalar_lea.sflag [#allocation3], %s269
        %s271 = sand.u32 %s137, 1
        %s272 = smul.addr %s271, 16
        %s273 = scalar_lea.vmem [#allocation2], %s272
        // Predicated region
        $region41: #{t2v_decoder_layer.7} parent=39 // pred_check
          %p274 = pneg %p147
        $region42: #{t2v_decoder_layer.7} parent=39 // pred_check_branch
          %276 = sbr.rel (%p274) target = $region44
        $region43: #{t2v_decoder_layer.7} parent=39 // pred_region
          %s278 = ssub.s32 256, 256
          %279 = vsyncadd %s270, %s278
          %s280 = smul.addr %s19, 2
          %s281 = smul.addr %s280, 128
          %s282 = scalar_lea.hbm %s5, %s281
          %s283 = sshll.u32 %s273, 4
          %s284 = int_to_ptr.vmem [resolvable:$true] %s283
          %289 = dma.vmem_to_hbm [thread:$0]  %s284, 256, %s282, %s270, 128, 128, 8
        $region44: #{t2v_decoder_layer.7} parent=39 // pred_fallthru
          _
      $region40: #{t2v_decoder_layer.7} parent=5 // pred_fallthru
        _
      %p290 = scmp.le.s32.totalorder 2, %s14
      // Predicated region
      $region45: #{t2v_decoder_layer.7} parent=5 // pred_check
        %p291 = pneg %p290
      $region46: #{t2v_decoder_layer.7} parent=5 // pred_check_branch
        %293 = sbr.rel (%p291) target = $region48
      $region47: #{t2v_decoder_layer.7} parent=5 // pred_region
        %s294 = ssub.s32 %s14, 2
        // Predicated region
        $region49: #{t2v_decoder_layer.7} parent=47 // pred_check
          %p295 = pneg %p153
        $region50: #{t2v_decoder_layer.7} parent=47 // pred_check_branch
          %297 = sbr.rel (%p295) target = $region52
        $region51: #{t2v_decoder_layer.7} parent=47 // pred_region
          %s298 = sand.u32 %s138, 1
          %s299 = scalar_lea.sflag [#allocation3], %s298
          %s300 = sand.u32 %s138, 1
          %s301 = smul.addr %s300, 16
          %s302 = scalar_lea.vmem [#allocation2], %s301
          %303 = dma.done %s299, 256
        $region52: #{t2v_decoder_layer.7} parent=47 // pred_fallthru
          _
      $region48: #{t2v_decoder_layer.7} parent=5 // pred_fallthru
        _
    $region6: #{t2v_decoder_layer.7} parent=1 // loop_footer
      %s18 = sadd.s32 1, %s14
    $region7: #{t2v_decoder_layer.7} parent=1 // loop_footer_branch
      %13 = sbr.rel target = $region3
    $region8: #{t2v_decoder_layer.7} parent=1 // loop_exit
      _
    %304 = vsyncpa [#allocation3], 1
    %s305 = scalar_lea.sflag [#allocation3], 1
    %306 = vsyncpa %s305, 1

// kernel: t2v_decoder_layer.6
$region0: #{t2v_decoder_layer.6}
  #allocation0 [shape = 'u32[]', space=smem, size = 0x4, offset = 0x4, fixed_abs, tag = 'smem constant byte address 0x4 - core index']
  #allocation1 [shape = 'u32[144,128]{1,0:T(1,128)}', space=vmem, size = 0x12000, scoped, tag = 'internal scratch']
  %s0 = inlined_call_operand.vmem [shape: bf16[2,16,128], index: 0, kind: input, shape index: {}]
  %s1 = inlined_call_operand.vmem [shape: f32[2,1,128], index: 1, kind: input, shape index: {}]
  %s2 = inlined_call_operand.vmem [shape: f32[2,1,128], index: 2, kind: input, shape index: {}]
  %s3 = inlined_call_operand.vmem [shape: f32[1,128], index: 3, kind: input, shape index: {}]
  %s4 = inlined_call_operand.vmem [shape: f32[1,128], index: 4, kind: input, shape index: {}]
  %s5 = inlined_call_operand.vmem [shape: bf16[128,512], index: 5, kind: input, shape index: {}]
  %s6 = inlined_call_operand.vmem [shape: f32[1,512], index: 6, kind: input, shape index: {}]
  %s7 = inlined_call_operand.vmem [shape: bf16[512,128], index: 7, kind: input, shape index: {}]
  %s8 = inlined_call_operand.vmem [shape: f32[1,128], index: 8, kind: input, shape index: {}]
  %s9 = inlined_call_operand.vmem [shape: bf16[2,16,128], index: 9, kind: output, shape index: {0}]
  %s10 = inlined_call_operand.vmem [shape: f32[2,1,128], index: 10, kind: output, shape index: {1}]
  %s11 = inlined_call_operand.vmem [shape: f32[2,1,128], index: 11, kind: output, shape index: {2}]
  %12 = xla_tuple %s9, %s10, %s11
  %s13 = sld [smem:[#allocation0]]
  $region85: #{t2v_decoder_layer.6} parent=0
    _
  %s15 = ssub.s32 1, %s13
  %s16 = scalar_select 0, %s15, %s13
  loop: start=0, step=1, limit=4
  $region2: #{t2v_decoder_layer.6} parent=0 // loop_pre_header
    _
  $region3: #{t2v_decoder_layer.6} parent=0 // loop_header
    %s18 = sphi 0, %s22
    %p19 = scmp.ge.s32.totalorder %s18, 4
    %s28 = sphi 0, %s30
    %s31 = sphi 0, %s28
    %s32 = sphi 0, %s31
    %s48 = sphi 0, %s32
    %s52 = sphi 0, %s52
    %s54 = sphi 0, %s52
    %s55 = sphi 0, %s54
    %s69 = sphi 0, %s55
    %s73 = sphi 0, %s73
    %s75 = sphi 0, %s73
    %s76 = sphi 0, %s75
    %s90 = sphi 0, %s76
    %s94 = sphi 0, %s94
    %s96 = sphi 0, %s94
    %s97 = sphi 0, %s96
    %s111 = sphi 0, %s97
    %s115 = sphi 0, %s115
    %s117 = sphi 0, %s115
    %s118 = sphi 0, %s117
    %s132 = sphi 0, %s118
    %s136 = sphi 0, %s136
    %s138 = sphi 0, %s136
    %s139 = sphi 0, %s138
    %s153 = sphi 0, %s139
    %s157 = sphi 0, %s157
    %s159 = sphi 0, %s157
    %s160 = sphi 0, %s159
    %s174 = sphi 0, %s160
    %s178 = sphi 0, %s178
    %s180 = sphi 0, %s178
    %s181 = sphi 0, %s180
    %s195 = sphi 0, %s181
    %s199 = sphi 0, %s199
    %s201 = sphi 0, %s199
    %s202 = sphi 0, %s201
    %s216 = sphi 0, %s202
    %s222 = sphi 0, %s224
    %s225 = sphi 0, %s222
    %s226 = sphi 0, %s225
    %s242 = sphi 0, %s226
    %s248 = sphi 0, %s250
    %s251 = sphi 0, %s248
    %s252 = sphi 0, %s251
    %s268 = sphi 0, %s252
    %s274 = sphi 0, %s276
    %s277 = sphi 0, %s274
    %s278 = sphi 0, %s277
    %s294 = sphi 0, %s278
  $region4: #{t2v_decoder_layer.6} parent=0 // loop_header_branch
    %21 = sbr.rel (%p19) target = $region8
  $region5: #{t2v_decoder_layer.6} parent=0 // loop_body
    %s23 = ssub.s32 %s18, 1
    %s24 = ssub.s32 %s18, 2
    %s25 = sadd.s32 %s18, 1
    %s26 = ssub.s32 %s18, %s25
    %p27 = scmp.eq.s32.totalorder %s26, 0
    %s29 = sadd.s32 %s28, 1
    %s30 = scalar_select %p27, %s28, %s29
    %p33 = pneg %p27
    %p34 = scmp.eq.s32.totalorder %s18, 1
    %p35 = por %p33, %p34
    %p36 = scmp.ne.s32.totalorder %s28, %s31
    %p37 = scmp.eq.s32.totalorder %s18, 0
    %p38 = por %p36, %p37
    %p39 = scmp.ne.s32.totalorder %s28, %s31
    %p40 = scmp.eq.s32.totalorder %s23, 1
    %p41 = por %p39, %p40
    %p42 = scmp.ne.s32.totalorder %s31, %s32
    %p43 = scmp.eq.s32.totalorder %s23, 0
    %p44 = por %p42, %p43
    %p45 = scmp.ne.s32.totalorder %s31, %s32
    %p46 = scmp.eq.s32.totalorder %s24, 1
    %p47 = por %p45, %p46
    %p49 = scmp.ne.s32.totalorder %s32, %s48
    %p50 = scmp.eq.s32.totalorder %s24, 0
    %p51 = por %p49, %p50
    %s53 = sadd.s32 %s52, 1
    %p56 = scmp.eq.s32.totalorder %s18, 1
    %p57 = scmp.ne.s32.totalorder %s52, %s54
    %p58 = scmp.eq.s32.totalorder %s18, 0
    %p59 = por %p57, %p58
    %p60 = scmp.ne.s32.totalorder %s52, %s54
    %p61 = scmp.eq.s32.totalorder %s23, 1
    %p62 = por %p60, %p61
    %p63 = scmp.ne.s32.totalorder %s54, %s55
    %p64 = scmp.eq.s32.totalorder %s23, 0
    %p65 = por %p63, %p64
    %p66 = scmp.ne.s32.totalorder %s54, %s55
    %p67 = scmp.eq.s32.totalorder %s24, 1
    %p68 = por %p66, %p67
    %p70 = scmp.ne.s32.totalorder %s55, %s69
    %p71 = scmp.eq.s32.totalorder %s24, 0
    %p72 = por %p70, %p71
    %s74 = sadd.s32 %s73, 1
    %p77 = scmp.eq.s32.totalorder %s18, 1
    %p78 = scmp.ne.s32.totalorder %s73, %s75
    %p79 = scmp.eq.s32.totalorder %s18, 0
    %p80 = por %p78, %p79
    %p81 = scmp.ne.s32.totalorder %s73, %s75
    %p82 = scmp.eq.s32.totalorder %s23, 1
    %p83 = por %p81, %p82
    %p84 = scmp.ne.s32.totalorder %s75, %s76
    %p85 = scmp.eq.s32.totalorder %s23, 0
    %p86 = por %p84, %p85
    %p87 = scmp.ne.s32.totalorder %s75, %s76
    %p88 = scmp.eq.s32.totalorder %s24, 1
    %p89 = por %p87, %p88
    %p91 = scmp.ne.s32.totalorder %s76, %s90
    %p92 = scmp.eq.s32.totalorder %s24, 0
    %p93 = por %p91, %p92
    %s95 = sadd.s32 %s94, 1
    %p98 = scmp.eq.s32.totalorder %s18, 1
    %p99 = scmp.ne.s32.totalorder %s94, %s96
    %p100 = scmp.eq.s32.totalorder %s18, 0
    %p101 = por %p99, %p100
    %p102 = scmp.ne.s32.totalorder %s94, %s96
    %p103 = scmp.eq.s32.totalorder %s23, 1
    %p104 = por %p102, %p103
    %p105 = scmp.ne.s32.totalorder %s96, %s97
    %p106 = scmp.eq.s32.totalorder %s23, 0
    %p107 = por %p105, %p106
    %p108 = scmp.ne.s32.totalorder %s96, %s97
    %p109 = scmp.eq.s32.totalorder %s24, 1
    %p110 = por %p108, %p109
    %p112 = scmp.ne.s32.totalorder %s97, %s111
    %p113 = scmp.eq.s32.totalorder %s24, 0
    %p114 = por %p112, %p113
    %s116 = sadd.s32 %s115, 1
    %p119 = scmp.eq.s32.totalorder %s18, 1
    %p120 = scmp.ne.s32.totalorder %s115, %s117
    %p121 = scmp.eq.s32.totalorder %s18, 0
    %p122 = por %p120, %p121
    %p123 = scmp.ne.s32.totalorder %s115, %s117
    %p124 = scmp.eq.s32.totalorder %s23, 1
    %p125 = por %p123, %p124
    %p126 = scmp.ne.s32.totalorder %s117, %s118
    %p127 = scmp.eq.s32.totalorder %s23, 0
    %p128 = por %p126, %p127
    %p129 = scmp.ne.s32.totalorder %s117, %s118
    %p130 = scmp.eq.s32.totalorder %s24, 1
    %p131 = por %p129, %p130
    %p133 = scmp.ne.s32.totalorder %s118, %s132
    %p134 = scmp.eq.s32.totalorder %s24, 0
    %p135 = por %p133, %p134
    %s137 = sadd.s32 %s136, 1
    %p140 = scmp.eq.s32.totalorder %s18, 1
    %p141 = scmp.ne.s32.totalorder %s136, %s138
    %p142 = scmp.eq.s32.totalorder %s18, 0
    %p143 = por %p141, %p142
    %p144 = scmp.ne.s32.totalorder %s136, %s138
    %p145 = scmp.eq.s32.totalorder %s23, 1
    %p146 = por %p144, %p145
    %p147 = scmp.ne.s32.totalorder %s138, %s139
    %p148 = scmp.eq.s32.totalorder %s23, 0
    %p149 = por %p147, %p148
    %p150 = scmp.ne.s32.totalorder %s138, %s139
    %p151 = scmp.eq.s32.totalorder %s24, 1
    %p152 = por %p150, %p151
    %p154 = scmp.ne.s32.totalorder %s139, %s153
    %p155 = scmp.eq.s32.totalorder %s24, 0
    %p156 = por %p154, %p155
    %s158 = sadd.s32 %s157, 1
    %p161 = scmp.eq.s32.totalorder %s18, 1
    %p162 = scmp.ne.s32.totalorder %s157, %s159
    %p163 = scmp.eq.s32.totalorder %s18, 0
    %p164 = por %p162, %p163
    %p165 = scmp.ne.s32.totalorder %s157, %s159
    %p166 = scmp.eq.s32.totalorder %s23, 1
    %p167 = por %p165, %p166
    %p168 = scmp.ne.s32.totalorder %s159, %s160
    %p169 = scmp.eq.s32.totalorder %s23, 0
    %p170 = por %p168, %p169
    %p171 = scmp.ne.s32.totalorder %s159, %s160
    %p172 = scmp.eq.s32.totalorder %s24, 1
    %p173 = por %p171, %p172
    %p175 = scmp.ne.s32.totalorder %s160, %s174
    %p176 = scmp.eq.s32.totalorder %s24, 0
    %p177 = por %p175, %p176
    %s179 = sadd.s32 %s178, 1
    %p182 = scmp.eq.s32.totalorder %s18, 1
    %p183 = scmp.ne.s32.totalorder %s178, %s180
    %p184 = scmp.eq.s32.totalorder %s18, 0
    %p185 = por %p183, %p184
    %p186 = scmp.ne.s32.totalorder %s178, %s180
    %p187 = scmp.eq.s32.totalorder %s23, 1
    %p188 = por %p186, %p187
    %p189 = scmp.ne.s32.totalorder %s180, %s181
    %p190 = scmp.eq.s32.totalorder %s23, 0
    %p191 = por %p189, %p190
    %p192 = scmp.ne.s32.totalorder %s180, %s181
    %p193 = scmp.eq.s32.totalorder %s24, 1
    %p194 = por %p192, %p193
    %p196 = scmp.ne.s32.totalorder %s181, %s195
    %p197 = scmp.eq.s32.totalorder %s24, 0
    %p198 = por %p196, %p197
    %s200 = sadd.s32 %s199, 1
    %p203 = scmp.eq.s32.totalorder %s18, 1
    %p204 = scmp.ne.s32.totalorder %s199, %s201
    %p205 = scmp.eq.s32.totalorder %s18, 0
    %p206 = por %p204, %p205
    %p207 = scmp.ne.s32.totalorder %s199, %s201
    %p208 = scmp.eq.s32.totalorder %s23, 1
    %p209 = por %p207, %p208
    %p210 = scmp.ne.s32.totalorder %s201, %s202
    %p211 = scmp.eq.s32.totalorder %s23, 0
    %p212 = por %p210, %p211
    %p213 = scmp.ne.s32.totalorder %s201, %s202
    %p214 = scmp.eq.s32.totalorder %s24, 1
    %p215 = por %p213, %p214
    %p217 = scmp.ne.s32.totalorder %s202, %s216
    %p218 = scmp.eq.s32.totalorder %s24, 0
    %p219 = por %p217, %p218
    %s220 = ssub.s32 %s18, %s25
    %p221 = scmp.eq.s32.totalorder %s220, 0
    %s223 = sadd.s32 %s222, 1
    %s224 = scalar_select %p221, %s222, %s223
    %p227 = pneg %p221
    %p228 = scmp.eq.s32.totalorder %s18, 1
    %p229 = por %p227, %p228
    %p230 = scmp.ne.s32.totalorder %s222, %s225
    %p231 = scmp.eq.s32.totalorder %s18, 0
    %p232 = por %p230, %p231
    %p233 = scmp.ne.s32.totalorder %s222, %s225
    %p234 = scmp.eq.s32.totalorder %s23, 1
    %p235 = por %p233, %p234
    %p236 = scmp.ne.s32.totalorder %s225, %s226
    %p237 = scmp.eq.s32.totalorder %s23, 0
    %p238 = por %p236, %p237
    %p239 = scmp.ne.s32.totalorder %s225, %s226
    %p240 = scmp.eq.s32.totalorder %s24, 1
    %p241 = por %p239, %p240
    %p243 = scmp.ne.s32.totalorder %s226, %s242
    %p244 = scmp.eq.s32.totalorder %s24, 0
    %p245 = por %p243, %p244
    %s246 = ssub.s32 %s18, %s25
    %p247 = scmp.eq.s32.totalorder %s246, 0
    %s249 = sadd.s32 %s248, 1
    %s250 = scalar_select %p247, %s248, %s249
    %p253 = pneg %p247
    %p254 = scmp.eq.s32.totalorder %s18, 1
    %p255 = por %p253, %p254
    %p256 = scmp.ne.s32.totalorder %s248, %s251
    %p257 = scmp.eq.s32.totalorder %s18, 0
    %p258 = por %p256, %p257
    %p259 = scmp.ne.s32.totalorder %s248, %s251
    %p260 = scmp.eq.s32.totalorder %s23, 1
    %p261 = por %p259, %p260
    %p262 = scmp.ne.s32.totalorder %s251, %s252
    %p263 = scmp.eq.s32.totalorder %s23, 0
    %p264 = por %p262, %p263
    %p265 = scmp.ne.s32.totalorder %s251, %s252
    %p266 = scmp.eq.s32.totalorder %s24, 1
    %p267 = por %p265, %p266
    %p269 = scmp.ne.s32.totalorder %s252, %s268
    %p270 = scmp.eq.s32.totalorder %s24, 0
    %p271 = por %p269, %p270
    %s272 = ssub.s32 %s18, %s25
    %p273 = scmp.eq.s32.totalorder %s272, 0
    %s275 = sadd.s32 %s274, 1
    %s276 = scalar_select %p273, %s274, %s275
    %p279 = pneg %p273
    %p280 = scmp.eq.s32.totalorder %s18, 1
    %p281 = por %p279, %p280
    %p282 = scmp.ne.s32.totalorder %s274, %s277
    %p283 = scmp.eq.s32.totalorder %s18, 0
    %p284 = por %p282, %p283
    %p285 = scmp.ne.s32.totalorder %s274, %s277
    %p286 = scmp.eq.s32.totalorder %s23, 1
    %p287 = por %p285, %p286
    %p288 = scmp.ne.s32.totalorder %s277, %s278
    %p289 = scmp.eq.s32.totalorder %s23, 0
    %p290 = por %p288, %p289
    %p291 = scmp.ne.s32.totalorder %s277, %s278
    %p292 = scmp.eq.s32.totalorder %s24, 1
    %p293 = por %p291, %p292
    %p295 = scmp.ne.s32.totalorder %s278, %s294
    %p296 = scmp.eq.s32.totalorder %s24, 0
    %p297 = por %p295, %p296
    %p298 = scmp.le.s32.totalorder 1, %s18
    %p299 = scmp.lt.s32.totalorder %s18, 3
    %p300 = pnand %p298, %p299
    %p301 = pneg %p300
    // Predicated region
    $region9: #{t2v_decoder_layer.6} parent=5 // pred_check
      _
    $region10: #{t2v_decoder_layer.6} parent=5 // pred_check_branch
      %303 = sbr.rel (%p300) target = $region12
    $region11: #{t2v_decoder_layer.6} parent=5 // pred_region
      %s304 = ssub.s32 %s18, 1
      // Predicated region
      $region13: #{t2v_decoder_layer.6} parent=11 // pred_check
        %p305 = pneg %p65
      $region14: #{t2v_decoder_layer.6} parent=11 // pred_check_branch
        %307 = sbr.rel (%p305) target = $region16
      $region15: #{t2v_decoder_layer.6} parent=11 // pred_region
        _
      $region16: #{t2v_decoder_layer.6} parent=11 // pred_fallthru
        _
      // Predicated region
      $region17: #{t2v_decoder_layer.6} parent=11 // pred_check
        %p308 = pneg %p86
      $region18: #{t2v_decoder_layer.6} parent=11 // pred_check_branch
        %310 = sbr.rel (%p308) target = $region20
      $region19: #{t2v_decoder_layer.6} parent=11 // pred_region
        _
      $region20: #{t2v_decoder_layer.6} parent=11 // pred_fallthru
        _
      // Predicated region
      $region21: #{t2v_decoder_layer.6} parent=11 // pred_check
        %p311 = pneg %p107
      $region22: #{t2v_decoder_layer.6} parent=11 // pred_check_branch
        %313 = sbr.rel (%p311) target = $region24
      $region23: #{t2v_decoder_layer.6} parent=11 // pred_region
        _
      $region24: #{t2v_decoder_layer.6} parent=11 // pred_fallthru
        _
      // Predicated region
      $region25: #{t2v_decoder_layer.6} parent=11 // pred_check
        %p314 = pneg %p128
      $region26: #{t2v_decoder_layer.6} parent=11 // pred_check_branch
        %316 = sbr.rel (%p314) target = $region28
      $region27: #{t2v_decoder_layer.6} parent=11 // pred_region
        _
      $region28: #{t2v_decoder_layer.6} parent=11 // pred_fallthru
        _
      // Predicated region
      $region29: #{t2v_decoder_layer.6} parent=11 // pred_check
        %p317 = pneg %p149
      $region30: #{t2v_decoder_layer.6} parent=11 // pred_check_branch
        %319 = sbr.rel (%p317) target = $region32
      $region31: #{t2v_decoder_layer.6} parent=11 // pred_region
        _
      $region32: #{t2v_decoder_layer.6} parent=11 // pred_fallthru
        _
      // Predicated region
      $region33: #{t2v_decoder_layer.6} parent=11 // pred_check
        %p320 = pneg %p170
      $region34: #{t2v_decoder_layer.6} parent=11 // pred_check_branch
        %322 = sbr.rel (%p320) target = $region36
      $region35: #{t2v_decoder_layer.6} parent=11 // pred_region
        _
      $region36: #{t2v_decoder_layer.6} parent=11 // pred_fallthru
        _
      // Predicated region
      $region37: #{t2v_decoder_layer.6} parent=11 // pred_check
        %p323 = pneg %p191
      $region38: #{t2v_decoder_layer.6} parent=11 // pred_check_branch
        %325 = sbr.rel (%p323) target = $region40
      $region39: #{t2v_decoder_layer.6} parent=11 // pred_region
        _
      $region40: #{t2v_decoder_layer.6} parent=11 // pred_fallthru
        _
      // Predicated region
      $region41: #{t2v_decoder_layer.6} parent=11 // pred_check
        %p326 = pneg %p212
      $region42: #{t2v_decoder_layer.6} parent=11 // pred_check_branch
        %328 = sbr.rel (%p326) target = $region44
      $region43: #{t2v_decoder_layer.6} parent=11 // pred_region
        _
      $region44: #{t2v_decoder_layer.6} parent=11 // pred_fallthru
        _
    $region12: #{t2v_decoder_layer.6} parent=5 // pred_fallthru
      _
    %p329 = scmp.lt.s32.totalorder %s18, 2
    // Predicated region
    $region45: #{t2v_decoder_layer.6} parent=5 // pred_check
      %p330 = pneg %p329
    $region46: #{t2v_decoder_layer.6} parent=5 // pred_check_branch
      %332 = sbr.rel (%p330) target = $region48
    $region47: #{t2v_decoder_layer.6} parent=5 // pred_region
      // Predicated region
      $region49: #{t2v_decoder_layer.6} parent=47 // pred_check
        %p333 = pneg %p38
      $region50: #{t2v_decoder_layer.6} parent=47 // pred_check_branch
        %335 = sbr.rel (%p333) target = $region52
      $region51: #{t2v_decoder_layer.6} parent=47 // pred_region
        %p336 = scmp.lt.s32.totalorder %s18, 1
        %s337 = scalar_select %p336, %s18, 1
        %s338 = smul.addr %s337, 2
        %s339 = smul.addr %s338, 4
        %s340 = scalar_lea.vmem %s0, %s339
      $region52: #{t2v_decoder_layer.6} parent=47 // pred_fallthru
        _
    $region48: #{t2v_decoder_layer.6} parent=5 // pred_fallthru
      _
    %p341 = scmp.le.s32.totalorder 1, %s18
    %p342 = scmp.lt.s32.totalorder %s18, 3
    %p343 = pnand %p341, %p342
    %p344 = pneg %p343
    // Predicated region
    $region53: #{t2v_decoder_layer.6} parent=5 // pred_check
      _
    $region54: #{t2v_decoder_layer.6} parent=5 // pred_check_branch
      %346 = sbr.rel (%p343) target = $region56
    $region55: #{t2v_decoder_layer.6} parent=5 // pred_region
      %s347 = ssub.s32 %s18, 1
      %p348 = scmp.lt.s32.totalorder %s23, 1
      %s349 = scalar_select %p348, %s23, 1
      %s350 = smul.addr %s349, 2
      %s351 = smul.addr %s350, 4
      %s352 = scalar_lea.vmem %s0, %s351
      %p353 = pneg %p44
      %p354 = pneg %p41
      %p355 = pneg %p65
      %p356 = pneg %p62
      %p357 = pneg %p86
      %p358 = pneg %p83
      %p359 = pneg %p107
      %p360 = pneg %p104
      %p361 = pneg %p128
      %p362 = pneg %p125
      %p363 = pneg %p149
      %p364 = pneg %p146
      %p365 = pneg %p170
      %p366 = pneg %p167
      %p367 = pneg %p191
      %p368 = pneg %p188
      %p369 = pneg %p212
      %p370 = pneg %p209
      %p371 = pneg %p238
      %p372 = pneg %p235
      %p373 = scmp.lt.s32.totalorder %s23, 1
      %s374 = scalar_select %p373, %s23, 1
      %s375 = smul.addr %s374, 2
      %s376 = smul.addr %s375, 4
      %s377 = scalar_lea.vmem %s9, %s376
      %p378 = pneg %p264
      %p379 = pneg %p261
      %p380 = scmp.lt.s32.totalorder %s23, 1
      %s381 = scalar_select %p380, %s23, 1
      %s382 = scalar_lea.vmem %s10, %s381
      %p383 = pneg %p290
      %p384 = pneg %p287
      %p385 = scmp.lt.s32.totalorder %s23, 1
      %s386 = scalar_select %p385, %s23, 1
      %s387 = scalar_lea.vmem %s11, %s386
      %p388 = scmp.lt.s32.totalorder %s23, 1
      %s389 = scalar_select %p388, %s23, 1
      %s390 = smul.addr %s389, 2
      %s391 = smul.addr %s390, 4
      %s392 = scalar_lea.vmem %s0, %s391
      %p393 = scmp.lt.s32.totalorder %s23, 1
      %s394 = scalar_select %p393, %s23, 1
      %s395 = smul.addr %s394, 2
      %s396 = smul.addr %s395, 4
      %s397 = scalar_lea.vmem %s9, %s396
      %p398 = scmp.lt.s32.totalorder %s23, 1
      %s399 = scalar_select %p398, %s23, 1
      %s400 = scalar_lea.vmem %s10, %s399
      %p401 = scmp.lt.s32.totalorder %s23, 1
      %s402 = scalar_select %p401, %s23, 1
      %s403 = scalar_lea.vmem %s11, %s402
      %v405 = vld [vmem:[%s392] sm:$0xf]
      %v406 = vld [vmem:[%s392 + $0x4] sm:$0xf]
      %v407 = vunpack.c.l.bf16 %v405
      %v408 = vunpack.c.l.bf16 %v406
      %v409 = vld [vmem:[%s3] sm:$0x1]
      %v410 = vld [vmem:[%s4] sm:$0x1]
      %v411 = vld [vmem:[%s1] sm:$0x1]
      %v412 = vld [vmem:[%s1 + $0x1] sm:$0x1]
      %vm413 = vcmask 1040384
      %v414 = vsel %vm413, %v411, 0.0
      %v415 = vsel %vm413, %v412, 0.0
      %v416 = vadd.f32 %v414, %v415
      %v417 = vmul.f32 %v416, 0.03125
      %v418 = vld [vmem:[%s2] sm:$0x1]
      %v419 = vld [vmem:[%s2 + $0x1] sm:$0x1]
      %v420 = vsel %vm413, %v418, 0.0
      %v421 = vsel %vm413, %v419, 0.0
      %v422 = vadd.f32 %v420, %v421
      %v423 = vmul.f32 %v422, 0.03125
      %v424 = vmul.f32 %v417, %v417
      %v425 = vsub.f32 %v423, %v424
      %v426 = vadd.f32 %v425, 1e-05
      %v427 = vrsqrt.pop %v426
      %v428 = vmul.f32 %v427, %v409
      %v429 = vlaneseq
      %v430 = vshrl.u32 %v429, 7
      %v431 = vsub.s32 0, %v430
      %v432 = vrot.slane %v417, %v431
      %v433 = vsub.f32 %v407, %v432
      %v434 = vsub.f32 %v408, %v432
      %v435 = vlaneseq
      %v436 = vshrl.u32 %v435, 7
      %v437 = vsub.s32 0, %v436
      %v438 = vrot.slane %v428, %v437
      %v439 = vmul.f32 %v433, %v438
      %v440 = vmul.f32 %v434, %v438
      %v442 = vlaneseq
      %v443 = vshrl.u32 %v442, 7
      %v444 = vsub.s32 0, %v443
      %v445 = vrot.slane %v410, %v444
      %v447 = vadd.f32 %v439, %v445
      %v448 = vadd.f32 %v440, %v445
      %v449 = vpack.c.bf16 %v448, %v447
      %v450 = vld [vmem:[%s5] sm:$0xff]
      %v451 = vld [vmem:[%s5 + $0x8] sm:$0xff]
      %v452 = vld [vmem:[%s5 + $0x10] sm:$0xff]
      %v453 = vld [vmem:[%s5 + $0x18] sm:$0xff]
      %v454 = vld [vmem:[%s5 + $0x20] sm:$0xff]
      %v455 = vld [vmem:[%s5 + $0x28] sm:$0xff]
      %v456 = vld [vmem:[%s5 + $0x30] sm:$0xff]
      %v457 = vld [vmem:[%s5 + $0x38] sm:$0xff]
      %v458 = vld [vmem:[%s5 + $0x40] sm:$0xff]
      %v459 = vld [vmem:[%s5 + $0x48] sm:$0xff]
      %v460 = vld [vmem:[%s5 + $0x50] sm:$0xff]
      %v461 = vld [vmem:[%s5 + $0x58] sm:$0xff]
      %v462 = vld [vmem:[%s5 + $0x60] sm:$0xff]
      %v463 = vld [vmem:[%s5 + $0x68] sm:$0xff]
      %v464 = vld [vmem:[%s5 + $0x70] sm:$0xff]
      %v465 = vld [vmem:[%s5 + $0x78] sm:$0xff]
      %v466 = vld [vmem:[%s5 + $0x80] sm:$0xff]
      %v467 = vld [vmem:[%s5 + $0x88] sm:$0xff]
      %v468 = vld [vmem:[%s5 + $0x90] sm:$0xff]
      %v469 = vld [vmem:[%s5 + $0x98] sm:$0xff]
      %v470 = vld [vmem:[%s5 + $0xa0] sm:$0xff]
      %v471 = vld [vmem:[%s5 + $0xa8] sm:$0xff]
      %v472 = vld [vmem:[%s5 + $0xb0] sm:$0xff]
      %v473 = vld [vmem:[%s5 + $0xb8] sm:$0xff]
      %v474 = vld [vmem:[%s5 + $0xc0] sm:$0xff]
      %v475 = vld [vmem:[%s5 + $0xc8] sm:$0xff]
      %v476 = vld [vmem:[%s5 + $0xd0] sm:$0xff]
      %v477 = vld [vmem:[%s5 + $0xd8] sm:$0xff]
      %v478 = vld [vmem:[%s5 + $0xe0] sm:$0xff]
      %v479 = vld [vmem:[%s5 + $0xe8] sm:$0xff]
      %v480 = vld [vmem:[%s5 + $0xf0] sm:$0xff]
      %v481 = vld [vmem:[%s5 + $0xf8] sm:$0xff]
      %v482 = vld [vmem:[%s6] sm:$0xf]
      %v484 = vlaneseq
      %v485 = vshrl.u32 %v484, 7
      %v486 = vsub.s32 0, %v485
      %v487 = vrot.slane %v482, %v486
      %v488 = vlaneseq
      %v489 = vshrl.u32 %v488, 7
      %v490 = vsub.s32 1, %v489
      %v491 = vrot.slane %v482, %v490
      %v492 = vlaneseq
      %v493 = vshrl.u32 %v492, 7
      %v494 = vsub.s32 2, %v493
      %v495 = vrot.slane %v482, %v494
      %v496 = vlaneseq
      %v497 = vshrl.u32 %v496, 7
      %v498 = vsub.s32 3, %v497
      %v499 = vrot.slane %v482, %v498
      %v536 = vunpack.c.l.b16 %v450
      %v537 = vunpack.c.h.b16 %v450
      %v538 = vunpack.c.l.b16 %v451
      %v539 = vunpack.c.h.b16 %v451
      %v540 = vunpack.c.l.b16 %v452
      %v541 = vunpack.c.h.b16 %v452
      %v542 = vunpack.c.l.b16 %v453
      %v543 = vunpack.c.h.b16 %v453
      %v544 = vunpack.c.l.b16 %v454
      %v545 = vunpack.c.h.b16 %v454
      %v546 = vunpack.c.l.b16 %v455
      %v547 = vunpack.c.h.b16 %v455
      %v548 = vunpack.c.l.b16 %v456
      %v549 = vunpack.c.h.b16 %v456
      %v550 = vunpack.c.l.b16 %v457
      %v551 = vunpack.c.h.b16 %v457
      %v552 = vunpack.c.l.b16 %v458
      %v553 = vunpack.c.h.b16 %v458
      %v554 = vunpack.c.l.b16 %v459
      %v555 = vunpack.c.h.b16 %v459
      %v556 = vunpack.c.l.b16 %v460
      %v557 = vunpack.c.h.b16 %v460
      %v558 = vunpack.c.l.b16 %v461
      %v559 = vunpack.c.h.b16 %v461
      %v560 = vunpack.c.l.b16 %v462
      %v561 = vunpack.c.h.b16 %v462
      %v562 = vunpack.c.l.b16 %v463
      %v563 = vunpack.c.h.b16 %v463
      %v564 = vunpack.c.l.b16 %v464
      %v565 = vunpack.c.h.b16 %v464
      %v566 = vunpack.c.l.b16 %v465
      %v567 = vunpack.c.h.b16 %v465
      %v568 = vunpack.c.l.b16 %v466
      %v569 = vunpack.c.h.b16 %v466
      %v570 = vunpack.c.l.b16 %v467
      %v571 = vunpack.c.h.b16 %v467
      %v572 = vunpack.c.l.b16 %v468
      %v573 = vunpack.c.h.b16 %v468
      %v574 = vunpack.c.l.b16 %v469
      %v575 = vunpack.c.h.b16 %v469
      %v576 = vunpack.c.l.b16 %v470
      %v577 = vunpack.c.h.b16 %v470
      %v578 = vunpack.c.l.b16 %v471
      %v579 = vunpack.c.h.b16 %v471
      %v580 = vunpack.c.l.b16 %v472
      %v581 = vunpack.c.h.b16 %v472
      %v582 = vunpack.c.l.b16 %v473
      %v583 = vunpack.c.h.b16 %v473
      %v584 = vunpack.c.l.b16 %v474
      %v585 = vunpack.c.h.b16 %v474
      %v586 = vunpack.c.l.b16 %v475
      %v587 = vunpack.c.h.b16 %v475
      %v588 = vunpack.c.l.b16 %v476
      %v589 = vunpack.c.h.b16 %v476
      %v590 = vunpack.c.l.b16 %v477
      %v591 = vunpack.c.h.b16 %v477
      %v592 = vunpack.c.l.b16 %v478
      %v593 = vunpack.c.h.b16 %v478
      %v594 = vunpack.c.l.b16 %v479
      %v595 = vunpack.c.h.b16 %v479
      %v596 = vunpack.c.l.b16 %v480
      %v597 = vunpack.c.h.b16 %v480
      %v598 = vunpack.c.l.b16 %v481
      %v599 = vunpack.c.h.b16 %v481
      %v600 = vpack.c.b16 %v540, %v536
      %v601 = vpack.c.b16 %v541, %v537
      %v602 = vpack.c.b16 %v542, %v538
      %v603 = vpack.c.b16 %v543, %v539
      %v604 = vpack.c.b16 %v548, %v544
      %v605 = vpack.c.b16 %v549, %v545
      %v606 = vpack.c.b16 %v550, %v546
      %v607 = vpack.c.b16 %v551, %v547
      %v608 = vpack.c.b16 %v556, %v552
      %v609 = vpack.c.b16 %v557, %v553
      %v610 = vpack.c.b16 %v558, %v554
      %v611 = vpack.c.b16 %v559, %v555
      %v612 = vpack.c.b16 %v564, %v560
      %v613 = vpack.c.b16 %v565, %v561
      %v614 = vpack.c.b16 %v566, %v562
      %v615 = vpack.c.b16 %v567, %v563
      %v616 = vpack.c.b16 %v572, %v568
      %v617 = vpack.c.b16 %v573, %v569
      %v618 = vpack.c.b16 %v574, %v570
      %v619 = vpack.c.b16 %v575, %v571
      %v620 = vpack.c.b16 %v580, %v576
      %v621 = vpack.c.b16 %v581, %v577
      %v622 = vpack.c.b16 %v582, %v578
      %v623 = vpack.c.b16 %v583, %v579
      %v624 = vpack.c.b16 %v588, %v584
      %v625 = vpack.c.b16 %v589, %v585
      %v626 = vpack.c.b16 %v590, %v586
      %v627 = vpack.c.b16 %v591, %v587
      %v628 = vpack.c.b16 %v596, %v592
      %v629 = vpack.c.b16 %v597, %v593
      %v630 = vpack.c.b16 %v598, %v594
      %v631 = vpack.c.b16 %v599, %v595
      %664 = vmatprep.subr.bf16.mxu0 %v629
      %665 = vmatpush1.bf16.msra.mxu0 %v628
      %666 = vmatprep.subr.bf16.mxu0 %v625
      %667 = vmatpush1.bf16.msra.mxu0 %v624
      %668 = vmatprep.subr.bf16.mxu0 %v621
      %669 = vmatpush1.bf16.msra.mxu0 %v620
      %670 = vmatprep.subr.bf16.mxu0 %v617
      %671 = vmatpush1.bf16.msra.mxu0 %v616
      %672 = vmatprep.subr.bf16.mxu0 %v613
      %673 = vmatpush1.bf16.msra.mxu0 %v612
      %674 = vmatprep.subr.bf16.mxu0 %v609
      %675 = vmatpush1.bf16.msra.mxu0 %v608
      %676 = vmatprep.subr.bf16.mxu0 %v605
      %677 = vmatpush1.bf16.msra.mxu0 %v604
      %678 = vmatprep.subr.bf16.mxu0 %v601
      %679 = vmatpush1.bf16.msra.mxu0 %v600
      %680 = vmatprep.subr.bf16.mxu0 0
      %681 = vmatpush2.bf16.msra.mxu0 0
      %682 = vmatprep.subr.bf16.mxu0 0
      %683 = vmatpush2.bf16.msra.mxu0 0
      %684 = vmatprep.subr.bf16.mxu0 0
      %685 = vmatpush2.bf16.msra.mxu0 0
      %686 = vmatprep.subr.bf16.mxu0 0
      %687 = vmatpush2.bf16.msra.mxu0 0
      %688 = vmatprep.subr.bf16.mxu0 0
      %689 = vmatpush2.bf16.msra.mxu0 0
      %690 = vmatprep.subr.bf16.mxu0 0
      %691 = vmatpush2.bf16.msra.mxu0 0
      %692 = vmatprep.subr.bf16.mxu0 0
      %693 = vmatpush2.bf16.msra.mxu0 0
      %694 = vmatprep.subr.bf16.mxu0 0
      %695 = vmatpush2.bf16.msra.mxu0 0
      %696 = vmatprep.mubr.bf16.mxu0 0
      %697 = vmatmul.mubr.bf16.gmra.mxu0 %v449
      %v698 = vpop.f32.mrf.mxu0
      %v699 = vadd.f32 %v487, %v698
      %v700 = vpop.f32.mrf.mxu0
      %v701 = vadd.f32 %v491, %v700
      %v702 = vpop.f32.mrf.mxu0
      %v703 = vadd.f32 %v487, %v702
      %v704 = vpop.f32.mrf.mxu0
      %v705 = vadd.f32 %v491, %v704
      %706 = vdwg.mxu0
      %707 = vmatprep.subr.bf16.mxu0 %v631
      %708 = vmatpush1.bf16.msra.mxu0 %v630
      %709 = vmatprep.subr.bf16.mxu0 %v627
      %710 = vmatpush1.bf16.msra.mxu0 %v626
      %711 = vmatprep.subr.bf16.mxu0 %v623
      %712 = vmatpush1.bf16.msra.mxu0 %v622
      %713 = vmatprep.subr.bf16.mxu0 %v619
      %714 = vmatpush1.bf16.msra.mxu0 %v618
      %715 = vmatprep.subr.bf16.mxu0 %v615
      %716 = vmatpush1.bf16.msra.mxu0 %v614
      %717 = vmatprep.subr.bf16.mxu0 %v611
      %718 = vmatpush1.bf16.msra.mxu0 %v610
      %719 = vmatprep.subr.bf16.mxu0 %v607
      %720 = vmatpush1.bf16.msra.mxu0 %v606
      %721 = vmatprep.subr.bf16.mxu0 %v603
      %722 = vmatpush1.bf16.msra.mxu0 %v602
      %723 = vmatprep.subr.bf16.mxu0 0
      %724 = vmatpush2.bf16.msra.mxu0 0
      %725 = vmatprep.subr.bf16.mxu0 0
      %726 = vmatpush2.bf16.msra.mxu0 0
      %727 = vmatprep.subr.bf16.mxu0 0
      %728 = vmatpush2.bf16.msra.mxu0 0
      %729 = vmatprep.subr.bf16.mxu0 0
      %730 = vmatpush2.bf16.msra.mxu0 0
      %731 = vmatprep.subr.bf16.mxu0 0
      %732 = vmatpush2.bf16.msra.mxu0 0
      %733 = vmatprep.subr.bf16.mxu0 0
      %734 = vmatpush2.bf16.msra.mxu0 0
      %735 = vmatprep.subr.bf16.mxu0 0
      %736 = vmatpush2.bf16.msra.mxu0 0
      %737 = vmatprep.subr.bf16.mxu0 0
      %738 = vmatpush2.bf16.msra.mxu0 0
      %739 = vmatprep.mubr.bf16.mxu0 0
      %740 = vmatmul.mubr.bf16.gmra.mxu0 %v449
      %v741 = vpop.f32.mrf.mxu0
      %v742 = vadd.f32 %v495, %v741
      %v743 = vpop.f32.mrf.mxu0
      %v744 = vadd.f32 %v499, %v743
      %v745 = vpop.f32.mrf.mxu0
      %v746 = vadd.f32 %v495, %v745
      %v747 = vpop.f32.mrf.mxu0
      %v748 = vadd.f32 %v499, %v747
      %749 = vdwg.mxu0
      %v750 = vmax.f32 %v699, 0.0
      %v751 = vmax.f32 %v701, 0.0
      %v752 = vmax.f32 %v742, 0.0
      %v753 = vmax.f32 %v744, 0.0
      %v754 = vmax.f32 %v703, 0.0
      %v755 = vmax.f32 %v705, 0.0
      %v756 = vmax.f32 %v746, 0.0
      %v757 = vmax.f32 %v748, 0.0
      %v758 = vpack.c.bf16 %v754, %v750
      %v759 = vpack.c.bf16 %v755, %v751
      %v760 = vpack.c.bf16 %v756, %v752
      %v761 = vpack.c.bf16 %v757, %v753
      %v762 = vld [vmem:[%s7] sm:$0xf]
      %v763 = vld [vmem:[%s7 + $0x4] sm:$0xf]
      %v764 = vld [vmem:[%s7 + $0x8] sm:$0xf]
      %v765 = vld [vmem:[%s7 + $0xc] sm:$0xf]
      %v766 = vld [vmem:[%s7 + $0x10] sm:$0xf]
      %v767 = vld [vmem:[%s7 + $0x14] sm:$0xf]
      %v768 = vld [vmem:[%s7 + $0x18] sm:$0xf]
      %v769 = vld [vmem:[%s7 + $0x1c] sm:$0xf]
      %v770 = vld [vmem:[%s7 + $0x20] sm:$0xf]
      %v771 = vld [vmem:[%s7 + $0x24] sm:$0xf]
      %v772 = vld [vmem:[%s7 + $0x28] sm:$0xf]
      %v773 = vld [vmem:[%s7 + $0x2c] sm:$0xf]
      %v774 = vld [vmem:[%s7 + $0x30] sm:$0xf]
      %v775 = vld [vmem:[%s7 + $0x34] sm:$0xf]
      %v776 = vld [vmem:[%s7 + $0x38] sm:$0xf]
      %v777 = vld [vmem:[%s7 + $0x3c] sm:$0xf]
      %v778 = vld [vmem:[%s7 + $0x40] sm:$0xf]
      %v779 = vld [vmem:[%s7 + $0x44] sm:$0xf]
      %v780 = vld [vmem:[%s7 + $0x48] sm:$0xf]
      %v781 = vld [vmem:[%s7 + $0x4c] sm:$0xf]
      %v782 = vld [vmem:[%s7 + $0x50] sm:$0xf]
      %v783 = vld [vmem:[%s7 + $0x54] sm:$0xf]
      %v784 = vld [vmem:[%s7 + $0x58] sm:$0xf]
      %v785 = vld [vmem:[%s7 + $0x5c] sm:$0xf]
      %v786 = vld [vmem:[%s7 + $0x60] sm:$0xf]
      %v787 = vld [vmem:[%s7 + $0x64] sm:$0xf]
      %v788 = vld [vmem:[%s7 + $0x68] sm:$0xf]
      %v789 = vld [vmem:[%s7 + $0x6c] sm:$0xf]
      %v790 = vld [vmem:[%s7 + $0x70] sm:$0xf]
      %v791 = vld [vmem:[%s7 + $0x74] sm:$0xf]
      %v792 = vld [vmem:[%s7 + $0x78] sm:$0xf]
      %v793 = vld [vmem:[%s7 + $0x7c] sm:$0xf]
      %v794 = vld [vmem:[%s7 + $0x80] sm:$0xf]
      %v795 = vld [vmem:[%s7 + $0x84] sm:$0xf]
      %v796 = vld [vmem:[%s7 + $0x88] sm:$0xf]
      %v797 = vld [vmem:[%s7 + $0x8c] sm:$0xf]
      %v798 = vld [vmem:[%s7 + $0x90] sm:$0xf]
      %v799 = vld [vmem:[%s7 + $0x94] sm:$0xf]
      %v800 = vld [vmem:[%s7 + $0x98] sm:$0xf]
      %v801 = vld [vmem:[%s7 + $0x9c] sm:$0xf]
      %v802 = vld [vmem:[%s7 + $0xa0] sm:$0xf]
      %v803 = vld [vmem:[%s7 + $0xa4] sm:$0xf]
      %v804 = vld [vmem:[%s7 + $0xa8] sm:$0xf]
      %v805 = vld [vmem:[%s7 + $0xac] sm:$0xf]
      %v806 = vld [vmem:[%s7 + $0xb0] sm:$0xf]
      %v807 = vld [vmem:[%s7 + $0xb4] sm:$0xf]
      %v808 = vld [vmem:[%s7 + $0xb8] sm:$0xf]
      %v809 = vld [vmem:[%s7 + $0xbc] sm:$0xf]
      %v810 = vld [vmem:[%s7 + $0xc0] sm:$0xf]
      %v811 = vld [vmem:[%s7 + $0xc4] sm:$0xf]
      %v812 = vld [vmem:[%s7 + $0xc8] sm:$0xf]
      %v813 = vld [vmem:[%s7 + $0xcc] sm:$0xf]
      %v814 = vld [vmem:[%s7 + $0xd0] sm:$0xf]
      %v815 = vld [vmem:[%s7 + $0xd4] sm:$0xf]
      %v816 = vld [vmem:[%s7 + $0xd8] sm:$0xf]
      %v817 = vld [vmem:[%s7 + $0xdc] sm:$0xf]
      %v818 = vld [vmem:[%s7 + $0xe0] sm:$0xf]
      %v819 = vld [vmem:[%s7 + $0xe4] sm:$0xf]
      %v820 = vld [vmem:[%s7 + $0xe8] sm:$0xf]
      %v821 = vld [vmem:[%s7 + $0xec] sm:$0xf]
      %v822 = vld [vmem:[%s7 + $0xf0] sm:$0xf]
      %v823 = vld [vmem:[%s7 + $0xf4] sm:$0xf]
      %v824 = vld [vmem:[%s7 + $0xf8] sm:$0xf]
      %v825 = vld [vmem:[%s7 + $0xfc] sm:$0xf]
      %v826 = vld [vmem:[%s8] sm:$0x1]
      %v828 = vlaneseq
      %v829 = vshrl.u32 %v828, 7
      %v830 = vsub.s32 0, %v829
      %v831 = vrot.slane %v826, %v830
      %v897 = vunpack.c.l.b16 %v762
      %v898 = vunpack.c.l.b16 %v763
      %v899 = vunpack.c.l.b16 %v764
      %v900 = vunpack.c.l.b16 %v765
      %v901 = vunpack.c.l.b16 %v766
      %v902 = vunpack.c.l.b16 %v767
      %v903 = vunpack.c.l.b16 %v768
      %v904 = vunpack.c.l.b16 %v769
      %v905 = vunpack.c.l.b16 %v770
      %v906 = vunpack.c.l.b16 %v771
      %v907 = vunpack.c.l.b16 %v772
      %v908 = vunpack.c.l.b16 %v773
      %v909 = vunpack.c.l.b16 %v774
      %v910 = vunpack.c.l.b16 %v775
      %v911 = vunpack.c.l.b16 %v776
      %v912 = vunpack.c.l.b16 %v777
      %v913 = vunpack.c.l.b16 %v778
      %v914 = vunpack.c.l.b16 %v779
      %v915 = vunpack.c.l.b16 %v780
      %v916 = vunpack.c.l.b16 %v781
      %v917 = vunpack.c.l.b16 %v782
      %v918 = vunpack.c.l.b16 %v783
      %v919 = vunpack.c.l.b16 %v784
      %v920 = vunpack.c.l.b16 %v785
      %v921 = vunpack.c.l.b16 %v786
      %v922 = vunpack.c.l.b16 %v787
      %v923 = vunpack.c.l.b16 %v788
      %v924 = vunpack.c.l.b16 %v789
      %v925 = vunpack.c.l.b16 %v790
      %v926 = vunpack.c.l.b16 %v791
      %v927 = vunpack.c.l.b16 %v792
      %v928 = vunpack.c.l.b16 %v793
      %v929 = vunpack.c.l.b16 %v794
      %v930 = vunpack.c.l.b16 %v795
      %v931 = vunpack.c.l.b16 %v796
      %v932 = vunpack.c.l.b16 %v797
      %v933 = vunpack.c.l.b16 %v798
      %v934 = vunpack.c.l.b16 %v799
      %v935 = vunpack.c.l.b16 %v800
      %v936 = vunpack.c.l.b16 %v801
      %v937 = vunpack.c.l.b16 %v802
      %v938 = vunpack.c.l.b16 %v803
      %v939 = vunpack.c.l.b16 %v804
      %v940 = vunpack.c.l.b16 %v805
      %v941 = vunpack.c.l.b16 %v806
      %v942 = vunpack.c.l.b16 %v807
      %v943 = vunpack.c.l.b16 %v808
      %v944 = vunpack.c.l.b16 %v809
      %v945 = vunpack.c.l.b16 %v810
      %v946 = vunpack.c.l.b16 %v811
      %v947 = vunpack.c.l.b16 %v812
      %v948 = vunpack.c.l.b16 %v813
      %v949 = vunpack.c.l.b16 %v814
      %v950 = vunpack.c.l.b16 %v815
      %v951 = vunpack.c.l.b16 %v816
      %v952 = vunpack.c.l.b16 %v817
      %v953 = vunpack.c.l.b16 %v818
      %v954 = vunpack.c.l.b16 %v819
      %v955 = vunpack.c.l.b16 %v820
      %v956 = vunpack.c.l.b16 %v821
      %v957 = vunpack.c.l.b16 %v822
      %v958 = vunpack.c.l.b16 %v823
      %v959 = vunpack.c.l.b16 %v824
      %v960 = vunpack.c.l.b16 %v825
      %v961 = vpack.c.b16 %v898, %v897
      %v962 = vpack.c.b16 %v900, %v899
      %v963 = vpack.c.b16 %v902, %v901
      %v964 = vpack.c.b16 %v904, %v903
      %v965 = vpack.c.b16 %v906, %v905
      %v966 = vpack.c.b16 %v908, %v907
      %v967 = vpack.c.b16 %v910, %v909
      %v968 = vpack.c.b16 %v912, %v911
      %v969 = vpack.c.b16 %v914, %v913
      %v970 = vpack.c.b16 %v916, %v915
      %v971 = vpack.c.b16 %v918, %v917
      %v972 = vpack.c.b16 %v920, %v919
      %v973 = vpack.c.b16 %v922, %v921
      %v974 = vpack.c.b16 %v924, %v923
      %v975 = vpack.c.b16 %v926, %v925
      %v976 = vpack.c.b16 %v928, %v927
      %v977 = vpack.c.b16 %v930, %v929
      %v978 = vpack.c.b16 %v932, %v931
      %v979 = vpack.c.b16 %v934, %v933
      %v980 = vpack.c.b16 %v936, %v935
      %v981 = vpack.c.b16 %v938, %v937
      %v982 = vpack.c.b16 %v940, %v939
      %v983 = vpack.c.b16 %v942, %v941
      %v984 = vpack.c.b16 %v944, %v943
      %v985 = vpack.c.b16 %v946, %v945
      %v986 = vpack.c.b16 %v948, %v947
      %v987 = vpack.c.b16 %v950, %v949
      %v988 = vpack.c.b16 %v952, %v951
      %v989 = vpack.c.b16 %v954, %v953
      %v990 = vpack.c.b16 %v956, %v955
      %v991 = vpack.c.b16 %v958, %v957
      %v992 = vpack.c.b16 %v960, %v959
      %1025 = vmatprep.subr.bf16.mxu0 0
      %1026 = vmatpush1.bf16.msra.mxu0 %v968
      %1027 = vmatprep.subr.bf16.mxu0 0
      %1028 = vmatpush1.bf16.msra.mxu0 %v967
      %1029 = vmatprep.subr.bf16.mxu0 0
      %1030 = vmatpush1.bf16.msra.mxu0 %v966
      %1031 = vmatprep.subr.bf16.mxu0 0
      %1032 = vmatpush1.bf16.msra.mxu0 %v965
      %1033 = vmatprep.subr.bf16.mxu0 0
      %1034 = vmatpush1.bf16.msra.mxu0 %v964
      %1035 = vmatprep.subr.bf16.mxu0 0
      %1036 = vmatpush1.bf16.msra.mxu0 %v963
      %1037 = vmatprep.subr.bf16.mxu0 0
      %1038 = vmatpush1.bf16.msra.mxu0 %v962
      %1039 = vmatprep.subr.bf16.mxu0 0
      %1040 = vmatpush1.bf16.msra.mxu0 %v961
      %1041 = vmatprep.subr.bf16.mxu0 0
      %1042 = vmatpush2.bf16.msra.mxu0 %v976
      %1043 = vmatprep.subr.bf16.mxu0 0
      %1044 = vmatpush2.bf16.msra.mxu0 %v975
      %1045 = vmatprep.subr.bf16.mxu0 0
      %1046 = vmatpush2.bf16.msra.mxu0 %v974
      %1047 = vmatprep.subr.bf16.mxu0 0
      %1048 = vmatpush2.bf16.msra.mxu0 %v973
      %1049 = vmatprep.subr.bf16.mxu0 0
      %1050 = vmatpush2.bf16.msra.mxu0 %v972
      %1051 = vmatprep.subr.bf16.mxu0 0
      %1052 = vmatpush2.bf16.msra.mxu0 %v971
      %1053 = vmatprep.subr.bf16.mxu0 0
      %1054 = vmatpush2.bf16.msra.mxu0 %v970
      %1055 = vmatprep.subr.bf16.mxu0 0
      %1056 = vmatpush2.bf16.msra.mxu0 %v969
      %1057 = vmatprep.mubr.bf16.mxu0 %v759
      %1058 = vmatmul.mubr.bf16.gmra.mxu0 %v758
      %v1059 = vpop.f32.mrf.mxu0
      %v1060 = vadd.f32 %v831, %v1059
      %v1061 = vpop.f32.mrf.mxu0
      %v1062 = vpop.f32.mrf.mxu0
      %v1063 = vadd.f32 %v831, %v1062
      %v1064 = vpop.f32.mrf.mxu0
      %1065 = vdwg.mxu0
      %1066 = vmatprep.subr.bf16.mxu0 0
      %1067 = vmatpush1.bf16.msra.mxu0 %v984
      %1068 = vmatprep.subr.bf16.mxu0 0
      %1069 = vmatpush1.bf16.msra.mxu0 %v983
      %1070 = vmatprep.subr.bf16.mxu0 0
      %1071 = vmatpush1.bf16.msra.mxu0 %v982
      %1072 = vmatprep.subr.bf16.mxu0 0
      %1073 = vmatpush1.bf16.msra.mxu0 %v981
      %1074 = vmatprep.subr.bf16.mxu0 0
      %1075 = vmatpush1.bf16.msra.mxu0 %v980
      %1076 = vmatprep.subr.bf16.mxu0 0
      %1077 = vmatpush1.bf16.msra.mxu0 %v979
      %1078 = vmatprep.subr.bf16.mxu0 0
      %1079 = vmatpush1.bf16.msra.mxu0 %v978
      %1080 = vmatprep.subr.bf16.mxu0 0
      %1081 = vmatpush1.bf16.msra.mxu0 %v977
      %1082 = vmatprep.subr.bf16.mxu0 0
      %1083 = vmatpush2.bf16.msra.mxu0 %v992
      %1084 = vmatprep.subr.bf16.mxu0 0
      %1085 = vmatpush2.bf16.msra.mxu0 %v991
      %1086 = vmatprep.subr.bf16.mxu0 0
      %1087 = vmatpush2.bf16.msra.mxu0 %v990
      %1088 = vmatprep.subr.bf16.mxu0 0
      %1089 = vmatpush2.bf16.msra.mxu0 %v989
      %1090 = vmatprep.subr.bf16.mxu0 0
      %1091 = vmatpush2.bf16.msra.mxu0 %v988
      %1092 = vmatprep.subr.bf16.mxu0 0
      %1093 = vmatpush2.bf16.msra.mxu0 %v987
      %1094 = vmatprep.subr.bf16.mxu0 0
      %1095 = vmatpush2.bf16.msra.mxu0 %v986
      %1096 = vmatprep.subr.bf16.mxu0 0
      %1097 = vmatpush2.bf16.msra.mxu0 %v985
      %1098 = vmatprep.mubr.bf16.mxu0 %v761
      %1099 = vmatmul.mubr.bf16.gmra.mxu0 %v760
      %v1100 = vpop.f32.mrf.mxu0
      %v1101 = vadd.f32 %v1060, %v1100
      %v1102 = vpop.f32.mrf.mxu0
      %v1103 = vpop.f32.mrf.mxu0
      %v1104 = vadd.f32 %v1063, %v1103
      %v1105 = vpop.f32.mrf.mxu0
      %1106 = vdwg.mxu0
      %v1107 = vadd.f32 %v407, %v1101
      %v1108 = vadd.f32 %v408, %v1104
      %v1109 = vpack.c.bf16 %v1108, %v1107
      %v1111 = vunpack.c.l.b16 %v1109
      %v1112 = vunpack.c.h.b16 %v1109
      %v1113 = vpack.c.b16 %v1111, %v1111
      %v1114 = vpack.c.b16 %v1112, %v1112
      %1117 = vst [vmem:[%s397] sm:$0xf] %v1113
      %1118 = vst [vmem:[%s397 + $0x4] sm:$0xf] %v1114
      %v1119 = vunpack.c.l.bf16 %v1109
      %v1120 = vunpack.c.h.bf16 %v1109
      %v1121 = vadd.f32 %v1119, %v1120
      %v1122 = vrot.slane %v1121, 4
      %v1123 = vadd.f32 %v1121, %v1122
      %v1124 = vrot.slane %v1123, 2
      %v1125 = vadd.f32 %v1123, %v1124
      %v1126 = vrot.slane %v1125, 1
      %v1127 = vadd.f32 %v1125, %v1126
      %1128 = vst [vmem:[%s400] sm:$0x1] %v1127
      %v1129 = vmul.f32 %v1119, %v1119
      %v1130 = vmul.f32 %v1120, %v1120
      %v1131 = vadd.f32 %v1129, %v1130
      %v1132 = vrot.slane %v1131, 4
      %v1133 = vadd.f32 %v1131, %v1132
      %v1134 = vrot.slane %v1133, 2
      %v1135 = vadd.f32 %v1133, %v1134
      %v1136 = vrot.slane %v1135, 1
      %v1137 = vadd.f32 %v1135, %v1136
      %1138 = vst [vmem:[%s403] sm:$0x1] %v1137
      %p1139 = scmp.lt.s32.totalorder %s23, 1
      %s1140 = scalar_select %p1139, %s23, 1
      %s1141 = smul.addr %s1140, 2
      %s1142 = smul.addr %s1141, 4
      %s1143 = scalar_lea.vmem %s9, %s1142
      %p1144 = scmp.lt.s32.totalorder %s23, 1
      %s1145 = scalar_select %p1144, %s23, 1
      %s1146 = scalar_lea.vmem %s10, %s1145
      %p1147 = scmp.lt.s32.totalorder %s23, 1
      %s1148 = scalar_select %p1147, %s23, 1
      %s1149 = scalar_lea.vmem %s11, %s1148
      // Predicated region
      $region57: #{t2v_decoder_layer.6} parent=55 // pred_check
        %p1150 = pneg %p235
      $region58: #{t2v_decoder_layer.6} parent=55 // pred_check_branch
        %1152 = sbr.rel (%p1150) target = $region60
      $region59: #{t2v_decoder_layer.6} parent=55 // pred_region
        _
      $region60: #{t2v_decoder_layer.6} parent=55 // pred_fallthru
        _
      // Predicated region
      $region61: #{t2v_decoder_layer.6} parent=55 // pred_check
        %p1153 = pneg %p261
      $region62: #{t2v_decoder_layer.6} parent=55 // pred_check_branch
        %1155 = sbr.rel (%p1153) target = $region64
      $region63: #{t2v_decoder_layer.6} parent=55 // pred_region
        _
      $region64: #{t2v_decoder_layer.6} parent=55 // pred_fallthru
        _
      // Predicated region
      $region65: #{t2v_decoder_layer.6} parent=55 // pred_check
        %p1156 = pneg %p287
      $region66: #{t2v_decoder_layer.6} parent=55 // pred_check_branch
        %1158 = sbr.rel (%p1156) target = $region68
      $region67: #{t2v_decoder_layer.6} parent=55 // pred_region
        _
      $region68: #{t2v_decoder_layer.6} parent=55 // pred_fallthru
        _
    $region56: #{t2v_decoder_layer.6} parent=5 // pred_fallthru
      _
    %p1159 = scmp.le.s32.totalorder 2, %s18
    // Predicated region
    $region69: #{t2v_decoder_layer.6} parent=5 // pred_check
      %p1160 = pneg %p1159
    $region70: #{t2v_decoder_layer.6} parent=5 // pred_check_branch
      %1162 = sbr.rel (%p1160) target = $region72
    $region71: #{t2v_decoder_layer.6} parent=5 // pred_region
      %s1163 = ssub.s32 %s18, 2
      // Predicated region
      $region73: #{t2v_decoder_layer.6} parent=71 // pred_check
        %p1164 = pneg %p241
      $region74: #{t2v_decoder_layer.6} parent=71 // pred_check_branch
        %1166 = sbr.rel (%p1164) target = $region76
      $region75: #{t2v_decoder_layer.6} parent=71 // pred_region
        %p1167 = scmp.lt.s32.totalorder %s24, 1
        %s1168 = scalar_select %p1167, %s24, 1
        %s1169 = smul.addr %s1168, 2
        %s1170 = smul.addr %s1169, 4
        %s1171 = scalar_lea.vmem %s9, %s1170
      $region76: #{t2v_decoder_layer.6} parent=71 // pred_fallthru
        _
      // Predicated region
      $region77: #{t2v_decoder_layer.6} parent=71 // pred_check
        %p1172 = pneg %p267
      $region78: #{t2v_decoder_layer.6} parent=71 // pred_check_branch
        %1174 = sbr.rel (%p1172) target = $region80
      $region79: #{t2v_decoder_layer.6} parent=71 // pred_region
        %p1175 = scmp.lt.s32.totalorder %s24, 1
        %s1176 = scalar_select %p1175, %s24, 1
        %s1177 = scalar_lea.vmem %s10, %s1176
      $region80: #{t2v_decoder_layer.6} parent=71 // pred_fallthru
        _
      // Predicated region
      $region81: #{t2v_decoder_layer.6} parent=71 // pred_check
        %p1178 = pneg %p293
      $region82: #{t2v_decoder_layer.6} parent=71 // pred_check_branch
        %1180 = sbr.rel (%p1178) target = $region84
      $region83: #{t2v_decoder_layer.6} parent=71 // pred_region
        %p1181 = scmp.lt.s32.totalorder %s24, 1
        %s1182 = scalar_select %p1181, %s24, 1
        %s1183 = scalar_lea.vmem %s11, %s1182
      $region84: #{t2v_decoder_layer.6} parent=71 // pred_fallthru
        _
    $region72: #{t2v_decoder_layer.6} parent=5 // pred_fallthru
      _
  $region6: #{t2v_decoder_layer.6} parent=0 // loop_footer
    %s22 = sadd.s32 1, %s18
  $region7: #{t2v_decoder_layer.6} parent=0 // loop_footer_branch
    %17 = sbr.rel target = $region3
  $region8: #{t2v_decoder_layer.6} parent=0 // loop_exit
    _

// kernel: t2v_decoder_layer.4
$region0: #{t2v_decoder_layer.4}
  #allocation0 [shape = 'u32[]', space=smem, size = 0x4, offset = 0x4, fixed_abs, tag = 'smem constant byte address 0x4 - core index']
  #allocation1 [shape = 'u32[144,128]{1,0:T(1,128)}', space=vmem, size = 0x12000, scoped, tag = 'internal scratch']
  %s0 = inlined_call_operand.hbm [shape: f32[2,16,128], index: 0, kind: input, shape index: {}]
  %s1 = inlined_call_operand.hbm [shape: bf16[128,384], index: 1, kind: input, shape index: {}]
  %s2 = inlined_call_operand.vmem [shape: f32[1,384], index: 2, kind: input, shape index: {}]
  %s3 = inlined_call_operand.hbm [shape: bf16[128,128], index: 3, kind: input, shape index: {}]
  %s4 = inlined_call_operand.vmem [shape: f32[1,128], index: 4, kind: input, shape index: {}]
  %s5 = inlined_call_operand.vmem [shape: bf16[2,16,128], index: 5, kind: output, shape index: {0}]
  %s6 = inlined_call_operand.vmem [shape: f32[2,1,128], index: 6, kind: output, shape index: {1}]
  %s7 = inlined_call_operand.vmem [shape: f32[2,1,128], index: 7, kind: output, shape index: {2}]
  %8 = xla_tuple %s5, %s6, %s7
  %s9 = sld [smem:[#allocation0]]
  $region81: #{t2v_decoder_layer.4} parent=0
    _
  %s11 = ssub.s32 1, %s9
  %s12 = scalar_select 0, %s11, %s9
  $region1: #{t2v_decoder_layer.4} parent=0
    #allocation2 [shape = 'u8[16384]{0}', space=vmem, size = 0x4000, scoped, tag = 'input window, operand 0']
    #allocation3 [shape = 's32[2]{0}', space=sflag, size = 0x8, scoped, tag = 'scoped memory for t2v_decoder_layer.4']
    #allocation4 [shape = 'u8[98304]{0}', space=vmem, size = 0x18000, scoped, tag = 'input window, operand 1, single buffered']
    #allocation5 [shape = 's32[1]{0}', space=sflag, size = 0x4, scoped, tag = 'scoped memory for t2v_decoder_layer.4']
    #allocation6 [shape = 'u8[32768]{0}', space=vmem, size = 0x8000, scoped, tag = 'input window, operand 3, single buffered']
    %13 = vsyncpa [#allocation3], 0
    %s14 = scalar_lea.sflag [#allocation3], 1
    %15 = vsyncpa %s14, 0
    %16 = vsyncpa [#allocation5], 0
    loop: start=0, step=1, limit=4
    $region2: #{t2v_decoder_layer.4} parent=1 // loop_pre_header
      _
    $region3: #{t2v_decoder_layer.4} parent=1 // loop_header
      %s18 = sphi 0, %s22
      %p19 = scmp.ge.s32.totalorder %s18, 4
      %s28 = sphi 0, %s30
      %s31 = sphi 0, %s28
      %s32 = sphi 0, %s31
      %s48 = sphi 0, %s32
      %s52 = sphi 0, %s52
      %s54 = sphi 0, %s52
      %s55 = sphi 0, %s54
      %s69 = sphi 0, %s55
      %s73 = sphi 0, %s73
      %s75 = sphi 0, %s73
      %s76 = sphi 0, %s75
      %s90 = sphi 0, %s76
      %s94 = sphi 0, %s94
      %s96 = sphi 0, %s94
      %s97 = sphi 0, %s96
      %s111 = sphi 0, %s97
      %s115 = sphi 0, %s115
      %s117 = sphi 0, %s115
      %s118 = sphi 0, %s117
      %s132 = sphi 0, %s118
      %s138 = sphi 0, %s140
      %s141 = sphi 0, %s138
      %s142 = sphi 0, %s141
      %s158 = sphi 0, %s142
      %s164 = sphi 0, %s166
      %s167 = sphi 0, %s164
      %s168 = sphi 0, %s167
      %s184 = sphi 0, %s168
      %s190 = sphi 0, %s192
      %s193 = sphi 0, %s190
      %s194 = sphi 0, %s193
      %s210 = sphi 0, %s194
    $region4: #{t2v_decoder_layer.4} parent=1 // loop_header_branch
      %21 = sbr.rel (%p19) target = $region8
    $region5: #{t2v_decoder_layer.4} parent=1 // loop_body
      %s23 = ssub.s32 %s18, 1
      %s24 = ssub.s32 %s18, 2
      %s25 = sadd.s32 %s18, 1
      %s26 = ssub.s32 %s18, %s25
      %p27 = scmp.eq.s32.totalorder %s26, 0
      %s29 = sadd.s32 %s28, 1
      %s30 = scalar_select %p27, %s28, %s29
      %p33 = pneg %p27
      %p34 = scmp.eq.s32.totalorder %s18, 1
      %p35 = por %p33, %p34
      %p36 = scmp.ne.s32.totalorder %s28, %s31
      %p37 = scmp.eq.s32.totalorder %s18, 0
      %p38 = por %p36, %p37
      %p39 = scmp.ne.s32.totalorder %s28, %s31
      %p40 = scmp.eq.s32.totalorder %s23, 1
      %p41 = por %p39, %p40
      %p42 = scmp.ne.s32.totalorder %s31, %s32
      %p43 = scmp.eq.s32.totalorder %s23, 0
      %p44 = por %p42, %p43
      %p45 = scmp.ne.s32.totalorder %s31, %s32
      %p46 = scmp.eq.s32.totalorder %s24, 1
      %p47 = por %p45, %p46
      %p49 = scmp.ne.s32.totalorder %s32, %s48
      %p50 = scmp.eq.s32.totalorder %s24, 0
      %p51 = por %p49, %p50
      %s53 = sadd.s32 %s52, 1
      %p56 = scmp.eq.s32.totalorder %s18, 1
      %p57 = scmp.ne.s32.totalorder %s52, %s54
      %p58 = scmp.eq.s32.totalorder %s18, 0
      %p59 = por %p57, %p58
      %p60 = scmp.ne.s32.totalorder %s52, %s54
      %p61 = scmp.eq.s32.totalorder %s23, 1
      %p62 = por %p60, %p61
      %p63 = scmp.ne.s32.totalorder %s54, %s55
      %p64 = scmp.eq.s32.totalorder %s23, 0
      %p65 = por %p63, %p64
      %p66 = scmp.ne.s32.totalorder %s54, %s55
      %p67 = scmp.eq.s32.totalorder %s24, 1
      %p68 = por %p66, %p67
      %p70 = scmp.ne.s32.totalorder %s55, %s69
      %p71 = scmp.eq.s32.totalorder %s24, 0
      %p72 = por %p70, %p71
      %s74 = sadd.s32 %s73, 1
      %p77 = scmp.eq.s32.totalorder %s18, 1
      %p78 = scmp.ne.s32.totalorder %s73, %s75
      %p79 = scmp.eq.s32.totalorder %s18, 0
      %p80 = por %p78, %p79
      %p81 = scmp.ne.s32.totalorder %s73, %s75
      %p82 = scmp.eq.s32.totalorder %s23, 1
      %p83 = por %p81, %p82
      %p84 = scmp.ne.s32.totalorder %s75, %s76
      %p85 = scmp.eq.s32.totalorder %s23, 0
      %p86 = por %p84, %p85
      %p87 = scmp.ne.s32.totalorder %s75, %s76
      %p88 = scmp.eq.s32.totalorder %s24, 1
      %p89 = por %p87, %p88
      %p91 = scmp.ne.s32.totalorder %s76, %s90
      %p92 = scmp.eq.s32.totalorder %s24, 0
      %p93 = por %p91, %p92
      %s95 = sadd.s32 %s94, 1
      %p98 = scmp.eq.s32.totalorder %s18, 1
      %p99 = scmp.ne.s32.totalorder %s94, %s96
      %p100 = scmp.eq.s32.totalorder %s18, 0
      %p101 = por %p99, %p100
      %p102 = scmp.ne.s32.totalorder %s94, %s96
      %p103 = scmp.eq.s32.totalorder %s23, 1
      %p104 = por %p102, %p103
      %p105 = scmp.ne.s32.totalorder %s96, %s97
      %p106 = scmp.eq.s32.totalorder %s23, 0
      %p107 = por %p105, %p106
      %p108 = scmp.ne.s32.totalorder %s96, %s97
      %p109 = scmp.eq.s32.totalorder %s24, 1
      %p110 = por %p108, %p109
      %p112 = scmp.ne.s32.totalorder %s97, %s111
      %p113 = scmp.eq.s32.totalorder %s24, 0
      %p114 = por %p112, %p113
      %s116 = sadd.s32 %s115, 1
      %p119 = scmp.eq.s32.totalorder %s18, 1
      %p120 = scmp.ne.s32.totalorder %s115, %s117
      %p121 = scmp.eq.s32.totalorder %s18, 0
      %p122 = por %p120, %p121
      %p123 = scmp.ne.s32.totalorder %s115, %s117
      %p124 = scmp.eq.s32.totalorder %s23, 1
      %p125 = por %p123, %p124
      %p126 = scmp.ne.s32.totalorder %s117, %s118
      %p127 = scmp.eq.s32.totalorder %s23, 0
      %p128 = por %p126, %p127
      %p129 = scmp.ne.s32.totalorder %s117, %s118
      %p130 = scmp.eq.s32.totalorder %s24, 1
      %p131 = por %p129, %p130
      %p133 = scmp.ne.s32.totalorder %s118, %s132
      %p134 = scmp.eq.s32.totalorder %s24, 0
      %p135 = por %p133, %p134
      %s136 = ssub.s32 %s18, %s25
      %p137 = scmp.eq.s32.totalorder %s136, 0
      %s139 = sadd.s32 %s138, 1
      %s140 = scalar_select %p137, %s138, %s139
      %p143 = pneg %p137
      %p144 = scmp.eq.s32.totalorder %s18, 1
      %p145 = por %p143, %p144
      %p146 = scmp.ne.s32.totalorder %s138, %s141
      %p147 = scmp.eq.s32.totalorder %s18, 0
      %p148 = por %p146, %p147
      %p149 = scmp.ne.s32.totalorder %s138, %s141
      %p150 = scmp.eq.s32.totalorder %s23, 1
      %p151 = por %p149, %p150
      %p152 = scmp.ne.s32.totalorder %s141, %s142
      %p153 = scmp.eq.s32.totalorder %s23, 0
      %p154 = por %p152, %p153
      %p155 = scmp.ne.s32.totalorder %s141, %s142
      %p156 = scmp.eq.s32.totalorder %s24, 1
      %p157 = por %p155, %p156
      %p159 = scmp.ne.s32.totalorder %s142, %s158
      %p160 = scmp.eq.s32.totalorder %s24, 0
      %p161 = por %p159, %p160
      %s162 = ssub.s32 %s18, %s25
      %p163 = scmp.eq.s32.totalorder %s162, 0
      %s165 = sadd.s32 %s164, 1
      %s166 = scalar_select %p163, %s164, %s165
      %p169 = pneg %p163
      %p170 = scmp.eq.s32.totalorder %s18, 1
      %p171 = por %p169, %p170
      %p172 = scmp.ne.s32.totalorder %s164, %s167
      %p173 = scmp.eq.s32.totalorder %s18, 0
      %p174 = por %p172, %p173
      %p175 = scmp.ne.s32.totalorder %s164, %s167
      %p176 = scmp.eq.s32.totalorder %s23, 1
      %p177 = por %p175, %p176
      %p178 = scmp.ne.s32.totalorder %s167, %s168
      %p179 = scmp.eq.s32.totalorder %s23, 0
      %p180 = por %p178, %p179
      %p181 = scmp.ne.s32.totalorder %s167, %s168
      %p182 = scmp.eq.s32.totalorder %s24, 1
      %p183 = por %p181, %p182
      %p185 = scmp.ne.s32.totalorder %s168, %s184
      %p186 = scmp.eq.s32.totalorder %s24, 0
      %p187 = por %p185, %p186
      %s188 = ssub.s32 %s18, %s25
      %p189 = scmp.eq.s32.totalorder %s188, 0
      %s191 = sadd.s32 %s190, 1
      %s192 = scalar_select %p189, %s190, %s191
      %p195 = pneg %p189
      %p196 = scmp.eq.s32.totalorder %s18, 1
      %p197 = por %p195, %p196
      %p198 = scmp.ne.s32.totalorder %s190, %s193
      %p199 = scmp.eq.s32.totalorder %s18, 0
      %p200 = por %p198, %p199
      %p201 = scmp.ne.s32.totalorder %s190, %s193
      %p202 = scmp.eq.s32.totalorder %s23, 1
      %p203 = por %p201, %p202
      %p204 = scmp.ne.s32.totalorder %s193, %s194
      %p205 = scmp.eq.s32.totalorder %s23, 0
      %p206 = por %p204, %p205
      %p207 = scmp.ne.s32.totalorder %s193, %s194
      %p208 = scmp.eq.s32.totalorder %s24, 1
      %p209 = por %p207, %p208
      %p211 = scmp.ne.s32.totalorder %s194, %s210
      %p212 = scmp.eq.s32.totalorder %s24, 0
      %p213 = por %p211, %p212
      %p214 = scmp.le.s32.totalorder 1, %s18
      %p215 = scmp.lt.s32.totalorder %s18, 3
      %p216 = pnand %p214, %p215
      %p217 = pneg %p216
      // Predicated region
      $region9: #{t2v_decoder_layer.4} parent=5 // pred_check
        _
      $region10: #{t2v_decoder_layer.4} parent=5 // pred_check_branch
        %219 = sbr.rel (%p216) target = $region12
      $region11: #{t2v_decoder_layer.4} parent=5 // pred_region
        %s220 = ssub.s32 %s18, 1
        // Predicated region
        $region13: #{t2v_decoder_layer.4} parent=11 // pred_check
          %p221 = pneg %p65
        $region14: #{t2v_decoder_layer.4} parent=11 // pred_check_branch
          %223 = sbr.rel (%p221) target = $region16
        $region15: #{t2v_decoder_layer.4} parent=11 // pred_region
          %s225 = ssub.s32 3072, 3072
          %226 = vsyncadd [#allocation5], %s225
          %s227 = sshll.u32 [#allocation4], 4
          %s228 = int_to_ptr.vmem [resolvable:$true] %s227
          %233 = dma.hbm_to_vmem [thread:$0]  %s1, 3072, %s228, [#allocation5], 192, 192, 12
        $region16: #{t2v_decoder_layer.4} parent=11 // pred_fallthru
          _
        // Predicated region
        $region17: #{t2v_decoder_layer.4} parent=11 // pred_check
          %p234 = pneg %p86
        $region18: #{t2v_decoder_layer.4} parent=11 // pred_check_branch
          %236 = sbr.rel (%p234) target = $region20
        $region19: #{t2v_decoder_layer.4} parent=11 // pred_region
          _
        $region20: #{t2v_decoder_layer.4} parent=11 // pred_fallthru
          _
        // Predicated region
        $region21: #{t2v_decoder_layer.4} parent=11 // pred_check
          %p237 = pneg %p107
        $region22: #{t2v_decoder_layer.4} parent=11 // pred_check_branch
          %239 = sbr.rel (%p237) target = $region24
        $region23: #{t2v_decoder_layer.4} parent=11 // pred_region
          %s241 = ssub.s32 1024, 1024
          %242 = vsyncadd [#allocation5], %s241
          %s243 = sshll.u32 [#allocation6], 4
          %s244 = int_to_ptr.vmem [resolvable:$true] %s243
          %249 = dma.hbm_to_vmem [thread:$0]  %s3, 1024, %s244, [#allocation5], 64, 64, 4
        $region24: #{t2v_decoder_layer.4} parent=11 // pred_fallthru
          _
        // Predicated region
        $region25: #{t2v_decoder_layer.4} parent=11 // pred_check
          %p250 = pneg %p128
        $region26: #{t2v_decoder_layer.4} parent=11 // pred_check_branch
          %252 = sbr.rel (%p250) target = $region28
        $region27: #{t2v_decoder_layer.4} parent=11 // pred_region
          _
        $region28: #{t2v_decoder_layer.4} parent=11 // pred_fallthru
          _
      $region12: #{t2v_decoder_layer.4} parent=5 // pred_fallthru
        _
      %p253 = scmp.lt.s32.totalorder %s18, 2
      // Predicated region
      $region29: #{t2v_decoder_layer.4} parent=5 // pred_check
        %p254 = pneg %p253
      $region30: #{t2v_decoder_layer.4} parent=5 // pred_check_branch
        %256 = sbr.rel (%p254) target = $region32
      $region31: #{t2v_decoder_layer.4} parent=5 // pred_region
        // Predicated region
        $region33: #{t2v_decoder_layer.4} parent=31 // pred_check
          %p257 = pneg %p38
        $region34: #{t2v_decoder_layer.4} parent=31 // pred_check_branch
          %259 = sbr.rel (%p257) target = $region36
        $region35: #{t2v_decoder_layer.4} parent=31 // pred_region
          %s260 = sand.u32 %s28, 1
          %s261 = scalar_lea.sflag [#allocation3], %s260
          %s262 = sand.u32 %s28, 1
          %s263 = smul.addr %s262, 16
          %s264 = scalar_lea.vmem [#allocation2], %s263
          %s266 = ssub.s32 256, 256
          %267 = vsyncadd %s261, %s266
          %s268 = smul.addr %s18, 2
          %s269 = smul.addr %s268, 128
          %s270 = scalar_lea.hbm %s0, %s269
          %s271 = sshll.u32 %s264, 4
          %s272 = int_to_ptr.vmem [resolvable:$true] %s271
          %277 = dma.hbm_to_vmem [thread:$0]  %s270, 256, %s272, %s261, 128, 128, 8
        $region36: #{t2v_decoder_layer.4} parent=31 // pred_fallthru
          _
      $region32: #{t2v_decoder_layer.4} parent=5 // pred_fallthru
        _
      %p278 = scmp.le.s32.totalorder 1, %s18
      %p279 = scmp.lt.s32.totalorder %s18, 3
      %p280 = pnand %p278, %p279
      %p281 = pneg %p280
      // Predicated region
      $region37: #{t2v_decoder_layer.4} parent=5 // pred_check
        _
      $region38: #{t2v_decoder_layer.4} parent=5 // pred_check_branch
        %283 = sbr.rel (%p280) target = $region40
      $region39: #{t2v_decoder_layer.4} parent=5 // pred_region
        %s284 = ssub.s32 %s18, 1
        %s285 = sand.u32 %s31, 1
        %s286 = scalar_lea.sflag [#allocation3], %s285
        %s287 = sand.u32 %s31, 1
        %s288 = smul.addr %s287, 16
        %s289 = scalar_lea.vmem [#allocation2], %s288
        // Predicated region
        $region41: #{t2v_decoder_layer.4} parent=39 // pred_check
          %p290 = pneg %p44
        $region42: #{t2v_decoder_layer.4} parent=39 // pred_check_branch
          %292 = sbr.rel (%p290) target = $region44
        $region43: #{t2v_decoder_layer.4} parent=39 // pred_region
          %293 = dma.done %s286, 256
        $region44: #{t2v_decoder_layer.4} parent=39 // pred_fallthru
          _
        // Predicated region
        $region45: #{t2v_decoder_layer.4} parent=39 // pred_check
          %p294 = pneg %p65
        $region46: #{t2v_decoder_layer.4} parent=39 // pred_check_branch
          %296 = sbr.rel (%p294) target = $region48
        $region47: #{t2v_decoder_layer.4} parent=39 // pred_region
          %297 = dma.done [#allocation5], 3072
        $region48: #{t2v_decoder_layer.4} parent=39 // pred_fallthru
          _
        // Predicated region
        $region49: #{t2v_decoder_layer.4} parent=39 // pred_check
          %p298 = pneg %p107
        $region50: #{t2v_decoder_layer.4} parent=39 // pred_check_branch
          %300 = sbr.rel (%p298) target = $region52
        $region51: #{t2v_decoder_layer.4} parent=39 // pred_region
          %301 = dma.done [#allocation5], 1024
        $region52: #{t2v_decoder_layer.4} parent=39 // pred_fallthru
          _
        %s302 = sand.u32 %s31, 1
        %s303 = scalar_lea.sflag [#allocation3], %s302
        %s304 = sand.u32 %s31, 1
        %s305 = smul.addr %s304, 16
        %s306 = scalar_lea.vmem [#allocation2], %s305
        %p307 = pneg %p44
        %p308 = pneg %p41
        %p309 = pneg %p65
        %p310 = pneg %p62
        %p311 = pneg %p86
        %p312 = pneg %p83
        %p313 = pneg %p107
        %p314 = pneg %p104
        %p315 = pneg %p128
        %p316 = pneg %p125
        %p317 = pneg %p154
        %p318 = pneg %p151
        %p319 = scmp.lt.s32.totalorder %s23, 1
        %s320 = scalar_select %p319, %s23, 1
        %s321 = smul.addr %s320, 2
        %s322 = smul.addr %s321, 4
        %s323 = scalar_lea.vmem %s5, %s322
        %p324 = pneg %p180
        %p325 = pneg %p177
        %p326 = scmp.lt.s32.totalorder %s23, 1
        %s327 = scalar_select %p326, %s23, 1
        %s328 = scalar_lea.vmem %s6, %s327
        %p329 = pneg %p206
        %p330 = pneg %p203
        %p331 = scmp.lt.s32.totalorder %s23, 1
        %s332 = scalar_select %p331, %s23, 1
        %s333 = scalar_lea.vmem %s7, %s332
        %p334 = scmp.lt.s32.totalorder %s23, 1
        %s335 = scalar_select %p334, %s23, 1
        %s336 = smul.addr %s335, 2
        %s337 = smul.addr %s336, 4
        %s338 = scalar_lea.vmem %s5, %s337
        %p339 = scmp.lt.s32.totalorder %s23, 1
        %s340 = scalar_select %p339, %s23, 1
        %s341 = scalar_lea.vmem %s6, %s340
        %p342 = scmp.lt.s32.totalorder %s23, 1
        %s343 = scalar_select %p342, %s23, 1
        %s344 = scalar_lea.vmem %s7, %s343
        %v346 = vld [vmem:[%s289] sm:$0xff]
        %v347 = vld [vmem:[%s289 + $0x8] sm:$0xff]
        %v348 = vpack.c.bf16 %v347, %v346
        %v349 = vld [vmem:[#allocation4] sm:$0xff]
        %v350 = vld [vmem:[#allocation4 + $0x8] sm:$0xf]
        %v351 = vld [vmem:[#allocation4 + $0xc] sm:$0xff]
        %v352 = vld [vmem:[#allocation4 + $0x14] sm:$0xf]
        %v353 = vld [vmem:[#allocation4 + $0x18] sm:$0xff]
        %v354 = vld [vmem:[#allocation4 + $0x20] sm:$0xf]
        %v355 = vld [vmem:[#allocation4 + $0x24] sm:$0xff]
        %v356 = vld [vmem:[#allocation4 + $0x2c] sm:$0xf]
        %v357 = vld [vmem:[#allocation4 + $0x30] sm:$0xff]
        %v358 = vld [vmem:[#allocation4 + $0x38] sm:$0xf]
        %v359 = vld [vmem:[#allocation4 + $0x3c] sm:$0xff]
        %v360 = vld [vmem:[#allocation4 + $0x44] sm:$0xf]
        %v361 = vld [vmem:[#allocation4 + $0x48] sm:$0xff]
        %v362 = vld [vmem:[#allocation4 + $0x50] sm:$0xf]
        %v363 = vld [vmem:[#allocation4 + $0x54] sm:$0xff]
        %v364 = vld [vmem:[#allocation4 + $0x5c] sm:$0xf]
        %v365 = vld [vmem:[#allocation4 + $0x60] sm:$0xff]
        %v366 = vld [vmem:[#allocation4 + $0x68] sm:$0xf]
        %v367 = vld [vmem:[#allocation4 + $0x6c] sm:$0xff]
        %v368 = vld [vmem:[#allocation4 + $0x74] sm:$0xf]
        %v369 = vld [vmem:[#allocation4 + $0x78] sm:$0xff]
        %v370 = vld [vmem:[#allocation4 + $0x80] sm:$0xf]
        %v371 = vld [vmem:[#allocation4 + $0x84] sm:$0xff]
        %v372 = vld [vmem:[#allocation4 + $0x8c] sm:$0xf]
        %v373 = vld [vmem:[#allocation4 + $0x90] sm:$0xff]
        %v374 = vld [vmem:[#allocation4 + $0x98] sm:$0xf]
        %v375 = vld [vmem:[#allocation4 + $0x9c] sm:$0xff]
        %v376 = vld [vmem:[#allocation4 + $0xa4] sm:$0xf]
        %v377 = vld [vmem:[#allocation4 + $0xa8] sm:$0xff]
        %v378 = vld [vmem:[#allocation4 + $0xb0] sm:$0xf]
        %v379 = vld [vmem:[#allocation4 + $0xb4] sm:$0xff]
        %v380 = vld [vmem:[#allocation4 + $0xbc] sm:$0xf]
        %v381 = vld [vmem:[%s2] sm:$0x7]
        %v383 = vlaneseq
        %v384 = vshrl.u32 %v383, 7
        %v385 = vsub.s32 0, %v384
        %v386 = vrot.slane %v381, %v385
        %v387 = vlaneseq
        %v388 = vshrl.u32 %v387, 7
        %v389 = vsub.s32 1, %v388
        %v390 = vrot.slane %v381, %v389
        %v391 = vlaneseq
        %v392 = vshrl.u32 %v391, 7
        %v393 = vsub.s32 2, %v392
        %v394 = vrot.slane %v381, %v393
        %v430 = vunpack.c.l.b16 %v349
        %v431 = vunpack.c.h.b16 %v349
        %v432 = vunpack.c.l.b16 %v350
        %v433 = vunpack.c.l.b16 %v351
        %v434 = vunpack.c.h.b16 %v351
        %v435 = vunpack.c.l.b16 %v352
        %v436 = vunpack.c.l.b16 %v353
        %v437 = vunpack.c.h.b16 %v353
        %v438 = vunpack.c.l.b16 %v354
        %v439 = vunpack.c.l.b16 %v355
        %v440 = vunpack.c.h.b16 %v355
        %v441 = vunpack.c.l.b16 %v356
        %v442 = vunpack.c.l.b16 %v357
        %v443 = vunpack.c.h.b16 %v357
        %v444 = vunpack.c.l.b16 %v358
        %v445 = vunpack.c.l.b16 %v359
        %v446 = vunpack.c.h.b16 %v359
        %v447 = vunpack.c.l.b16 %v360
        %v448 = vunpack.c.l.b16 %v361
        %v449 = vunpack.c.h.b16 %v361
        %v450 = vunpack.c.l.b16 %v362
        %v451 = vunpack.c.l.b16 %v363
        %v452 = vunpack.c.h.b16 %v363
        %v453 = vunpack.c.l.b16 %v364
        %v454 = vunpack.c.l.b16 %v365
        %v455 = vunpack.c.h.b16 %v365
        %v456 = vunpack.c.l.b16 %v366
        %v457 = vunpack.c.l.b16 %v367
        %v458 = vunpack.c.h.b16 %v367
        %v459 = vunpack.c.l.b16 %v368
        %v460 = vunpack.c.l.b16 %v369
        %v461 = vunpack.c.h.b16 %v369
        %v462 = vunpack.c.l.b16 %v370
        %v463 = vunpack.c.l.b16 %v371
        %v464 = vunpack.c.h.b16 %v371
        %v465 = vunpack.c.l.b16 %v372
        %v466 = vunpack.c.l.b16 %v373
        %v467 = vunpack.c.h.b16 %v373
        %v468 = vunpack.c.l.b16 %v374
        %v469 = vunpack.c.l.b16 %v375
        %v470 = vunpack.c.h.b16 %v375
        %v471 = vunpack.c.l.b16 %v376
        %v472 = vunpack.c.l.b16 %v377
        %v473 = vunpack.c.h.b16 %v377
        %v474 = vunpack.c.l.b16 %v378
        %v475 = vunpack.c.l.b16 %v379
        %v476 = vunpack.c.h.b16 %v379
        %v477 = vunpack.c.l.b16 %v380
        %v478 = vpack.c.b16 %v433, %v430
        %v479 = vpack.c.b16 %v434, %v431
        %v480 = vpack.c.b16 %v435, %v432
        %v481 = vpack.c.b16 %v439, %v436
        %v482 = vpack.c.b16 %v440, %v437
        %v483 = vpack.c.b16 %v441, %v438
        %v484 = vpack.c.b16 %v445, %v442
        %v485 = vpack.c.b16 %v446, %v443
        %v486 = vpack.c.b16 %v447, %v444
        %v487 = vpack.c.b16 %v451, %v448
        %v488 = vpack.c.b16 %v452, %v449
        %v489 = vpack.c.b16 %v453, %v450
        %v490 = vpack.c.b16 %v457, %v454
        %v491 = vpack.c.b16 %v458, %v455
        %v492 = vpack.c.b16 %v459, %v456
        %v493 = vpack.c.b16 %v463, %v460
        %v494 = vpack.c.b16 %v464, %v461
        %v495 = vpack.c.b16 %v465, %v462
        %v496 = vpack.c.b16 %v469, %v466
        %v497 = vpack.c.b16 %v470, %v467
        %v498 = vpack.c.b16 %v471, %v468
        %v499 = vpack.c.b16 %v475, %v472
        %v500 = vpack.c.b16 %v476, %v473
        %v501 = vpack.c.b16 %v477, %v474
        %526 = vmatprep.subr.bf16.mxu0 %v500
        %527 = vmatpush1.bf16.msra.mxu0 %v499
        %528 = vmatprep.subr.bf16.mxu0 %v497
        %529 = vmatpush1.bf16.msra.mxu0 %v496
        %530 = vmatprep.subr.bf16.mxu0 %v494
        %531 = vmatpush1.bf16.msra.mxu0 %v493
        %532 = vmatprep.subr.bf16.mxu0 %v491
        %533 = vmatpush1.bf16.msra.mxu0 %v490
        %534 = vmatprep.subr.bf16.mxu0 %v488
        %535 = vmatpush1.bf16.msra.mxu0 %v487
        %536 = vmatprep.subr.bf16.mxu0 %v485
        %537 = vmatpush1.bf16.msra.mxu0 %v484
        %538 = vmatprep.subr.bf16.mxu0 %v482
        %539 = vmatpush1.bf16.msra.mxu0 %v481
        %540 = vmatprep.subr.bf16.mxu0 %v479
        %541 = vmatpush1.bf16.msra.mxu0 %v478
        %542 = vmatprep.subr.bf16.mxu0 0
        %543 = vmatpush2.bf16.msra.mxu0 0
        %544 = vmatprep.subr.bf16.mxu0 0
        %545 = vmatpush2.bf16.msra.mxu0 0
        %546 = vmatprep.subr.bf16.mxu0 0
        %547 = vmatpush2.bf16.msra.mxu0 0
        %548 = vmatprep.subr.bf16.mxu0 0
        %549 = vmatpush2.bf16.msra.mxu0 0
        %550 = vmatprep.subr.bf16.mxu0 0
        %551 = vmatpush2.bf16.msra.mxu0 0
        %552 = vmatprep.subr.bf16.mxu0 0
        %553 = vmatpush2.bf16.msra.mxu0 0
        %554 = vmatprep.subr.bf16.mxu0 0
        %555 = vmatpush2.bf16.msra.mxu0 0
        %556 = vmatprep.subr.bf16.mxu0 0
        %557 = vmatpush2.bf16.msra.mxu0 0
        %558 = vmatprep.mubr.bf16.mxu0 0
        %559 = vmatmul.mubr.bf16.gmra.mxu0 %v348
        %v560 = vpop.f32.mrf.mxu0
        %v561 = vadd.f32 %v386, %v560
        %v562 = vpop.f32.mrf.mxu0
        %v563 = vadd.f32 %v390, %v562
        %v564 = vpop.f32.mrf.mxu0
        %v565 = vadd.f32 %v386, %v564
        %v566 = vpop.f32.mrf.mxu0
        %v567 = vadd.f32 %v390, %v566
        %568 = vdwg.mxu0
        %569 = vmatprep.subr.bf16.mxu0 0
        %570 = vmatpush1.bf16.msra.mxu0 %v501
        %571 = vmatprep.subr.bf16.mxu0 0
        %572 = vmatpush1.bf16.msra.mxu0 %v498
        %573 = vmatprep.subr.bf16.mxu0 0
        %574 = vmatpush1.bf16.msra.mxu0 %v495
        %575 = vmatprep.subr.bf16.mxu0 0
        %576 = vmatpush1.bf16.msra.mxu0 %v492
        %577 = vmatprep.subr.bf16.mxu0 0
        %578 = vmatpush1.bf16.msra.mxu0 %v489
        %579 = vmatprep.subr.bf16.mxu0 0
        %580 = vmatpush1.bf16.msra.mxu0 %v486
        %581 = vmatprep.subr.bf16.mxu0 0
        %582 = vmatpush1.bf16.msra.mxu0 %v483
        %583 = vmatprep.subr.bf16.mxu0 0
        %584 = vmatpush1.bf16.msra.mxu0 %v480
        %585 = vmatprep.subr.bf16.mxu0 0
        %586 = vmatpush2.bf16.msra.mxu0 0
        %587 = vmatprep.subr.bf16.mxu0 0
        %588 = vmatpush2.bf16.msra.mxu0 0
        %589 = vmatprep.subr.bf16.mxu0 0
        %590 = vmatpush2.bf16.msra.mxu0 0
        %591 = vmatprep.subr.bf16.mxu0 0
        %592 = vmatpush2.bf16.msra.mxu0 0
        %593 = vmatprep.subr.bf16.mxu0 0
        %594 = vmatpush2.bf16.msra.mxu0 0
        %595 = vmatprep.subr.bf16.mxu0 0
        %596 = vmatpush2.bf16.msra.mxu0 0
        %597 = vmatprep.subr.bf16.mxu0 0
        %598 = vmatpush2.bf16.msra.mxu0 0
        %599 = vmatprep.subr.bf16.mxu0 0
        %600 = vmatpush2.bf16.msra.mxu0 0
        %601 = vmatprep.mubr.bf16.mxu0 0
        %602 = vmatmul.mubr.bf16.gmra.mxu0 %v348
        %v603 = vpop.f32.mrf.mxu0
        %v604 = vadd.f32 %v394, %v603
        %v605 = vpop.f32.mrf.mxu0
        %v606 = vpop.f32.mrf.mxu0
        %v607 = vadd.f32 %v394, %v606
        %v608 = vpop.f32.mrf.mxu0
        %609 = vdwg.mxu0
        %v610 = vpack.c.bf16 %v565, %v561
        %v611 = vpack.c.bf16 %v567, %v563
        %v612 = vpack.c.bf16 %v607, %v604
        %v613 = vld [vmem:[#allocation6] sm:$0xf]
        %v614 = vld [vmem:[#allocation6 + $0x4] sm:$0xf]
        %v615 = vld [vmem:[#allocation6 + $0x8] sm:$0xf]
        %v616 = vld [vmem:[#allocation6 + $0xc] sm:$0xf]
        %v617 = vld [vmem:[#allocation6 + $0x10] sm:$0xf]
        %v618 = vld [vmem:[#allocation6 + $0x14] sm:$0xf]
        %v619 = vld [vmem:[#allocation6 + $0x18] sm:$0xf]
        %v620 = vld [vmem:[#allocation6 + $0x1c] sm:$0xf]
        %v621 = vld [vmem:[#allocation6 + $0x20] sm:$0xf]
        %v622 = vld [vmem:[#allocation6 + $0x24] sm:$0xf]
        %v623 = vld [vmem:[#allocation6 + $0x28] sm:$0xf]
        %v624 = vld [vmem:[#allocation6 + $0x2c] sm:$0xf]
        %v625 = vld [vmem:[#allocation6 + $0x30] sm:$0xf]
        %v626 = vld [vmem:[#allocation6 + $0x34] sm:$0xf]
        %v627 = vld [vmem:[#allocation6 + $0x38] sm:$0xf]
        %v628 = vld [vmem:[#allocation6 + $0x3c] sm:$0xf]
        %vm629 = vcmask 261120
        %v631 = vsel %vm629, %v610, 0
        %v634 = vsel %vm629, %v611, 0
        %636 = vmatprep.subr.bf16.mxu0 0
        %637 = vmatpush1.bf16.xpose.msra.mxu0 0
        %638 = vmatprep.subr.bf16.mxu0 0
        %639 = vmatpush1.bf16.xpose.msra.mxu0 0
        %640 = vmatprep.subr.bf16.mxu0 0
        %641 = vmatpush1.bf16.xpose.msra.mxu0 0
        %642 = vmatprep.subr.bf16.mxu0 0
        %643 = vmatpush1.bf16.xpose.msra.mxu0 0
        %644 = vmatprep.subr.bf16.mxu0 0
        %645 = vmatpush1.bf16.xpose.msra.mxu0 0
        %646 = vmatprep.subr.bf16.mxu0 0
        %647 = vmatpush1.bf16.xpose.msra.mxu0 0
        %648 = vmatprep.subr.bf16.mxu0 0
        %649 = vmatpush1.bf16.xpose.msra.mxu0 0
        %650 = vmatprep.subr.bf16.mxu0 0
        %651 = vmatpush1.bf16.xpose.msra.mxu0 %v634
        %652 = vmatprep.subr.bf16.mxu0 0
        %653 = vmatpush2.bf16.xpose.msra.mxu0 0
        %654 = vmatprep.subr.bf16.mxu0 0
        %655 = vmatpush2.bf16.xpose.msra.mxu0 0
        %656 = vmatprep.subr.bf16.mxu0 0
        %657 = vmatpush2.bf16.xpose.msra.mxu0 0
        %658 = vmatprep.subr.bf16.mxu0 0
        %659 = vmatpush2.bf16.xpose.msra.mxu0 0
        %660 = vmatprep.subr.bf16.mxu0 0
        %661 = vmatpush2.bf16.xpose.msra.mxu0 0
        %662 = vmatprep.subr.bf16.mxu0 0
        %663 = vmatpush2.bf16.xpose.msra.mxu0 0
        %664 = vmatprep.subr.bf16.mxu0 0
        %665 = vmatpush2.bf16.xpose.msra.mxu0 0
        %666 = vmatprep.subr.bf16.mxu0 0
        %667 = vmatpush2.bf16.xpose.msra.mxu0 0
        %668 = vmatprep.mubr.bf16.mxu0 0
        %669 = vmatmul.mubr.bf16.gmra.mxu0 %v631
        %v670 = vpop.f32.mrf.mxu0
        %v671 = vadd.f32 0.0, %v670
        %v672 = vpop.f32.mrf.mxu0
        %v673 = vpop.f32.mrf.mxu0
        %v674 = vadd.f32 0.0, %v673
        %v675 = vpop.f32.mrf.mxu0
        %676 = vdwg.mxu0
        %vm677 = vcmask 130048
        %v678 = vsel %vm677, %v671, -inf
        %679 = vmax.xlane.f32.xlu0 %v678
        %v680 = vpop.xlane.xlu0 %679
        %v681 = vsel %vm677, %v674, -inf
        %682 = vmax.xlane.f32.xlu0 %v681
        %v683 = vpop.xlane.xlu0 %682
        %v684 = vsub.f32 %v671, %v680
        %v685 = vsub.f32 %v674, %v683
        %v686 = vmul.f32 %v684, 1.442695
        %v687 = vpow.pop %v686
        %v688 = vmul.f32 %v685, 1.442695
        %v689 = vpow.pop %v688
        %v690 = vsel %vm677, %v687, 0.0
        %691 = vadd.xlane.f32.xlu0 %v690
        %v692 = vpop.xlane.xlu0 %691
        %v693 = vsel %vm677, %v689, 0.0
        %694 = vadd.xlane.f32.xlu0 %v693
        %v695 = vpop.xlane.xlu0 %694
        %v696 = vrcp.pop %v692
        %v697 = vrcp.pop %v695
        %v698 = vmul.f32 %v687, %v696
        %v699 = vmul.f32 %v689, %v697
        %v700 = vpack.c.bf16 %v699, %v698
        %v702 = vsel %vm677, %v700, 0
        %704 = vmatprep.subr.bf16.mxu0 0
        %705 = vmatpush1.bf16.msra.mxu0 0
        %706 = vmatprep.subr.bf16.mxu0 0
        %707 = vmatpush1.bf16.msra.mxu0 0
        %708 = vmatprep.subr.bf16.mxu0 0
        %709 = vmatpush1.bf16.msra.mxu0 0
        %710 = vmatprep.subr.bf16.mxu0 0
        %711 = vmatpush1.bf16.msra.mxu0 0
        %712 = vmatprep.subr.bf16.mxu0 0
        %713 = vmatpush1.bf16.msra.mxu0 0
        %714 = vmatprep.subr.bf16.mxu0 0
        %715 = vmatpush1.bf16.msra.mxu0 0
        %716 = vmatprep.subr.bf16.mxu0 0
        %717 = vmatpush1.bf16.msra.mxu0 0
        %718 = vmatprep.subr.bf16.mxu0 0
        %719 = vmatpush1.bf16.msra.mxu0 %v612
        %720 = vmatprep.subr.bf16.mxu0 0
        %721 = vmatpush2.bf16.msra.mxu0 0
        %722 = vmatprep.subr.bf16.mxu0 0
        %723 = vmatpush2.bf16.msra.mxu0 0
        %724 = vmatprep.subr.bf16.mxu0 0
        %725 = vmatpush2.bf16.msra.mxu0 0
        %726 = vmatprep.subr.bf16.mxu0 0
        %727 = vmatpush2.bf16.msra.mxu0 0
        %728 = vmatprep.subr.bf16.mxu0 0
        %729 = vmatpush2.bf16.msra.mxu0 0
        %730 = vmatprep.subr.bf16.mxu0 0
        %731 = vmatpush2.bf16.msra.mxu0 0
        %732 = vmatprep.subr.bf16.mxu0 0
        %733 = vmatpush2.bf16.msra.mxu0 0
        %734 = vmatprep.subr.bf16.mxu0 0
        %735 = vmatpush2.bf16.msra.mxu0 0
        %736 = vmatprep.mubr.bf16.mxu0 0
        %737 = vmatmul.mubr.bf16.gmra.mxu0 %v702
        %v738 = vpop.f32.mrf.mxu0
        %v739 = vadd.f32 0.0, %v738
        %v740 = vpop.f32.mrf.mxu0
        %v741 = vpop.f32.mrf.mxu0
        %v742 = vadd.f32 0.0, %v741
        %v743 = vpop.f32.mrf.mxu0
        %744 = vdwg.mxu0
        %v745 = vpack.c.bf16 %v742, %v739
        %747 = vrot.lane.b32.xlu0 %v610, 96
        %v748 = vpop.permute.xlu0 %747
        %750 = vrot.lane.b32.xlu0 %v611, 96
        %v751 = vpop.permute.xlu0 %750
        %v753 = vsel %vm629, %v748, 0
        %v756 = vsel %vm629, %v751, 0
        %758 = vmatprep.subr.bf16.mxu0 0
        %759 = vmatpush1.bf16.xpose.msra.mxu0 0
        %760 = vmatprep.subr.bf16.mxu0 0
        %761 = vmatpush1.bf16.xpose.msra.mxu0 0
        %762 = vmatprep.subr.bf16.mxu0 0
        %763 = vmatpush1.bf16.xpose.msra.mxu0 0
        %764 = vmatprep.subr.bf16.mxu0 0
        %765 = vmatpush1.bf16.xpose.msra.mxu0 0
        %766 = vmatprep.subr.bf16.mxu0 0
        %767 = vmatpush1.bf16.xpose.msra.mxu0 0
        %768 = vmatprep.subr.bf16.mxu0 0
        %769 = vmatpush1.bf16.xpose.msra.mxu0 0
        %770 = vmatprep.subr.bf16.mxu0 0
        %771 = vmatpush1.bf16.xpose.msra.mxu0 0
        %772 = vmatprep.subr.bf16.mxu0 0
        %773 = vmatpush1.bf16.xpose.msra.mxu0 %v756
        %774 = vmatprep.subr.bf16.mxu0 0
        %775 = vmatpush2.bf16.xpose.msra.mxu0 0
        %776 = vmatprep.subr.bf16.mxu0 0
        %777 = vmatpush2.bf16.xpose.msra.mxu0 0
        %778 = vmatprep.subr.bf16.mxu0 0
        %779 = vmatpush2.bf16.xpose.msra.mxu0 0
        %780 = vmatprep.subr.bf16.mxu0 0
        %781 = vmatpush2.bf16.xpose.msra.mxu0 0
        %782 = vmatprep.subr.bf16.mxu0 0
        %783 = vmatpush2.bf16.xpose.msra.mxu0 0
        %784 = vmatprep.subr.bf16.mxu0 0
        %785 = vmatpush2.bf16.xpose.msra.mxu0 0
        %786 = vmatprep.subr.bf16.mxu0 0
        %787 = vmatpush2.bf16.xpose.msra.mxu0 0
        %788 = vmatprep.subr.bf16.mxu0 0
        %789 = vmatpush2.bf16.xpose.msra.mxu0 0
        %790 = vmatprep.mubr.bf16.mxu0 0
        %791 = vmatmul.mubr.bf16.gmra.mxu0 %v753
        %v792 = vpop.f32.mrf.mxu0
        %v793 = vadd.f32 0.0, %v792
        %v794 = vpop.f32.mrf.mxu0
        %v795 = vpop.f32.mrf.mxu0
        %v796 = vadd.f32 0.0, %v795
        %v797 = vpop.f32.mrf.mxu0
        %798 = vdwg.mxu0
        %v799 = vsel %vm677, %v793, -inf
        %800 = vmax.xlane.f32.xlu0 %v799
        %v801 = vpop.xlane.xlu0 %800
        %v802 = vsel %vm677, %v796, -inf
        %803 = vmax.xlane.f32.xlu0 %v802
        %v804 = vpop.xlane.xlu0 %803
        %v805 = vsub.f32 %v793, %v801
        %v806 = vsub.f32 %v796, %v804
        %v807 = vmul.f32 %v805, 1.442695
        %v808 = vpow.pop %v807
        %v809 = vmul.f32 %v806, 1.442695
        %v810 = vpow.pop %v809
        %v811 = vsel %vm677, %v808, 0.0
        %812 = vadd.xlane.f32.xlu0 %v811
        %v813 = vpop.xlane.xlu0 %812
        %v814 = vsel %vm677, %v810, 0.0
        %815 = vadd.xlane.f32.xlu0 %v814
        %v816 = vpop.xlane.xlu0 %815
        %v817 = vrcp.pop %v813
        %v818 = vrcp.pop %v816
        %v819 = vmul.f32 %v808, %v817
        %v820 = vmul.f32 %v810, %v818
        %v821 = vpack.c.bf16 %v820, %v819
        %823 = vrot.lane.b32.xlu0 %v612, 96
        %v824 = vpop.permute.xlu0 %823
        %v827 = vsel %vm677, %v821, 0
        %829 = vmatprep.subr.bf16.mxu0 0
        %830 = vmatpush1.bf16.msra.mxu0 0
        %831 = vmatprep.subr.bf16.mxu0 0
        %832 = vmatpush1.bf16.msra.mxu0 0
        %833 = vmatprep.subr.bf16.mxu0 0
        %834 = vmatpush1.bf16.msra.mxu0 0
        %835 = vmatprep.subr.bf16.mxu0 0
        %836 = vmatpush1.bf16.msra.mxu0 0
        %837 = vmatprep.subr.bf16.mxu0 0
        %838 = vmatpush1.bf16.msra.mxu0 0
        %839 = vmatprep.subr.bf16.mxu0 0
        %840 = vmatpush1.bf16.msra.mxu0 0
        %841 = vmatprep.subr.bf16.mxu0 0
        %842 = vmatpush1.bf16.msra.mxu0 0
        %843 = vmatprep.subr.bf16.mxu0 0
        %844 = vmatpush1.bf16.msra.mxu0 %v824
        %845 = vmatprep.subr.bf16.mxu0 0
        %846 = vmatpush2.bf16.msra.mxu0 0
        %847 = vmatprep.subr.bf16.mxu0 0
        %848 = vmatpush2.bf16.msra.mxu0 0
        %849 = vmatprep.subr.bf16.mxu0 0
        %850 = vmatpush2.bf16.msra.mxu0 0
        %851 = vmatprep.subr.bf16.mxu0 0
        %852 = vmatpush2.bf16.msra.mxu0 0
        %853 = vmatprep.subr.bf16.mxu0 0
        %854 = vmatpush2.bf16.msra.mxu0 0
        %855 = vmatprep.subr.bf16.mxu0 0
        %856 = vmatpush2.bf16.msra.mxu0 0
        %857 = vmatprep.subr.bf16.mxu0 0
        %858 = vmatpush2.bf16.msra.mxu0 0
        %859 = vmatprep.subr.bf16.mxu0 0
        %860 = vmatpush2.bf16.msra.mxu0 0
        %861 = vmatprep.mubr.bf16.mxu0 0
        %862 = vmatmul.mubr.bf16.gmra.mxu0 %v827
        %v863 = vpop.f32.mrf.mxu0
        %v864 = vadd.f32 0.0, %v863
        %v865 = vpop.f32.mrf.mxu0
        %v866 = vpop.f32.mrf.mxu0
        %v867 = vadd.f32 0.0, %v866
        %v868 = vpop.f32.mrf.mxu0
        %869 = vdwg.mxu0
        %v870 = vpack.c.bf16 %v867, %v864
        %v875 = vunpack.c.l.b16 %v617
        %v876 = vunpack.c.l.b16 %v618
        %v877 = vunpack.c.l.b16 %v619
        %v878 = vunpack.c.l.b16 %v620
        %v879 = vpack.c.b16 %v876, %v875
        %v880 = vpack.c.b16 %v878, %v877
        %v884 = vsel %vm629, %v870, 0
        %886 = vmatprep.subr.bf16.mxu0 0
        %887 = vmatpush1.bf16.msra.mxu0 0
        %888 = vmatprep.subr.bf16.mxu0 0
        %889 = vmatpush1.bf16.msra.mxu0 0
        %890 = vmatprep.subr.bf16.mxu0 0
        %891 = vmatpush1.bf16.msra.mxu0 0
        %892 = vmatprep.subr.bf16.mxu0 0
        %893 = vmatpush1.bf16.msra.mxu0 0
        %894 = vmatprep.subr.bf16.mxu0 0
        %895 = vmatpush1.bf16.msra.mxu0 0
        %896 = vmatprep.subr.bf16.mxu0 0
        %897 = vmatpush1.bf16.msra.mxu0 0
        %898 = vmatprep.subr.bf16.mxu0 0
        %899 = vmatpush1.bf16.msra.mxu0 %v880
        %900 = vmatprep.subr.bf16.mxu0 0
        %901 = vmatpush1.bf16.msra.mxu0 %v879
        %902 = vmatprep.subr.bf16.mxu0 0
        %903 = vmatpush2.bf16.msra.mxu0 0
        %904 = vmatprep.subr.bf16.mxu0 0
        %905 = vmatpush2.bf16.msra.mxu0 0
        %906 = vmatprep.subr.bf16.mxu0 0
        %907 = vmatpush2.bf16.msra.mxu0 0
        %908 = vmatprep.subr.bf16.mxu0 0
        %909 = vmatpush2.bf16.msra.mxu0 0
        %910 = vmatprep.subr.bf16.mxu0 0
        %911 = vmatpush2.bf16.msra.mxu0 0
        %912 = vmatprep.subr.bf16.mxu0 0
        %913 = vmatpush2.bf16.msra.mxu0 0
        %914 = vmatprep.subr.bf16.mxu0 0
        %915 = vmatpush2.bf16.msra.mxu0 0
        %916 = vmatprep.subr.bf16.mxu0 0
        %917 = vmatpush2.bf16.msra.mxu0 0
        %918 = vmatprep.mubr.bf16.mxu0 0
        %919 = vmatmul.mubr.bf16.gmra.mxu0 %v884
        %v920 = vpop.f32.mrf.mxu0
        %v921 = vadd.f32 0.0, %v920
        %v922 = vpop.f32.mrf.mxu0
        %v923 = vpop.f32.mrf.mxu0
        %v924 = vadd.f32 0.0, %v923
        %v925 = vpop.f32.mrf.mxu0
        %926 = vdwg.mxu0
        %v931 = vunpack.c.l.b16 %v613
        %v932 = vunpack.c.l.b16 %v614
        %v933 = vunpack.c.l.b16 %v615
        %v934 = vunpack.c.l.b16 %v616
        %v935 = vpack.c.b16 %v932, %v931
        %v936 = vpack.c.b16 %v934, %v933
        %v940 = vsel %vm629, %v745, 0
        %942 = vmatprep.subr.bf16.mxu0 0
        %943 = vmatpush1.bf16.msra.mxu0 0
        %944 = vmatprep.subr.bf16.mxu0 0
        %945 = vmatpush1.bf16.msra.mxu0 0
        %946 = vmatprep.subr.bf16.mxu0 0
        %947 = vmatpush1.bf16.msra.mxu0 0
        %948 = vmatprep.subr.bf16.mxu0 0
        %949 = vmatpush1.bf16.msra.mxu0 0
        %950 = vmatprep.subr.bf16.mxu0 0
        %951 = vmatpush1.bf16.msra.mxu0 0
        %952 = vmatprep.subr.bf16.mxu0 0
        %953 = vmatpush1.bf16.msra.mxu0 0
        %954 = vmatprep.subr.bf16.mxu0 0
        %955 = vmatpush1.bf16.msra.mxu0 %v936
        %956 = vmatprep.subr.bf16.mxu0 0
        %957 = vmatpush1.bf16.msra.mxu0 %v935
        %958 = vmatprep.subr.bf16.mxu0 0
        %959 = vmatpush2.bf16.msra.mxu0 0
        %960 = vmatprep.subr.bf16.mxu0 0
        %961 = vmatpush2.bf16.msra.mxu0 0
        %962 = vmatprep.subr.bf16.mxu0 0
        %963 = vmatpush2.bf16.msra.mxu0 0
        %964 = vmatprep.subr.bf16.mxu0 0
        %965 = vmatpush2.bf16.msra.mxu0 0
        %966 = vmatprep.subr.bf16.mxu0 0
        %967 = vmatpush2.bf16.msra.mxu0 0
        %968 = vmatprep.subr.bf16.mxu0 0
        %969 = vmatpush2.bf16.msra.mxu0 0
        %970 = vmatprep.subr.bf16.mxu0 0
        %971 = vmatpush2.bf16.msra.mxu0 0
        %972 = vmatprep.subr.bf16.mxu0 0
        %973 = vmatpush2.bf16.msra.mxu0 0
        %974 = vmatprep.mubr.bf16.mxu0 0
        %975 = vmatmul.mubr.bf16.gmra.mxu0 %v940
        %v976 = vpop.f32.mrf.mxu0
        %v977 = vadd.f32 %v921, %v976
        %v978 = vpop.f32.mrf.mxu0
        %v979 = vpop.f32.mrf.mxu0
        %v980 = vadd.f32 %v924, %v979
        %v981 = vpop.f32.mrf.mxu0
        %982 = vdwg.mxu0
        %983 = vrot.lane.b32.xlu0 %v610, 64
        %v984 = vpop.permute.xlu0 %983
        %985 = vrot.lane.b32.xlu0 %v611, 64
        %v986 = vpop.permute.xlu0 %985
        %v988 = vsel %vm629, %v984, 0
        %v991 = vsel %vm629, %v986, 0
        %993 = vmatprep.subr.bf16.mxu0 0
        %994 = vmatpush1.bf16.xpose.msra.mxu0 0
        %995 = vmatprep.subr.bf16.mxu0 0
        %996 = vmatpush1.bf16.xpose.msra.mxu0 0
        %997 = vmatprep.subr.bf16.mxu0 0
        %998 = vmatpush1.bf16.xpose.msra.mxu0 0
        %999 = vmatprep.subr.bf16.mxu0 0
        %1000 = vmatpush1.bf16.xpose.msra.mxu0 0
        %1001 = vmatprep.subr.bf16.mxu0 0
        %1002 = vmatpush1.bf16.xpose.msra.mxu0 0
        %1003 = vmatprep.subr.bf16.mxu0 0
        %1004 = vmatpush1.bf16.xpose.msra.mxu0 0
        %1005 = vmatprep.subr.bf16.mxu0 0
        %1006 = vmatpush1.bf16.xpose.msra.mxu0 0
        %1007 = vmatprep.subr.bf16.mxu0 0
        %1008 = vmatpush1.bf16.xpose.msra.mxu0 %v991
        %1009 = vmatprep.subr.bf16.mxu0 0
        %1010 = vmatpush2.bf16.xpose.msra.mxu0 0
        %1011 = vmatprep.subr.bf16.mxu0 0
        %1012 = vmatpush2.bf16.xpose.msra.mxu0 0
        %1013 = vmatprep.subr.bf16.mxu0 0
        %1014 = vmatpush2.bf16.xpose.msra.mxu0 0
        %1015 = vmatprep.subr.bf16.mxu0 0
        %1016 = vmatpush2.bf16.xpose.msra.mxu0 0
        %1017 = vmatprep.subr.bf16.mxu0 0
        %1018 = vmatpush2.bf16.xpose.msra.mxu0 0
        %1019 = vmatprep.subr.bf16.mxu0 0
        %1020 = vmatpush2.bf16.xpose.msra.mxu0 0
        %1021 = vmatprep.subr.bf16.mxu0 0
        %1022 = vmatpush2.bf16.xpose.msra.mxu0 0
        %1023 = vmatprep.subr.bf16.mxu0 0
        %1024 = vmatpush2.bf16.xpose.msra.mxu0 0
        %1025 = vmatprep.mubr.bf16.mxu0 0
        %1026 = vmatmul.mubr.bf16.gmra.mxu0 %v988
        %v1027 = vpop.f32.mrf.mxu0
        %v1028 = vadd.f32 0.0, %v1027
        %v1029 = vpop.f32.mrf.mxu0
        %v1030 = vpop.f32.mrf.mxu0
        %v1031 = vadd.f32 0.0, %v1030
        %v1032 = vpop.f32.mrf.mxu0
        %1033 = vdwg.mxu0
        %v1034 = vsel %vm677, %v1028, -inf
        %1035 = vmax.xlane.f32.xlu0 %v1034
        %v1036 = vpop.xlane.xlu0 %1035
        %v1037 = vsel %vm677, %v1031, -inf
        %1038 = vmax.xlane.f32.xlu0 %v1037
        %v1039 = vpop.xlane.xlu0 %1038
        %v1040 = vsub.f32 %v1028, %v1036
        %v1041 = vsub.f32 %v1031, %v1039
        %v1042 = vmul.f32 %v1040, 1.442695
        %v1043 = vpow.pop %v1042
        %v1044 = vmul.f32 %v1041, 1.442695
        %v1045 = vpow.pop %v1044
        %v1046 = vsel %vm677, %v1043, 0.0
        %1047 = vadd.xlane.f32.xlu0 %v1046
        %v1048 = vpop.xlane.xlu0 %1047
        %v1049 = vsel %vm677, %v1045, 0.0
        %1050 = vadd.xlane.f32.xlu0 %v1049
        %v1051 = vpop.xlane.xlu0 %1050
        %v1052 = vrcp.pop %v1048
        %v1053 = vrcp.pop %v1051
        %v1054 = vmul.f32 %v1043, %v1052
        %v1055 = vmul.f32 %v1045, %v1053
        %v1056 = vpack.c.bf16 %v1055, %v1054
        %1057 = vrot.lane.b32.xlu0 %v612, 64
        %v1058 = vpop.permute.xlu0 %1057
        %v1061 = vsel %vm677, %v1056, 0
        %1063 = vmatprep.subr.bf16.mxu0 0
        %1064 = vmatpush1.bf16.msra.mxu0 0
        %1065 = vmatprep.subr.bf16.mxu0 0
        %1066 = vmatpush1.bf16.msra.mxu0 0
        %1067 = vmatprep.subr.bf16.mxu0 0
        %1068 = vmatpush1.bf16.msra.mxu0 0
        %1069 = vmatprep.subr.bf16.mxu0 0
        %1070 = vmatpush1.bf16.msra.mxu0 0
        %1071 = vmatprep.subr.bf16.mxu0 0
        %1072 = vmatpush1.bf16.msra.mxu0 0
        %1073 = vmatprep.subr.bf16.mxu0 0
        %1074 = vmatpush1.bf16.msra.mxu0 0
        %1075 = vmatprep.subr.bf16.mxu0 0
        %1076 = vmatpush1.bf16.msra.mxu0 0
        %1077 = vmatprep.subr.bf16.mxu0 0
        %1078 = vmatpush1.bf16.msra.mxu0 %v1058
        %1079 = vmatprep.subr.bf16.mxu0 0
        %1080 = vmatpush2.bf16.msra.mxu0 0
        %1081 = vmatprep.subr.bf16.mxu0 0
        %1082 = vmatpush2.bf16.msra.mxu0 0
        %1083 = vmatprep.subr.bf16.mxu0 0
        %1084 = vmatpush2.bf16.msra.mxu0 0
        %1085 = vmatprep.subr.bf16.mxu0 0
        %1086 = vmatpush2.bf16.msra.mxu0 0
        %1087 = vmatprep.subr.bf16.mxu0 0
        %1088 = vmatpush2.bf16.msra.mxu0 0
        %1089 = vmatprep.subr.bf16.mxu0 0
        %1090 = vmatpush2.bf16.msra.mxu0 0
        %1091 = vmatprep.subr.bf16.mxu0 0
        %1092 = vmatpush2.bf16.msra.mxu0 0
        %1093 = vmatprep.subr.bf16.mxu0 0
        %1094 = vmatpush2.bf16.msra.mxu0 0
        %1095 = vmatprep.mubr.bf16.mxu0 0
        %1096 = vmatmul.mubr.bf16.gmra.mxu0 %v1061
        %v1097 = vpop.f32.mrf.mxu0
        %v1098 = vadd.f32 0.0, %v1097
        %v1099 = vpop.f32.mrf.mxu0
        %v1100 = vpop.f32.mrf.mxu0
        %v1101 = vadd.f32 0.0, %v1100
        %v1102 = vpop.f32.mrf.mxu0
        %1103 = vdwg.mxu0
        %v1104 = vpack.c.bf16 %v1101, %v1098
        %v1109 = vunpack.c.l.b16 %v621
        %v1110 = vunpack.c.l.b16 %v622
        %v1111 = vunpack.c.l.b16 %v623
        %v1112 = vunpack.c.l.b16 %v624
        %v1113 = vpack.c.b16 %v1110, %v1109
        %v1114 = vpack.c.b16 %v1112, %v1111
        %v1118 = vsel %vm629, %v1104, 0
        %1120 = vmatprep.subr.bf16.mxu0 0
        %1121 = vmatpush1.bf16.msra.mxu0 0
        %1122 = vmatprep.subr.bf16.mxu0 0
        %1123 = vmatpush1.bf16.msra.mxu0 0
        %1124 = vmatprep.subr.bf16.mxu0 0
        %1125 = vmatpush1.bf16.msra.mxu0 0
        %1126 = vmatprep.subr.bf16.mxu0 0
        %1127 = vmatpush1.bf16.msra.mxu0 0
        %1128 = vmatprep.subr.bf16.mxu0 0
        %1129 = vmatpush1.bf16.msra.mxu0 0
        %1130 = vmatprep.subr.bf16.mxu0 0
        %1131 = vmatpush1.bf16.msra.mxu0 0
        %1132 = vmatprep.subr.bf16.mxu0 0
        %1133 = vmatpush1.bf16.msra.mxu0 %v1114
        %1134 = vmatprep.subr.bf16.mxu0 0
        %1135 = vmatpush1.bf16.msra.mxu0 %v1113
        %1136 = vmatprep.subr.bf16.mxu0 0
        %1137 = vmatpush2.bf16.msra.mxu0 0
        %1138 = vmatprep.subr.bf16.mxu0 0
        %1139 = vmatpush2.bf16.msra.mxu0 0
        %1140 = vmatprep.subr.bf16.mxu0 0
        %1141 = vmatpush2.bf16.msra.mxu0 0
        %1142 = vmatprep.subr.bf16.mxu0 0
        %1143 = vmatpush2.bf16.msra.mxu0 0
        %1144 = vmatprep.subr.bf16.mxu0 0
        %1145 = vmatpush2.bf16.msra.mxu0 0
        %1146 = vmatprep.subr.bf16.mxu0 0
        %1147 = vmatpush2.bf16.msra.mxu0 0
        %1148 = vmatprep.subr.bf16.mxu0 0
        %1149 = vmatpush2.bf16.msra.mxu0 0
        %1150 = vmatprep.subr.bf16.mxu0 0
        %1151 = vmatpush2.bf16.msra.mxu0 0
        %1152 = vmatprep.mubr.bf16.mxu0 0
        %1153 = vmatmul.mubr.bf16.gmra.mxu0 %v1118
        %v1154 = vpop.f32.mrf.mxu0
        %v1155 = vadd.f32 0.0, %v1154
        %v1156 = vpop.f32.mrf.mxu0
        %v1157 = vpop.f32.mrf.mxu0
        %v1158 = vadd.f32 0.0, %v1157
        %v1159 = vpop.f32.mrf.mxu0
        %1160 = vdwg.mxu0
        %v1161 = vadd.f32 %v977, %v1155
        %v1162 = vadd.f32 %v980, %v1158
        %1163 = vrot.lane.b32.xlu0 %v610, 32
        %v1164 = vpop.permute.xlu0 %1163
        %1165 = vrot.lane.b32.xlu0 %v611, 32
        %v1166 = vpop.permute.xlu0 %1165
        %v1168 = vsel %vm629, %v1164, 0
        %v1171 = vsel %vm629, %v1166, 0
        %1173 = vmatprep.subr.bf16.mxu0 0
        %1174 = vmatpush1.bf16.xpose.msra.mxu0 0
        %1175 = vmatprep.subr.bf16.mxu0 0
        %1176 = vmatpush1.bf16.xpose.msra.mxu0 0
        %1177 = vmatprep.subr.bf16.mxu0 0
        %1178 = vmatpush1.bf16.xpose.msra.mxu0 0
        %1179 = vmatprep.subr.bf16.mxu0 0
        %1180 = vmatpush1.bf16.xpose.msra.mxu0 0
        %1181 = vmatprep.subr.bf16.mxu0 0
        %1182 = vmatpush1.bf16.xpose.msra.mxu0 0
        %1183 = vmatprep.subr.bf16.mxu0 0
        %1184 = vmatpush1.bf16.xpose.msra.mxu0 0
        %1185 = vmatprep.subr.bf16.mxu0 0
        %1186 = vmatpush1.bf16.xpose.msra.mxu0 0
        %1187 = vmatprep.subr.bf16.mxu0 0
        %1188 = vmatpush1.bf16.xpose.msra.mxu0 %v1171
        %1189 = vmatprep.subr.bf16.mxu0 0
        %1190 = vmatpush2.bf16.xpose.msra.mxu0 0
        %1191 = vmatprep.subr.bf16.mxu0 0
        %1192 = vmatpush2.bf16.xpose.msra.mxu0 0
        %1193 = vmatprep.subr.bf16.mxu0 0
        %1194 = vmatpush2.bf16.xpose.msra.mxu0 0
        %1195 = vmatprep.subr.bf16.mxu0 0
        %1196 = vmatpush2.bf16.xpose.msra.mxu0 0
        %1197 = vmatprep.subr.bf16.mxu0 0
        %1198 = vmatpush2.bf16.xpose.msra.mxu0 0
        %1199 = vmatprep.subr.bf16.mxu0 0
        %1200 = vmatpush2.bf16.xpose.msra.mxu0 0
        %1201 = vmatprep.subr.bf16.mxu0 0
        %1202 = vmatpush2.bf16.xpose.msra.mxu0 0
        %1203 = vmatprep.subr.bf16.mxu0 0
        %1204 = vmatpush2.bf16.xpose.msra.mxu0 0
        %1205 = vmatprep.mubr.bf16.mxu0 0
        %1206 = vmatmul.mubr.bf16.gmra.mxu0 %v1168
        %v1207 = vpop.f32.mrf.mxu0
        %v1208 = vadd.f32 0.0, %v1207
        %v1209 = vpop.f32.mrf.mxu0
        %v1210 = vpop.f32.mrf.mxu0
        %v1211 = vadd.f32 0.0, %v1210
        %v1212 = vpop.f32.mrf.mxu0
        %1213 = vdwg.mxu0
        %v1214 = vsel %vm677, %v1208, -inf
        %1215 = vmax.xlane.f32.xlu0 %v1214
        %v1216 = vpop.xlane.xlu0 %1215
        %v1217 = vsel %vm677, %v1211, -inf
        %1218 = vmax.xlane.f32.xlu0 %v1217
        %v1219 = vpop.xlane.xlu0 %1218
        %v1220 = vsub.f32 %v1208, %v1216
        %v1221 = vsub.f32 %v1211, %v1219
        %v1222 = vmul.f32 %v1220, 1.442695
        %v1223 = vpow.pop %v1222
        %v1224 = vmul.f32 %v1221, 1.442695
        %v1225 = vpow.pop %v1224
        %v1226 = vsel %vm677, %v1223, 0.0
        %1227 = vadd.xlane.f32.xlu0 %v1226
        %v1228 = vpop.xlane.xlu0 %1227
        %v1229 = vsel %vm677, %v1225, 0.0
        %1230 = vadd.xlane.f32.xlu0 %v1229
        %v1231 = vpop.xlane.xlu0 %1230
        %v1232 = vrcp.pop %v1228
        %v1233 = vrcp.pop %v1231
        %v1234 = vmul.f32 %v1223, %v1232
        %v1235 = vmul.f32 %v1225, %v1233
        %v1236 = vpack.c.bf16 %v1235, %v1234
        %1237 = vrot.lane.b32.xlu0 %v612, 32
        %v1238 = vpop.permute.xlu0 %1237
        %v1241 = vsel %vm677, %v1236, 0
        %1243 = vmatprep.subr.bf16.mxu0 0
        %1244 = vmatpush1.bf16.msra.mxu0 0
        %1245 = vmatprep.subr.bf16.mxu0 0
        %1246 = vmatpush1.bf16.msra.mxu0 0
        %1247 = vmatprep.subr.bf16.mxu0 0
        %1248 = vmatpush1.bf16.msra.mxu0 0
        %1249 = vmatprep.subr.bf16.mxu0 0
        %1250 = vmatpush1.bf16.msra.mxu0 0
        %1251 = vmatprep.subr.bf16.mxu0 0
        %1252 = vmatpush1.bf16.msra.mxu0 0
        %1253 = vmatprep.subr.bf16.mxu0 0
        %1254 = vmatpush1.bf16.msra.mxu0 0
        %1255 = vmatprep.subr.bf16.mxu0 0
        %1256 = vmatpush1.bf16.msra.mxu0 0
        %1257 = vmatprep.subr.bf16.mxu0 0
        %1258 = vmatpush1.bf16.msra.mxu0 %v1238
        %1259 = vmatprep.subr.bf16.mxu0 0
        %1260 = vmatpush2.bf16.msra.mxu0 0
        %1261 = vmatprep.subr.bf16.mxu0 0
        %1262 = vmatpush2.bf16.msra.mxu0 0
        %1263 = vmatprep.subr.bf16.mxu0 0
        %1264 = vmatpush2.bf16.msra.mxu0 0
        %1265 = vmatprep.subr.bf16.mxu0 0
        %1266 = vmatpush2.bf16.msra.mxu0 0
        %1267 = vmatprep.subr.bf16.mxu0 0
        %1268 = vmatpush2.bf16.msra.mxu0 0
        %1269 = vmatprep.subr.bf16.mxu0 0
        %1270 = vmatpush2.bf16.msra.mxu0 0
        %1271 = vmatprep.subr.bf16.mxu0 0
        %1272 = vmatpush2.bf16.msra.mxu0 0
        %1273 = vmatprep.subr.bf16.mxu0 0
        %1274 = vmatpush2.bf16.msra.mxu0 0
        %1275 = vmatprep.mubr.bf16.mxu0 0
        %1276 = vmatmul.mubr.bf16.gmra.mxu0 %v1241
        %v1277 = vpop.f32.mrf.mxu0
        %v1278 = vadd.f32 0.0, %v1277
        %v1279 = vpop.f32.mrf.mxu0
        %v1280 = vpop.f32.mrf.mxu0
        %v1281 = vadd.f32 0.0, %v1280
        %v1282 = vpop.f32.mrf.mxu0
        %1283 = vdwg.mxu0
        %v1284 = vpack.c.bf16 %v1281, %v1278
        %v1289 = vunpack.c.l.b16 %v625
        %v1290 = vunpack.c.l.b16 %v626
        %v1291 = vunpack.c.l.b16 %v627
        %v1292 = vunpack.c.l.b16 %v628
        %v1293 = vpack.c.b16 %v1290, %v1289
        %v1294 = vpack.c.b16 %v1292, %v1291
        %v1298 = vsel %vm629, %v1284, 0
        %1300 = vmatprep.subr.bf16.mxu0 0
        %1301 = vmatpush1.bf16.msra.mxu0 0
        %1302 = vmatprep.subr.bf16.mxu0 0
        %1303 = vmatpush1.bf16.msra.mxu0 0
        %1304 = vmatprep.subr.bf16.mxu0 0
        %1305 = vmatpush1.bf16.msra.mxu0 0
        %1306 = vmatprep.subr.bf16.mxu0 0
        %1307 = vmatpush1.bf16.msra.mxu0 0
        %1308 = vmatprep.subr.bf16.mxu0 0
        %1309 = vmatpush1.bf16.msra.mxu0 0
        %1310 = vmatprep.subr.bf16.mxu0 0
        %1311 = vmatpush1.bf16.msra.mxu0 0
        %1312 = vmatprep.subr.bf16.mxu0 0
        %1313 = vmatpush1.bf16.msra.mxu0 %v1294
        %1314 = vmatprep.subr.bf16.mxu0 0
        %1315 = vmatpush1.bf16.msra.mxu0 %v1293
        %1316 = vmatprep.subr.bf16.mxu0 0
        %1317 = vmatpush2.bf16.msra.mxu0 0
        %1318 = vmatprep.subr.bf16.mxu0 0
        %1319 = vmatpush2.bf16.msra.mxu0 0
        %1320 = vmatprep.subr.bf16.mxu0 0
        %1321 = vmatpush2.bf16.msra.mxu0 0
        %1322 = vmatprep.subr.bf16.mxu0 0
        %1323 = vmatpush2.bf16.msra.mxu0 0
        %1324 = vmatprep.subr.bf16.mxu0 0
        %1325 = vmatpush2.bf16.msra.mxu0 0
        %1326 = vmatprep.subr.bf16.mxu0 0
        %1327 = vmatpush2.bf16.msra.mxu0 0
        %1328 = vmatprep.subr.bf16.mxu0 0
        %1329 = vmatpush2.bf16.msra.mxu0 0
        %1330 = vmatprep.subr.bf16.mxu0 0
        %1331 = vmatpush2.bf16.msra.mxu0 0
        %1332 = vmatprep.mubr.bf16.mxu0 0
        %1333 = vmatmul.mubr.bf16.gmra.mxu0 %v1298
        %v1334 = vpop.f32.mrf.mxu0
        %v1335 = vadd.f32 0.0, %v1334
        %v1336 = vpop.f32.mrf.mxu0
        %v1337 = vpop.f32.mrf.mxu0
        %v1338 = vadd.f32 0.0, %v1337
        %v1339 = vpop.f32.mrf.mxu0
        %1340 = vdwg.mxu0
        %v1341 = vadd.f32 %v1161, %v1335
        %v1342 = vadd.f32 %v1162, %v1338
        %v1343 = vadd.f32 %v346, %v1341
        %v1344 = vadd.f32 %v347, %v1342
        %v1345 = vld [vmem:[%s4] sm:$0x1]
        %v1347 = vlaneseq
        %v1348 = vshrl.u32 %v1347, 7
        %v1349 = vsub.s32 0, %v1348
        %v1350 = vrot.slane %v1345, %v1349
        %v1352 = vadd.f32 %v1343, %v1350
        %v1353 = vadd.f32 %v1344, %v1350
        %v1354 = vpack.c.bf16 %v1353, %v1352
        %v1356 = vunpack.c.l.b16 %v1354
        %v1357 = vunpack.c.h.b16 %v1354
        %v1358 = vpack.c.b16 %v1356, %v1356
        %v1359 = vpack.c.b16 %v1357, %v1357
        %1362 = vst [vmem:[%s338] sm:$0xf] %v1358
        %1363 = vst [vmem:[%s338 + $0x4] sm:$0xf] %v1359
        %v1364 = vunpack.c.l.bf16 %v1354
        %v1365 = vunpack.c.h.bf16 %v1354
        %v1366 = vadd.f32 %v1364, %v1365
        %v1367 = vrot.slane %v1366, 4
        %v1368 = vadd.f32 %v1366, %v1367
        %v1369 = vrot.slane %v1368, 2
        %v1370 = vadd.f32 %v1368, %v1369
        %v1371 = vrot.slane %v1370, 1
        %v1372 = vadd.f32 %v1370, %v1371
        %1373 = vst [vmem:[%s341] sm:$0x1] %v1372
        %v1374 = vmul.f32 %v1364, %v1364
        %v1375 = vmul.f32 %v1365, %v1365
        %v1376 = vadd.f32 %v1374, %v1375
        %v1377 = vrot.slane %v1376, 4
        %v1378 = vadd.f32 %v1376, %v1377
        %v1379 = vrot.slane %v1378, 2
        %v1380 = vadd.f32 %v1378, %v1379
        %v1381 = vrot.slane %v1380, 1
        %v1382 = vadd.f32 %v1380, %v1381
        %1383 = vst [vmem:[%s344] sm:$0x1] %v1382
        %p1384 = scmp.lt.s32.totalorder %s23, 1
        %s1385 = scalar_select %p1384, %s23, 1
        %s1386 = smul.addr %s1385, 2
        %s1387 = smul.addr %s1386, 4
        %s1388 = scalar_lea.vmem %s5, %s1387
        %p1389 = scmp.lt.s32.totalorder %s23, 1
        %s1390 = scalar_select %p1389, %s23, 1
        %s1391 = scalar_lea.vmem %s6, %s1390
        %p1392 = scmp.lt.s32.totalorder %s23, 1
        %s1393 = scalar_select %p1392, %s23, 1
        %s1394 = scalar_lea.vmem %s7, %s1393
        // Predicated region
        $region53: #{t2v_decoder_layer.4} parent=39 // pred_check
          %p1395 = pneg %p151
        $region54: #{t2v_decoder_layer.4} parent=39 // pred_check_branch
          %1397 = sbr.rel (%p1395) target = $region56
        $region55: #{t2v_decoder_layer.4} parent=39 // pred_region
          _
        $region56: #{t2v_decoder_layer.4} parent=39 // pred_fallthru
          _
        // Predicated region
        $region57: #{t2v_decoder_layer.4} parent=39 // pred_check
          %p1398 = pneg %p177
        $region58: #{t2v_decoder_layer.4} parent=39 // pred_check_branch
          %1400 = sbr.rel (%p1398) target = $region60
        $region59: #{t2v_decoder_layer.4} parent=39 // pred_region
          _
        $region60: #{t2v_decoder_layer.4} parent=39 // pred_fallthru
          _
        // Predicated region
        $region61: #{t2v_decoder_layer.4} parent=39 // pred_check
          %p1401 = pneg %p203
        $region62: #{t2v_decoder_layer.4} parent=39 // pred_check_branch
          %1403 = sbr.rel (%p1401) target = $region64
        $region63: #{t2v_decoder_layer.4} parent=39 // pred_region
          _
        $region64: #{t2v_decoder_layer.4} parent=39 // pred_fallthru
          _
      $region40: #{t2v_decoder_layer.4} parent=5 // pred_fallthru
        _
      %p1404 = scmp.le.s32.totalorder 2, %s18
      // Predicated region
      $region65: #{t2v_decoder_layer.4} parent=5 // pred_check
        %p1405 = pneg %p1404
      $region66: #{t2v_decoder_layer.4} parent=5 // pred_check_branch
        %1407 = sbr.rel (%p1405) target = $region68
      $region67: #{t2v_decoder_layer.4} parent=5 // pred_region
        %s1408 = ssub.s32 %s18, 2
        // Predicated region
        $region69: #{t2v_decoder_layer.4} parent=67 // pred_check
          %p1409 = pneg %p157
        $region70: #{t2v_decoder_layer.4} parent=67 // pred_check_branch
          %1411 = sbr.rel (%p1409) target = $region72
        $region71: #{t2v_decoder_layer.4} parent=67 // pred_region
          %p1412 = scmp.lt.s32.totalorder %s24, 1
          %s1413 = scalar_select %p1412, %s24, 1
          %s1414 = smul.addr %s1413, 2
          %s1415 = smul.addr %s1414, 4
          %s1416 = scalar_lea.vmem %s5, %s1415
        $region72: #{t2v_decoder_layer.4} parent=67 // pred_fallthru
          _
        // Predicated region
        $region73: #{t2v_decoder_layer.4} parent=67 // pred_check
          %p1417 = pneg %p183
        $region74: #{t2v_decoder_layer.4} parent=67 // pred_check_branch
          %1419 = sbr.rel (%p1417) target = $region76
        $region75: #{t2v_decoder_layer.4} parent=67 // pred_region
          %p1420 = scmp.lt.s32.totalorder %s24, 1
          %s1421 = scalar_select %p1420, %s24, 1
          %s1422 = scalar_lea.vmem %s6, %s1421
        $region76: #{t2v_decoder_layer.4} parent=67 // pred_fallthru
          _
        // Predicated region
        $region77: #{t2v_decoder_layer.4} parent=67 // pred_check
          %p1423 = pneg %p209
        $region78: #{t2v_decoder_layer.4} parent=67 // pred_check_branch
          %1425 = sbr.rel (%p1423) target = $region80
        $region79: #{t2v_decoder_layer.4} parent=67 // pred_region
          %p1426 = scmp.lt.s32.totalorder %s24, 1
          %s1427 = scalar_select %p1426, %s24, 1
          %s1428 = scalar_lea.vmem %s7, %s1427
        $region80: #{t2v_decoder_layer.4} parent=67 // pred_fallthru
          _
      $region68: #{t2v_decoder_layer.4} parent=5 // pred_fallthru
        _
    $region6: #{t2v_decoder_layer.4} parent=1 // loop_footer
      %s22 = sadd.s32 1, %s18
    $region7: #{t2v_decoder_layer.4} parent=1 // loop_footer_branch
      %17 = sbr.rel target = $region3
    $region8: #{t2v_decoder_layer.4} parent=1 // loop_exit
      _
    %1429 = vsyncpa [#allocation3], 1
    %s1430 = scalar_lea.sflag [#allocation3], 1
    %1431 = vsyncpa %s1430, 1
    %1432 = vsyncpa [#allocation5], 1

// kernel: t2v_decoder_layer.5
$region0: #{t2v_decoder_layer.5}
  #allocation0 [shape = 'u32[]', space=smem, size = 0x4, offset = 0x4, fixed_abs, tag = 'smem constant byte address 0x4 - core index']
  #allocation1 [shape = 'u32[144,128]{1,0:T(1,128)}', space=vmem, size = 0x12000, scoped, tag = 'internal scratch']
  %s0 = inlined_call_operand.vmem [shape: bf16[2,16,128], index: 0, kind: input, shape index: {}]
  %s1 = inlined_call_operand.vmem [shape: f32[2,16,4], index: 1, kind: input, shape index: {}]
  %s2 = inlined_call_operand.vmem [shape: f32[2,16,4], index: 2, kind: input, shape index: {}]
  %s3 = inlined_call_operand.vmem [shape: f32[2,1,128], index: 3, kind: input, shape index: {}]
  %s4 = inlined_call_operand.vmem [shape: f32[2,1,128], index: 4, kind: input, shape index: {}]
  %s5 = inlined_call_operand.vmem [shape: f32[1,128], index: 5, kind: input, shape index: {}]
  %s6 = inlined_call_operand.vmem [shape: f32[1,128], index: 6, kind: input, shape index: {}]
  %s7 = inlined_call_operand.vmem [shape: bf16[128,384], index: 7, kind: input, shape index: {}]
  %s8 = inlined_call_operand.vmem [shape: f32[1,384], index: 8, kind: input, shape index: {}]
  %s9 = inlined_call_operand.vmem [shape: bf16[4,128], index: 9, kind: input, shape index: {}]
  %s10 = inlined_call_operand.vmem [shape: bf16[4,128], index: 10, kind: input, shape index: {}]
  %s11 = inlined_call_operand.hbm [shape: bf16[128,128], index: 11, kind: input, shape index: {}]
  %s12 = inlined_call_operand.vmem [shape: f32[1,128], index: 12, kind: input, shape index: {}]
  %s13 = inlined_call_operand.vmem [shape: bf16[2,16,128], index: 13, kind: output, shape index: {0}]
  %s14 = inlined_call_operand.vmem [shape: f32[2,1,128], index: 14, kind: output, shape index: {1}]
  %s15 = inlined_call_operand.vmem [shape: f32[2,1,128], index: 15, kind: output, shape index: {2}]
  %16 = xla_tuple %s13, %s14, %s15
  %s17 = sld [smem:[#allocation0]]
  $region105: #{t2v_decoder_layer.5} parent=0
    _
  %s19 = ssub.s32 1, %s17
  %s20 = scalar_select 0, %s19, %s17
  $region1: #{t2v_decoder_layer.5} parent=0
    #allocation2 [shape = 'u8[32768]{0}', space=vmem, size = 0x8000, scoped, tag = 'input window, operand 11, single buffered']
    #allocation3 [shape = 's32[2]{0}', space=sflag, size = 0x8, scoped, tag = 'scoped memory for t2v_decoder_layer.5']
    %21 = vsyncpa [#allocation3], 0
    loop: start=0, step=1, limit=4
    $region2: #{t2v_decoder_layer.5} parent=1 // loop_pre_header
      _
    $region3: #{t2v_decoder_layer.5} parent=1 // loop_header
      %s23 = sphi 0, %s27
      %p24 = scmp.ge.s32.totalorder %s23, 4
      %s33 = sphi 0, %s35
      %s36 = sphi 0, %s33
      %s37 = sphi 0, %s36
      %s53 = sphi 0, %s37
      %s59 = sphi 0, %s61
      %s62 = sphi 0, %s59
      %s63 = sphi 0, %s62
      %s79 = sphi 0, %s63
      %s85 = sphi 0, %s87
      %s88 = sphi 0, %s85
      %s89 = sphi 0, %s88
      %s105 = sphi 0, %s89
      %s109 = sphi 0, %s109
      %s111 = sphi 0, %s109
      %s112 = sphi 0, %s111
      %s126 = sphi 0, %s112
      %s130 = sphi 0, %s130
      %s132 = sphi 0, %s130
      %s133 = sphi 0, %s132
      %s147 = sphi 0, %s133
      %s151 = sphi 0, %s151
      %s153 = sphi 0, %s151
      %s154 = sphi 0, %s153
      %s168 = sphi 0, %s154
      %s172 = sphi 0, %s172
      %s174 = sphi 0, %s172
      %s175 = sphi 0, %s174
      %s189 = sphi 0, %s175
      %s193 = sphi 0, %s193
      %s195 = sphi 0, %s193
      %s196 = sphi 0, %s195
      %s210 = sphi 0, %s196
      %s214 = sphi 0, %s214
      %s216 = sphi 0, %s214
      %s217 = sphi 0, %s216
      %s231 = sphi 0, %s217
      %s235 = sphi 0, %s235
      %s237 = sphi 0, %s235
      %s238 = sphi 0, %s237
      %s252 = sphi 0, %s238
      %s256 = sphi 0, %s256
      %s258 = sphi 0, %s256
      %s259 = sphi 0, %s258
      %s273 = sphi 0, %s259
      %s277 = sphi 0, %s277
      %s279 = sphi 0, %s277
      %s280 = sphi 0, %s279
      %s294 = sphi 0, %s280
      %s298 = sphi 0, %s298
      %s300 = sphi 0, %s298
      %s301 = sphi 0, %s300
      %s315 = sphi 0, %s301
      %s321 = sphi 0, %s323
      %s324 = sphi 0, %s321
      %s325 = sphi 0, %s324
      %s341 = sphi 0, %s325
      %s347 = sphi 0, %s349
      %s350 = sphi 0, %s347
      %s351 = sphi 0, %s350
      %s367 = sphi 0, %s351
      %s373 = sphi 0, %s375
      %s376 = sphi 0, %s373
      %s377 = sphi 0, %s376
      %s393 = sphi 0, %s377
    $region4: #{t2v_decoder_layer.5} parent=1 // loop_header_branch
      %26 = sbr.rel (%p24) target = $region8
    $region5: #{t2v_decoder_layer.5} parent=1 // loop_body
      %s28 = ssub.s32 %s23, 1
      %s29 = ssub.s32 %s23, 2
      %s30 = sadd.s32 %s23, 1
      %s31 = ssub.s32 %s23, %s30
      %p32 = scmp.eq.s32.totalorder %s31, 0
      %s34 = sadd.s32 %s33, 1
      %s35 = scalar_select %p32, %s33, %s34
      %p38 = pneg %p32
      %p39 = scmp.eq.s32.totalorder %s23, 1
      %p40 = por %p38, %p39
      %p41 = scmp.ne.s32.totalorder %s33, %s36
      %p42 = scmp.eq.s32.totalorder %s23, 0
      %p43 = por %p41, %p42
      %p44 = scmp.ne.s32.totalorder %s33, %s36
      %p45 = scmp.eq.s32.totalorder %s28, 1
      %p46 = por %p44, %p45
      %p47 = scmp.ne.s32.totalorder %s36, %s37
      %p48 = scmp.eq.s32.totalorder %s28, 0
      %p49 = por %p47, %p48
      %p50 = scmp.ne.s32.totalorder %s36, %s37
      %p51 = scmp.eq.s32.totalorder %s29, 1
      %p52 = por %p50, %p51
      %p54 = scmp.ne.s32.totalorder %s37, %s53
      %p55 = scmp.eq.s32.totalorder %s29, 0
      %p56 = por %p54, %p55
      %s57 = ssub.s32 %s23, %s30
      %p58 = scmp.eq.s32.totalorder %s57, 0
      %s60 = sadd.s32 %s59, 1
      %s61 = scalar_select %p58, %s59, %s60
      %p64 = pneg %p58
      %p65 = scmp.eq.s32.totalorder %s23, 1
      %p66 = por %p64, %p65
      %p67 = scmp.ne.s32.totalorder %s59, %s62
      %p68 = scmp.eq.s32.totalorder %s23, 0
      %p69 = por %p67, %p68
      %p70 = scmp.ne.s32.totalorder %s59, %s62
      %p71 = scmp.eq.s32.totalorder %s28, 1
      %p72 = por %p70, %p71
      %p73 = scmp.ne.s32.totalorder %s62, %s63
      %p74 = scmp.eq.s32.totalorder %s28, 0
      %p75 = por %p73, %p74
      %p76 = scmp.ne.s32.totalorder %s62, %s63
      %p77 = scmp.eq.s32.totalorder %s29, 1
      %p78 = por %p76, %p77
      %p80 = scmp.ne.s32.totalorder %s63, %s79
      %p81 = scmp.eq.s32.totalorder %s29, 0
      %p82 = por %p80, %p81
      %s83 = ssub.s32 %s23, %s30
      %p84 = scmp.eq.s32.totalorder %s83, 0
      %s86 = sadd.s32 %s85, 1
      %s87 = scalar_select %p84, %s85, %s86
      %p90 = pneg %p84
      %p91 = scmp.eq.s32.totalorder %s23, 1
      %p92 = por %p90, %p91
      %p93 = scmp.ne.s32.totalorder %s85, %s88
      %p94 = scmp.eq.s32.totalorder %s23, 0
      %p95 = por %p93, %p94
      %p96 = scmp.ne.s32.totalorder %s85, %s88
      %p97 = scmp.eq.s32.totalorder %s28, 1
      %p98 = por %p96, %p97
      %p99 = scmp.ne.s32.totalorder %s88, %s89
      %p100 = scmp.eq.s32.totalorder %s28, 0
      %p101 = por %p99, %p100
      %p102 = scmp.ne.s32.totalorder %s88, %s89
      %p103 = scmp.eq.s32.totalorder %s29, 1
      %p104 = por %p102, %p103
      %p106 = scmp.ne.s32.totalorder %s89, %s105
      %p107 = scmp.eq.s32.totalorder %s29, 0
      %p108 = por %p106, %p107
      %s110 = sadd.s32 %s109, 1
      %p113 = scmp.eq.s32.totalorder %s23, 1
      %p114 = scmp.ne.s32.totalorder %s109, %s111
      %p115 = scmp.eq.s32.totalorder %s23, 0
      %p116 = por %p114, %p115
      %p117 = scmp.ne.s32.totalorder %s109, %s111
      %p118 = scmp.eq.s32.totalorder %s28, 1
      %p119 = por %p117, %p118
      %p120 = scmp.ne.s32.totalorder %s111, %s112
      %p121 = scmp.eq.s32.totalorder %s28, 0
      %p122 = por %p120, %p121
      %p123 = scmp.ne.s32.totalorder %s111, %s112
      %p124 = scmp.eq.s32.totalorder %s29, 1
      %p125 = por %p123, %p124
      %p127 = scmp.ne.s32.totalorder %s112, %s126
      %p128 = scmp.eq.s32.totalorder %s29, 0
      %p129 = por %p127, %p128
      %s131 = sadd.s32 %s130, 1
      %p134 = scmp.eq.s32.totalorder %s23, 1
      %p135 = scmp.ne.s32.totalorder %s130, %s132
      %p136 = scmp.eq.s32.totalorder %s23, 0
      %p137 = por %p135, %p136
      %p138 = scmp.ne.s32.totalorder %s130, %s132
      %p139 = scmp.eq.s32.totalorder %s28, 1
      %p140 = por %p138, %p139
      %p141 = scmp.ne.s32.totalorder %s132, %s133
      %p142 = scmp.eq.s32.totalorder %s28, 0
      %p143 = por %p141, %p142
      %p144 = scmp.ne.s32.totalorder %s132, %s133
      %p145 = scmp.eq.s32.totalorder %s29, 1
      %p146 = por %p144, %p145
      %p148 = scmp.ne.s32.totalorder %s133, %s147
      %p149 = scmp.eq.s32.totalorder %s29, 0
      %p150 = por %p148, %p149
      %s152 = sadd.s32 %s151, 1
      %p155 = scmp.eq.s32.totalorder %s23, 1
      %p156 = scmp.ne.s32.totalorder %s151, %s153
      %p157 = scmp.eq.s32.totalorder %s23, 0
      %p158 = por %p156, %p157
      %p159 = scmp.ne.s32.totalorder %s151, %s153
      %p160 = scmp.eq.s32.totalorder %s28, 1
      %p161 = por %p159, %p160
      %p162 = scmp.ne.s32.totalorder %s153, %s154
      %p163 = scmp.eq.s32.totalorder %s28, 0
      %p164 = por %p162, %p163
      %p165 = scmp.ne.s32.totalorder %s153, %s154
      %p166 = scmp.eq.s32.totalorder %s29, 1
      %p167 = por %p165, %p166
      %p169 = scmp.ne.s32.totalorder %s154, %s168
      %p170 = scmp.eq.s32.totalorder %s29, 0
      %p171 = por %p169, %p170
      %s173 = sadd.s32 %s172, 1
      %p176 = scmp.eq.s32.totalorder %s23, 1
      %p177 = scmp.ne.s32.totalorder %s172, %s174
      %p178 = scmp.eq.s32.totalorder %s23, 0
      %p179 = por %p177, %p178
      %p180 = scmp.ne.s32.totalorder %s172, %s174
      %p181 = scmp.eq.s32.totalorder %s28, 1
      %p182 = por %p180, %p181
      %p183 = scmp.ne.s32.totalorder %s174, %s175
      %p184 = scmp.eq.s32.totalorder %s28, 0
      %p185 = por %p183, %p184
      %p186 = scmp.ne.s32.totalorder %s174, %s175
      %p187 = scmp.eq.s32.totalorder %s29, 1
      %p188 = por %p186, %p187
      %p190 = scmp.ne.s32.totalorder %s175, %s189
      %p191 = scmp.eq.s32.totalorder %s29, 0
      %p192 = por %p190, %p191
      %s194 = sadd.s32 %s193, 1
      %p197 = scmp.eq.s32.totalorder %s23, 1
      %p198 = scmp.ne.s32.totalorder %s193, %s195
      %p199 = scmp.eq.s32.totalorder %s23, 0
      %p200 = por %p198, %p199
      %p201 = scmp.ne.s32.totalorder %s193, %s195
      %p202 = scmp.eq.s32.totalorder %s28, 1
      %p203 = por %p201, %p202
      %p204 = scmp.ne.s32.totalorder %s195, %s196
      %p205 = scmp.eq.s32.totalorder %s28, 0
      %p206 = por %p204, %p205
      %p207 = scmp.ne.s32.totalorder %s195, %s196
      %p208 = scmp.eq.s32.totalorder %s29, 1
      %p209 = por %p207, %p208
      %p211 = scmp.ne.s32.totalorder %s196, %s210
      %p212 = scmp.eq.s32.totalorder %s29, 0
      %p213 = por %p211, %p212
      %s215 = sadd.s32 %s214, 1
      %p218 = scmp.eq.s32.totalorder %s23, 1
      %p219 = scmp.ne.s32.totalorder %s214, %s216
      %p220 = scmp.eq.s32.totalorder %s23, 0
      %p221 = por %p219, %p220
      %p222 = scmp.ne.s32.totalorder %s214, %s216
      %p223 = scmp.eq.s32.totalorder %s28, 1
      %p224 = por %p222, %p223
      %p225 = scmp.ne.s32.totalorder %s216, %s217
      %p226 = scmp.eq.s32.totalorder %s28, 0
      %p227 = por %p225, %p226
      %p228 = scmp.ne.s32.totalorder %s216, %s217
      %p229 = scmp.eq.s32.totalorder %s29, 1
      %p230 = por %p228, %p229
      %p232 = scmp.ne.s32.totalorder %s217, %s231
      %p233 = scmp.eq.s32.totalorder %s29, 0
      %p234 = por %p232, %p233
      %s236 = sadd.s32 %s235, 1
      %p239 = scmp.eq.s32.totalorder %s23, 1
      %p240 = scmp.ne.s32.totalorder %s235, %s237
      %p241 = scmp.eq.s32.totalorder %s23, 0
      %p242 = por %p240, %p241
      %p243 = scmp.ne.s32.totalorder %s235, %s237
      %p244 = scmp.eq.s32.totalorder %s28, 1
      %p245 = por %p243, %p244
      %p246 = scmp.ne.s32.totalorder %s237, %s238
      %p247 = scmp.eq.s32.totalorder %s28, 0
      %p248 = por %p246, %p247
      %p249 = scmp.ne.s32.totalorder %s237, %s238
      %p250 = scmp.eq.s32.totalorder %s29, 1
      %p251 = por %p249, %p250
      %p253 = scmp.ne.s32.totalorder %s238, %s252
      %p254 = scmp.eq.s32.totalorder %s29, 0
      %p255 = por %p253, %p254
      %s257 = sadd.s32 %s256, 1
      %p260 = scmp.eq.s32.totalorder %s23, 1
      %p261 = scmp.ne.s32.totalorder %s256, %s258
      %p262 = scmp.eq.s32.totalorder %s23, 0
      %p263 = por %p261, %p262
      %p264 = scmp.ne.s32.totalorder %s256, %s258
      %p265 = scmp.eq.s32.totalorder %s28, 1
      %p266 = por %p264, %p265
      %p267 = scmp.ne.s32.totalorder %s258, %s259
      %p268 = scmp.eq.s32.totalorder %s28, 0
      %p269 = por %p267, %p268
      %p270 = scmp.ne.s32.totalorder %s258, %s259
      %p271 = scmp.eq.s32.totalorder %s29, 1
      %p272 = por %p270, %p271
      %p274 = scmp.ne.s32.totalorder %s259, %s273
      %p275 = scmp.eq.s32.totalorder %s29, 0
      %p276 = por %p274, %p275
      %s278 = sadd.s32 %s277, 1
      %p281 = scmp.eq.s32.totalorder %s23, 1
      %p282 = scmp.ne.s32.totalorder %s277, %s279
      %p283 = scmp.eq.s32.totalorder %s23, 0
      %p284 = por %p282, %p283
      %p285 = scmp.ne.s32.totalorder %s277, %s279
      %p286 = scmp.eq.s32.totalorder %s28, 1
      %p287 = por %p285, %p286
      %p288 = scmp.ne.s32.totalorder %s279, %s280
      %p289 = scmp.eq.s32.totalorder %s28, 0
      %p290 = por %p288, %p289
      %p291 = scmp.ne.s32.totalorder %s279, %s280
      %p292 = scmp.eq.s32.totalorder %s29, 1
      %p293 = por %p291, %p292
      %p295 = scmp.ne.s32.totalorder %s280, %s294
      %p296 = scmp.eq.s32.totalorder %s29, 0
      %p297 = por %p295, %p296
      %s299 = sadd.s32 %s298, 1
      %p302 = scmp.eq.s32.totalorder %s23, 1
      %p303 = scmp.ne.s32.totalorder %s298, %s300
      %p304 = scmp.eq.s32.totalorder %s23, 0
      %p305 = por %p303, %p304
      %p306 = scmp.ne.s32.totalorder %s298, %s300
      %p307 = scmp.eq.s32.totalorder %s28, 1
      %p308 = por %p306, %p307
      %p309 = scmp.ne.s32.totalorder %s300, %s301
      %p310 = scmp.eq.s32.totalorder %s28, 0
      %p311 = por %p309, %p310
      %p312 = scmp.ne.s32.totalorder %s300, %s301
      %p313 = scmp.eq.s32.totalorder %s29, 1
      %p314 = por %p312, %p313
      %p316 = scmp.ne.s32.totalorder %s301, %s315
      %p317 = scmp.eq.s32.totalorder %s29, 0
      %p318 = por %p316, %p317
      %s319 = ssub.s32 %s23, %s30
      %p320 = scmp.eq.s32.totalorder %s319, 0
      %s322 = sadd.s32 %s321, 1
      %s323 = scalar_select %p320, %s321, %s322
      %p326 = pneg %p320
      %p327 = scmp.eq.s32.totalorder %s23, 1
      %p328 = por %p326, %p327
      %p329 = scmp.ne.s32.totalorder %s321, %s324
      %p330 = scmp.eq.s32.totalorder %s23, 0
      %p331 = por %p329, %p330
      %p332 = scmp.ne.s32.totalorder %s321, %s324
      %p333 = scmp.eq.s32.totalorder %s28, 1
      %p334 = por %p332, %p333
      %p335 = scmp.ne.s32.totalorder %s324, %s325
      %p336 = scmp.eq.s32.totalorder %s28, 0
      %p337 = por %p335, %p336
      %p338 = scmp.ne.s32.totalorder %s324, %s325
      %p339 = scmp.eq.s32.totalorder %s29, 1
      %p340 = por %p338, %p339
      %p342 = scmp.ne.s32.totalorder %s325, %s341
      %p343 = scmp.eq.s32.totalorder %s29, 0
      %p344 = por %p342, %p343
      %s345 = ssub.s32 %s23, %s30
      %p346 = scmp.eq.s32.totalorder %s345, 0
      %s348 = sadd.s32 %s347, 1
      %s349 = scalar_select %p346, %s347, %s348
      %p352 = pneg %p346
      %p353 = scmp.eq.s32.totalorder %s23, 1
      %p354 = por %p352, %p353
      %p355 = scmp.ne.s32.totalorder %s347, %s350
      %p356 = scmp.eq.s32.totalorder %s23, 0
      %p357 = por %p355, %p356
      %p358 = scmp.ne.s32.totalorder %s347, %s350
      %p359 = scmp.eq.s32.totalorder %s28, 1
      %p360 = por %p358, %p359
      %p361 = scmp.ne.s32.totalorder %s350, %s351
      %p362 = scmp.eq.s32.totalorder %s28, 0
      %p363 = por %p361, %p362
      %p364 = scmp.ne.s32.totalorder %s350, %s351
      %p365 = scmp.eq.s32.totalorder %s29, 1
      %p366 = por %p364, %p365
      %p368 = scmp.ne.s32.totalorder %s351, %s367
      %p369 = scmp.eq.s32.totalorder %s29, 0
      %p370 = por %p368, %p369
      %s371 = ssub.s32 %s23, %s30
      %p372 = scmp.eq.s32.totalorder %s371, 0
      %s374 = sadd.s32 %s373, 1
      %s375 = scalar_select %p372, %s373, %s374
      %p378 = pneg %p372
      %p379 = scmp.eq.s32.totalorder %s23, 1
      %p380 = por %p378, %p379
      %p381 = scmp.ne.s32.totalorder %s373, %s376
      %p382 = scmp.eq.s32.totalorder %s23, 0
      %p383 = por %p381, %p382
      %p384 = scmp.ne.s32.totalorder %s373, %s376
      %p385 = scmp.eq.s32.totalorder %s28, 1
      %p386 = por %p384, %p385
      %p387 = scmp.ne.s32.totalorder %s376, %s377
      %p388 = scmp.eq.s32.totalorder %s28, 0
      %p389 = por %p387, %p388
      %p390 = scmp.ne.s32.totalorder %s376, %s377
      %p391 = scmp.eq.s32.totalorder %s29, 1
      %p392 = por %p390, %p391
      %p394 = scmp.ne.s32.totalorder %s377, %s393
      %p395 = scmp.eq.s32.totalorder %s29, 0
      %p396 = por %p394, %p395
      %p397 = scmp.le.s32.totalorder 1, %s23
      %p398 = scmp.lt.s32.totalorder %s23, 3
      %p399 = pnand %p397, %p398
      %p400 = pneg %p399
      // Predicated region
      $region9: #{t2v_decoder_layer.5} parent=5 // pred_check
        _
      $region10: #{t2v_decoder_layer.5} parent=5 // pred_check_branch
        %402 = sbr.rel (%p399) target = $region12
      $region11: #{t2v_decoder_layer.5} parent=5 // pred_region
        %s403 = ssub.s32 %s23, 1
        // Predicated region
        $region13: #{t2v_decoder_layer.5} parent=11 // pred_check
          %p404 = pneg %p122
        $region14: #{t2v_decoder_layer.5} parent=11 // pred_check_branch
          %406 = sbr.rel (%p404) target = $region16
        $region15: #{t2v_decoder_layer.5} parent=11 // pred_region
          _
        $region16: #{t2v_decoder_layer.5} parent=11 // pred_fallthru
          _
        // Predicated region
        $region17: #{t2v_decoder_layer.5} parent=11 // pred_check
          %p407 = pneg %p143
        $region18: #{t2v_decoder_layer.5} parent=11 // pred_check_branch
          %409 = sbr.rel (%p407) target = $region20
        $region19: #{t2v_decoder_layer.5} parent=11 // pred_region
          _
        $region20: #{t2v_decoder_layer.5} parent=11 // pred_fallthru
          _
        // Predicated region
        $region21: #{t2v_decoder_layer.5} parent=11 // pred_check
          %p410 = pneg %p164
        $region22: #{t2v_decoder_layer.5} parent=11 // pred_check_branch
          %412 = sbr.rel (%p410) target = $region24
        $region23: #{t2v_decoder_layer.5} parent=11 // pred_region
          _
        $region24: #{t2v_decoder_layer.5} parent=11 // pred_fallthru
          _
        // Predicated region
        $region25: #{t2v_decoder_layer.5} parent=11 // pred_check
          %p413 = pneg %p185
        $region26: #{t2v_decoder_layer.5} parent=11 // pred_check_branch
          %415 = sbr.rel (%p413) target = $region28
        $region27: #{t2v_decoder_layer.5} parent=11 // pred_region
          _
        $region28: #{t2v_decoder_layer.5} parent=11 // pred_fallthru
          _
        // Predicated region
        $region29: #{t2v_decoder_layer.5} parent=11 // pred_check
          %p416 = pneg %p206
        $region30: #{t2v_decoder_layer.5} parent=11 // pred_check_branch
          %418 = sbr.rel (%p416) target = $region32
        $region31: #{t2v_decoder_layer.5} parent=11 // pred_region
          _
        $region32: #{t2v_decoder_layer.5} parent=11 // pred_fallthru
          _
        // Predicated region
        $region33: #{t2v_decoder_layer.5} parent=11 // pred_check
          %p419 = pneg %p227
        $region34: #{t2v_decoder_layer.5} parent=11 // pred_check_branch
          %421 = sbr.rel (%p419) target = $region36
        $region35: #{t2v_decoder_layer.5} parent=11 // pred_region
          _
        $region36: #{t2v_decoder_layer.5} parent=11 // pred_fallthru
          _
        // Predicated region
        $region37: #{t2v_decoder_layer.5} parent=11 // pred_check
          %p422 = pneg %p248
        $region38: #{t2v_decoder_layer.5} parent=11 // pred_check_branch
          %424 = sbr.rel (%p422) target = $region40
        $region39: #{t2v_decoder_layer.5} parent=11 // pred_region
          _
        $region40: #{t2v_decoder_layer.5} parent=11 // pred_fallthru
          _
        // Predicated region
        $region41: #{t2v_decoder_layer.5} parent=11 // pred_check
          %p425 = pneg %p269
        $region42: #{t2v_decoder_layer.5} parent=11 // pred_check_branch
          %427 = sbr.rel (%p425) target = $region44
        $region43: #{t2v_decoder_layer.5} parent=11 // pred_region
          _
        $region44: #{t2v_decoder_layer.5} parent=11 // pred_fallthru
          _
        // Predicated region
        $region45: #{t2v_decoder_layer.5} parent=11 // pred_check
          %p428 = pneg %p290
        $region46: #{t2v_decoder_layer.5} parent=11 // pred_check_branch
          %430 = sbr.rel (%p428) target = $region48
        $region47: #{t2v_decoder_layer.5} parent=11 // pred_region
          %s432 = ssub.s32 1024, 1024
          %433 = vsyncadd [#allocation3], %s432
          %s434 = sshll.u32 [#allocation2], 4
          %s435 = int_to_ptr.vmem [resolvable:$true] %s434
          %440 = dma.hbm_to_vmem [thread:$0]  %s11, 1024, %s435, [#allocation3], 64, 64, 4
        $region48: #{t2v_decoder_layer.5} parent=11 // pred_fallthru
          _
        // Predicated region
        $region49: #{t2v_decoder_layer.5} parent=11 // pred_check
          %p441 = pneg %p311
        $region50: #{t2v_decoder_layer.5} parent=11 // pred_check_branch
          %443 = sbr.rel (%p441) target = $region52
        $region51: #{t2v_decoder_layer.5} parent=11 // pred_region
          _
        $region52: #{t2v_decoder_layer.5} parent=11 // pred_fallthru
          _
      $region12: #{t2v_decoder_layer.5} parent=5 // pred_fallthru
        _
      %p444 = scmp.lt.s32.totalorder %s23, 2
      // Predicated region
      $region53: #{t2v_decoder_layer.5} parent=5 // pred_check
        %p445 = pneg %p444
      $region54: #{t2v_decoder_layer.5} parent=5 // pred_check_branch
        %447 = sbr.rel (%p445) target = $region56
      $region55: #{t2v_decoder_layer.5} parent=5 // pred_region
        // Predicated region
        $region57: #{t2v_decoder_layer.5} parent=55 // pred_check
          %p448 = pneg %p43
        $region58: #{t2v_decoder_layer.5} parent=55 // pred_check_branch
          %450 = sbr.rel (%p448) target = $region60
        $region59: #{t2v_decoder_layer.5} parent=55 // pred_region
          %p451 = scmp.lt.s32.totalorder %s23, 1
          %s452 = scalar_select %p451, %s23, 1
          %s453 = smul.addr %s452, 2
          %s454 = smul.addr %s453, 4
          %s455 = scalar_lea.vmem %s0, %s454
        $region60: #{t2v_decoder_layer.5} parent=55 // pred_fallthru
          _
        // Predicated region
        $region61: #{t2v_decoder_layer.5} parent=55 // pred_check
          %p456 = pneg %p69
        $region62: #{t2v_decoder_layer.5} parent=55 // pred_check_branch
          %458 = sbr.rel (%p456) target = $region64
        $region63: #{t2v_decoder_layer.5} parent=55 // pred_region
          %p459 = scmp.lt.s32.totalorder %s23, 1
          %s460 = scalar_select %p459, %s23, 1
          %s461 = smul.addr %s460, 2
          %s462 = smul.addr %s461, 8
          %s463 = scalar_lea.vmem %s1, %s462
        $region64: #{t2v_decoder_layer.5} parent=55 // pred_fallthru
          _
        // Predicated region
        $region65: #{t2v_decoder_layer.5} parent=55 // pred_check
          %p464 = pneg %p95
        $region66: #{t2v_decoder_layer.5} parent=55 // pred_check_branch
          %466 = sbr.rel (%p464) target = $region68
        $region67: #{t2v_decoder_layer.5} parent=55 // pred_region
          %p467 = scmp.lt.s32.totalorder %s23, 1
          %s468 = scalar_select %p467, %s23, 1
          %s469 = smul.addr %s468, 2
          %s470 = smul.addr %s469, 8
          %s471 = scalar_lea.vmem %s2, %s470
        $region68: #{t2v_decoder_layer.5} parent=55 // pred_fallthru
          _
      $region56: #{t2v_decoder_layer.5} parent=5 // pred_fallthru
        _
      %p472 = scmp.le.s32.totalorder 1, %s23
      %p473 = scmp.lt.s32.totalorder %s23, 3
      %p474 = pnand %p472, %p473
      %p475 = pneg %p474
      // Predicated region
      $region69: #{t2v_decoder_layer.5} parent=5 // pred_check
        _
      $region70: #{t2v_decoder_layer.5} parent=5 // pred_check_branch
        %477 = sbr.rel (%p474) target = $region72
      $region71: #{t2v_decoder_layer.5} parent=5 // pred_region
        %s478 = ssub.s32 %s23, 1
        // Predicated region
        $region73: #{t2v_decoder_layer.5} parent=71 // pred_check
          %p479 = pneg %p290
        $region74: #{t2v_decoder_layer.5} parent=71 // pred_check_branch
          %481 = sbr.rel (%p479) target = $region76
        $region75: #{t2v_decoder_layer.5} parent=71 // pred_region
          %482 = dma.done [#allocation3], 1024
        $region76: #{t2v_decoder_layer.5} parent=71 // pred_fallthru
          _
        %p483 = scmp.lt.s32.totalorder %s28, 1
        %s484 = scalar_select %p483, %s28, 1
        %s485 = smul.addr %s484, 2
        %s486 = smul.addr %s485, 4
        %s487 = scalar_lea.vmem %s0, %s486
        %p488 = pneg %p49
        %p489 = pneg %p46
        %p490 = scmp.lt.s32.totalorder %s28, 1
        %s491 = scalar_select %p490, %s28, 1
        %s492 = smul.addr %s491, 2
        %s493 = smul.addr %s492, 8
        %s494 = scalar_lea.vmem %s1, %s493
        %p495 = pneg %p75
        %p496 = pneg %p72
        %p497 = scmp.lt.s32.totalorder %s28, 1
        %s498 = scalar_select %p497, %s28, 1
        %s499 = smul.addr %s498, 2
        %s500 = smul.addr %s499, 8
        %s501 = scalar_lea.vmem %s2, %s500
        %p502 = pneg %p101
        %p503 = pneg %p98
        %p504 = pneg %p122
        %p505 = pneg %p119
        %p506 = pneg %p143
        %p507 = pneg %p140
        %p508 = pneg %p164
        %p509 = pneg %p161
        %p510 = pneg %p185
        %p511 = pneg %p182
        %p512 = pneg %p206
        %p513 = pneg %p203
        %p514 = pneg %p227
        %p515 = pneg %p224
        %p516 = pneg %p248
        %p517 = pneg %p245
        %p518 = pneg %p269
        %p519 = pneg %p266
        %p520 = pneg %p290
        %p521 = pneg %p287
        %p522 = pneg %p311
        %p523 = pneg %p308
        %p524 = pneg %p337
        %p525 = pneg %p334
        %p526 = scmp.lt.s32.totalorder %s28, 1
        %s527 = scalar_select %p526, %s28, 1
        %s528 = smul.addr %s527, 2
        %s529 = smul.addr %s528, 4
        %s530 = scalar_lea.vmem %s13, %s529
        %p531 = pneg %p363
        %p532 = pneg %p360
        %p533 = scmp.lt.s32.totalorder %s28, 1
        %s534 = scalar_select %p533, %s28, 1
        %s535 = scalar_lea.vmem %s14, %s534
        %p536 = pneg %p389
        %p537 = pneg %p386
        %p538 = scmp.lt.s32.totalorder %s28, 1
        %s539 = scalar_select %p538, %s28, 1
        %s540 = scalar_lea.vmem %s15, %s539
        %p541 = scmp.lt.s32.totalorder %s28, 1
        %s542 = scalar_select %p541, %s28, 1
        %s543 = smul.addr %s542, 2
        %s544 = smul.addr %s543, 4
        %s545 = scalar_lea.vmem %s0, %s544
        %p546 = scmp.lt.s32.totalorder %s28, 1
        %s547 = scalar_select %p546, %s28, 1
        %s548 = smul.addr %s547, 2
        %s549 = smul.addr %s548, 8
        %s550 = scalar_lea.vmem %s1, %s549
        %p551 = scmp.lt.s32.totalorder %s28, 1
        %s552 = scalar_select %p551, %s28, 1
        %s553 = smul.addr %s552, 2
        %s554 = smul.addr %s553, 8
        %s555 = scalar_lea.vmem %s2, %s554
        %p556 = scmp.lt.s32.totalorder %s28, 1
        %s557 = scalar_select %p556, %s28, 1
        %s558 = smul.addr %s557, 2
        %s559 = smul.addr %s558, 4
        %s560 = scalar_lea.vmem %s13, %s559
        %p561 = scmp.lt.s32.totalorder %s28, 1
        %s562 = scalar_select %p561, %s28, 1
        %s563 = scalar_lea.vmem %s14, %s562
        %p564 = scmp.lt.s32.totalorder %s28, 1
        %s565 = scalar_select %p564, %s28, 1
        %s566 = scalar_lea.vmem %s15, %s565
        %v568 = vld [vmem:[%s545] sm:$0xf]
        %v569 = vld [vmem:[%s545 + $0x4] sm:$0xf]
        %v570 = vunpack.c.l.bf16 %v568
        %v571 = vunpack.c.l.bf16 %v569
        %v572 = vld [vmem:[%s5] sm:$0x1]
        %v573 = vld [vmem:[%s6] sm:$0x1]
        %v574 = vld [vmem:[%s3] sm:$0x1]
        %v575 = vld [vmem:[%s3 + $0x1] sm:$0x1]
        %vm576 = vcmask 1040384
        %v577 = vsel %vm576, %v574, 0.0
        %v578 = vsel %vm576, %v575, 0.0
        %v579 = vadd.f32 %v577, %v578
        %v580 = vmul.f32 %v579, 0.03125
        %v581 = vld [vmem:[%s4] sm:$0x1]
        %v582 = vld [vmem:[%s4 + $0x1] sm:$0x1]
        %v583 = vsel %vm576, %v581, 0.0
        %v584 = vsel %vm576, %v582, 0.0
        %v585 = vadd.f32 %v583, %v584
        %v586 = vmul.f32 %v585, 0.03125
        %v587 = vmul.f32 %v580, %v580
        %v588 = vsub.f32 %v586, %v587
        %v589 = vadd.f32 %v588, 1e-05
        %v590 = vrsqrt.pop %v589
        %v591 = vmul.f32 %v590, %v572
        %v592 = vlaneseq
        %v593 = vshrl.u32 %v592, 7
        %v594 = vsub.s32 0, %v593
        %v595 = vrot.slane %v580, %v594
        %v596 = vsub.f32 %v570, %v595
        %v597 = vsub.f32 %v571, %v595
        %v598 = vlaneseq
        %v599 = vshrl.u32 %v598, 7
        %v600 = vsub.s32 0, %v599
        %v601 = vrot.slane %v591, %v600
        %v602 = vmul.f32 %v596, %v601
        %v603 = vmul.f32 %v597, %v601
        %v605 = vlaneseq
        %v606 = vshrl.u32 %v605, 7
        %v607 = vsub.s32 0, %v606
        %v608 = vrot.slane %v573, %v607
        %v610 = vadd.f32 %v602, %v608
        %v611 = vadd.f32 %v603, %v608
        %v612 = vpack.c.bf16 %v611, %v610
        %v613 = vld [vmem:[%s7] sm:$0xff]
        %v614 = vld [vmem:[%s7 + $0x8] sm:$0xf]
        %v615 = vld [vmem:[%s7 + $0xc] sm:$0xff]
        %v616 = vld [vmem:[%s7 + $0x14] sm:$0xf]
        %v617 = vld [vmem:[%s7 + $0x18] sm:$0xff]
        %v618 = vld [vmem:[%s7 + $0x20] sm:$0xf]
        %v619 = vld [vmem:[%s7 + $0x24] sm:$0xff]
        %v620 = vld [vmem:[%s7 + $0x2c] sm:$0xf]
        %v621 = vld [vmem:[%s7 + $0x30] sm:$0xff]
        %v622 = vld [vmem:[%s7 + $0x38] sm:$0xf]
        %v623 = vld [vmem:[%s7 + $0x3c] sm:$0xff]
        %v624 = vld [vmem:[%s7 + $0x44] sm:$0xf]
        %v625 = vld [vmem:[%s7 + $0x48] sm:$0xff]
        %v626 = vld [vmem:[%s7 + $0x50] sm:$0xf]
        %v627 = vld [vmem:[%s7 + $0x54] sm:$0xff]
        %v628 = vld [vmem:[%s7 + $0x5c] sm:$0xf]
        %v629 = vld [vmem:[%s7 + $0x60] sm:$0xff]
        %v630 = vld [vmem:[%s7 + $0x68] sm:$0xf]
        %v631 = vld [vmem:[%s7 + $0x6c] sm:$0xff]
        %v632 = vld [vmem:[%s7 + $0x74] sm:$0xf]
        %v633 = vld [vmem:[%s7 + $0x78] sm:$0xff]
        %v634 = vld [vmem:[%s7 + $0x80] sm:$0xf]
        %v635 = vld [vmem:[%s7 + $0x84] sm:$0xff]
        %v636 = vld [vmem:[%s7 + $0x8c] sm:$0xf]
        %v637 = vld [vmem:[%s7 + $0x90] sm:$0xff]
        %v638 = vld [vmem:[%s7 + $0x98] sm:$0xf]
        %v639 = vld [vmem:[%s7 + $0x9c] sm:$0xff]
        %v640 = vld [vmem:[%s7 + $0xa4] sm:$0xf]
        %v641 = vld [vmem:[%s7 + $0xa8] sm:$0xff]
        %v642 = vld [vmem:[%s7 + $0xb0] sm:$0xf]
        %v643 = vld [vmem:[%s7 + $0xb4] sm:$0xff]
        %v644 = vld [vmem:[%s7 + $0xbc] sm:$0xf]
        %v645 = vld [vmem:[%s8] sm:$0x7]
        %v647 = vlaneseq
        %v648 = vshrl.u32 %v647, 7
        %v649 = vsub.s32 0, %v648
        %v650 = vrot.slane %v645, %v649
        %v651 = vlaneseq
        %v652 = vshrl.u32 %v651, 7
        %v653 = vsub.s32 1, %v652
        %v654 = vrot.slane %v645, %v653
        %v655 = vlaneseq
        %v656 = vshrl.u32 %v655, 7
        %v657 = vsub.s32 2, %v656
        %v658 = vrot.slane %v645, %v657
        %v694 = vunpack.c.l.b16 %v613
        %v695 = vunpack.c.h.b16 %v613
        %v696 = vunpack.c.l.b16 %v614
        %v697 = vunpack.c.l.b16 %v615
        %v698 = vunpack.c.h.b16 %v615
        %v699 = vunpack.c.l.b16 %v616
        %v700 = vunpack.c.l.b16 %v617
        %v701 = vunpack.c.h.b16 %v617
        %v702 = vunpack.c.l.b16 %v618
        %v703 = vunpack.c.l.b16 %v619
        %v704 = vunpack.c.h.b16 %v619
        %v705 = vunpack.c.l.b16 %v620
        %v706 = vunpack.c.l.b16 %v621
        %v707 = vunpack.c.h.b16 %v621
        %v708 = vunpack.c.l.b16 %v622
        %v709 = vunpack.c.l.b16 %v623
        %v710 = vunpack.c.h.b16 %v623
        %v711 = vunpack.c.l.b16 %v624
        %v712 = vunpack.c.l.b16 %v625
        %v713 = vunpack.c.h.b16 %v625
        %v714 = vunpack.c.l.b16 %v626
        %v715 = vunpack.c.l.b16 %v627
        %v716 = vunpack.c.h.b16 %v627
        %v717 = vunpack.c.l.b16 %v628
        %v718 = vunpack.c.l.b16 %v629
        %v719 = vunpack.c.h.b16 %v629
        %v720 = vunpack.c.l.b16 %v630
        %v721 = vunpack.c.l.b16 %v631
        %v722 = vunpack.c.h.b16 %v631
        %v723 = vunpack.c.l.b16 %v632
        %v724 = vunpack.c.l.b16 %v633
        %v725 = vunpack.c.h.b16 %v633
        %v726 = vunpack.c.l.b16 %v634
        %v727 = vunpack.c.l.b16 %v635
        %v728 = vunpack.c.h.b16 %v635
        %v729 = vunpack.c.l.b16 %v636
        %v730 = vunpack.c.l.b16 %v637
        %v731 = vunpack.c.h.b16 %v637
        %v732 = vunpack.c.l.b16 %v638
        %v733 = vunpack.c.l.b16 %v639
        %v734 = vunpack.c.h.b16 %v639
        %v735 = vunpack.c.l.b16 %v640
        %v736 = vunpack.c.l.b16 %v641
        %v737 = vunpack.c.h.b16 %v641
        %v738 = vunpack.c.l.b16 %v642
        %v739 = vunpack.c.l.b16 %v643
        %v740 = vunpack.c.h.b16 %v643
        %v741 = vunpack.c.l.b16 %v644
        %v742 = vpack.c.b16 %v697, %v694
        %v743 = vpack.c.b16 %v698, %v695
        %v744 = vpack.c.b16 %v699, %v696
        %v745 = vpack.c.b16 %v703, %v700
        %v746 = vpack.c.b16 %v704, %v701
        %v747 = vpack.c.b16 %v705, %v702
        %v748 = vpack.c.b16 %v709, %v706
        %v749 = vpack.c.b16 %v710, %v707
        %v750 = vpack.c.b16 %v711, %v708
        %v751 = vpack.c.b16 %v715, %v712
        %v752 = vpack.c.b16 %v716, %v713
        %v753 = vpack.c.b16 %v717, %v714
        %v754 = vpack.c.b16 %v721, %v718
        %v755 = vpack.c.b16 %v722, %v719
        %v756 = vpack.c.b16 %v723, %v720
        %v757 = vpack.c.b16 %v727, %v724
        %v758 = vpack.c.b16 %v728, %v725
        %v759 = vpack.c.b16 %v729, %v726
        %v760 = vpack.c.b16 %v733, %v730
        %v761 = vpack.c.b16 %v734, %v731
        %v762 = vpack.c.b16 %v735, %v732
        %v763 = vpack.c.b16 %v739, %v736
        %v764 = vpack.c.b16 %v740, %v737
        %v765 = vpack.c.b16 %v741, %v738
        %790 = vmatprep.subr.bf16.mxu0 %v764
        %791 = vmatpush1.bf16.msra.mxu0 %v763
        %792 = vmatprep.subr.bf16.mxu0 %v761
        %793 = vmatpush1.bf16.msra.mxu0 %v760
        %794 = vmatprep.subr.bf16.mxu0 %v758
        %795 = vmatpush1.bf16.msra.mxu0 %v757
        %796 = vmatprep.subr.bf16.mxu0 %v755
        %797 = vmatpush1.bf16.msra.mxu0 %v754
        %798 = vmatprep.subr.bf16.mxu0 %v752
        %799 = vmatpush1.bf16.msra.mxu0 %v751
        %800 = vmatprep.subr.bf16.mxu0 %v749
        %801 = vmatpush1.bf16.msra.mxu0 %v748
        %802 = vmatprep.subr.bf16.mxu0 %v746
        %803 = vmatpush1.bf16.msra.mxu0 %v745
        %804 = vmatprep.subr.bf16.mxu0 %v743
        %805 = vmatpush1.bf16.msra.mxu0 %v742
        %806 = vmatprep.subr.bf16.mxu0 0
        %807 = vmatpush2.bf16.msra.mxu0 0
        %808 = vmatprep.subr.bf16.mxu0 0
        %809 = vmatpush2.bf16.msra.mxu0 0
        %810 = vmatprep.subr.bf16.mxu0 0
        %811 = vmatpush2.bf16.msra.mxu0 0
        %812 = vmatprep.subr.bf16.mxu0 0
        %813 = vmatpush2.bf16.msra.mxu0 0
        %814 = vmatprep.subr.bf16.mxu0 0
        %815 = vmatpush2.bf16.msra.mxu0 0
        %816 = vmatprep.subr.bf16.mxu0 0
        %817 = vmatpush2.bf16.msra.mxu0 0
        %818 = vmatprep.subr.bf16.mxu0 0
        %819 = vmatpush2.bf16.msra.mxu0 0
        %820 = vmatprep.subr.bf16.mxu0 0
        %821 = vmatpush2.bf16.msra.mxu0 0
        %822 = vmatprep.mubr.bf16.mxu0 0
        %823 = vmatmul.mubr.bf16.gmra.mxu0 %v612
        %v824 = vpop.f32.mrf.mxu0
        %v825 = vadd.f32 %v650, %v824
        %v826 = vpop.f32.mrf.mxu0
        %v827 = vadd.f32 %v654, %v826
        %v828 = vpop.f32.mrf.mxu0
        %v829 = vadd.f32 %v650, %v828
        %v830 = vpop.f32.mrf.mxu0
        %v831 = vadd.f32 %v654, %v830
        %832 = vdwg.mxu0
        %833 = vmatprep.subr.bf16.mxu0 0
        %834 = vmatpush1.bf16.msra.mxu0 %v765
        %835 = vmatprep.subr.bf16.mxu0 0
        %836 = vmatpush1.bf16.msra.mxu0 %v762
        %837 = vmatprep.subr.bf16.mxu0 0
        %838 = vmatpush1.bf16.msra.mxu0 %v759
        %839 = vmatprep.subr.bf16.mxu0 0
        %840 = vmatpush1.bf16.msra.mxu0 %v756
        %841 = vmatprep.subr.bf16.mxu0 0
        %842 = vmatpush1.bf16.msra.mxu0 %v753
        %843 = vmatprep.subr.bf16.mxu0 0
        %844 = vmatpush1.bf16.msra.mxu0 %v750
        %845 = vmatprep.subr.bf16.mxu0 0
        %846 = vmatpush1.bf16.msra.mxu0 %v747
        %847 = vmatprep.subr.bf16.mxu0 0
        %848 = vmatpush1.bf16.msra.mxu0 %v744
        %849 = vmatprep.subr.bf16.mxu0 0
        %850 = vmatpush2.bf16.msra.mxu0 0
        %851 = vmatprep.subr.bf16.mxu0 0
        %852 = vmatpush2.bf16.msra.mxu0 0
        %853 = vmatprep.subr.bf16.mxu0 0
        %854 = vmatpush2.bf16.msra.mxu0 0
        %855 = vmatprep.subr.bf16.mxu0 0
        %856 = vmatpush2.bf16.msra.mxu0 0
        %857 = vmatprep.subr.bf16.mxu0 0
        %858 = vmatpush2.bf16.msra.mxu0 0
        %859 = vmatprep.subr.bf16.mxu0 0
        %860 = vmatpush2.bf16.msra.mxu0 0
        %861 = vmatprep.subr.bf16.mxu0 0
        %862 = vmatpush2.bf16.msra.mxu0 0
        %863 = vmatprep.subr.bf16.mxu0 0
        %864 = vmatpush2.bf16.msra.mxu0 0
        %865 = vmatprep.mubr.bf16.mxu0 0
        %866 = vmatmul.mubr.bf16.gmra.mxu0 %v612
        %v867 = vpop.f32.mrf.mxu0
        %v868 = vadd.f32 %v658, %v867
        %v869 = vpop.f32.mrf.mxu0
        %v870 = vpop.f32.mrf.mxu0
        %v871 = vadd.f32 %v658, %v870
        %v872 = vpop.f32.mrf.mxu0
        %873 = vdwg.mxu0
        %v874 = vld [vmem:[%s555] sm:$0xff]
        %v875 = vld [vmem:[%s555 + $0x8] sm:$0xff]
        %v876 = vpack.c.bf16 %v875, %v874
        %v877 = vld [vmem:[%s9] sm:$0x3]
        %vm878 = vcmask 31744
        %v880 = vsel %vm878, %v876, 0
        %vm882 = vcmask 1041408
        %v884 = vsel %vm882, %v877, 0
        %886 = vmatprep.subr.bf16.mxu0 0
        %887 = vmatpush1.bf16.msra.mxu0 0
        %888 = vmatprep.subr.bf16.mxu0 0
        %889 = vmatpush1.bf16.msra.mxu0 0
        %890 = vmatprep.subr.bf16.mxu0 0
        %891 = vmatpush1.bf16.msra.mxu0 0
        %892 = vmatprep.subr.bf16.mxu0 0
        %893 = vmatpush1.bf16.msra.mxu0 0
        %894 = vmatprep.subr.bf16.mxu0 0
        %895 = vmatpush1.bf16.msra.mxu0 0
        %896 = vmatprep.subr.bf16.mxu0 0
        %897 = vmatpush1.bf16.msra.mxu0 0
        %898 = vmatprep.subr.bf16.mxu0 0
        %899 = vmatpush1.bf16.msra.mxu0 0
        %900 = vmatprep.subr.bf16.mxu0 0
        %901 = vmatpush1.bf16.msra.mxu0 %v884
        %902 = vmatprep.subr.bf16.mxu0 0
        %903 = vmatpush2.bf16.msra.mxu0 0
        %904 = vmatprep.subr.bf16.mxu0 0
        %905 = vmatpush2.bf16.msra.mxu0 0
        %906 = vmatprep.subr.bf16.mxu0 0
        %907 = vmatpush2.bf16.msra.mxu0 0
        %908 = vmatprep.subr.bf16.mxu0 0
        %909 = vmatpush2.bf16.msra.mxu0 0
        %910 = vmatprep.subr.bf16.mxu0 0
        %911 = vmatpush2.bf16.msra.mxu0 0
        %912 = vmatprep.subr.bf16.mxu0 0
        %913 = vmatpush2.bf16.msra.mxu0 0
        %914 = vmatprep.subr.bf16.mxu0 0
        %915 = vmatpush2.bf16.msra.mxu0 0
        %916 = vmatprep.subr.bf16.mxu0 0
        %917 = vmatpush2.bf16.msra.mxu0 0
        %918 = vmatprep.mubr.bf16.mxu0 0
        %919 = vmatmul.mubr.bf16.gmra.mxu0 %v880
        %v920 = vpop.f32.mrf.mxu0
        %v921 = vadd.f32 0.0, %v920
        %v922 = vpop.f32.mrf.mxu0
        %v923 = vpop.f32.mrf.mxu0
        %v924 = vadd.f32 0.0, %v923
        %v925 = vpop.f32.mrf.mxu0
        %926 = vdwg.mxu0
        %v927 = vld [vmem:[%s550] sm:$0xff]
        %v928 = vld [vmem:[%s550 + $0x8] sm:$0xff]
        %v929 = vpack.c.bf16 %v928, %v927
        %v930 = vld [vmem:[%s10] sm:$0x3]
        %v932 = vsel %vm878, %v929, 0
        %v935 = vsel %vm882, %v930, 0
        %937 = vmatprep.subr.bf16.mxu0 0
        %938 = vmatpush1.bf16.msra.mxu0 0
        %939 = vmatprep.subr.bf16.mxu0 0
        %940 = vmatpush1.bf16.msra.mxu0 0
        %941 = vmatprep.subr.bf16.mxu0 0
        %942 = vmatpush1.bf16.msra.mxu0 0
        %943 = vmatprep.subr.bf16.mxu0 0
        %944 = vmatpush1.bf16.msra.mxu0 0
        %945 = vmatprep.subr.bf16.mxu0 0
        %946 = vmatpush1.bf16.msra.mxu0 0
        %947 = vmatprep.subr.bf16.mxu0 0
        %948 = vmatpush1.bf16.msra.mxu0 0
        %949 = vmatprep.subr.bf16.mxu0 0
        %950 = vmatpush1.bf16.msra.mxu0 0
        %951 = vmatprep.subr.bf16.mxu0 0
        %952 = vmatpush1.bf16.msra.mxu0 %v935
        %953 = vmatprep.subr.bf16.mxu0 0
        %954 = vmatpush2.bf16.msra.mxu0 0
        %955 = vmatprep.subr.bf16.mxu0 0
        %956 = vmatpush2.bf16.msra.mxu0 0
        %957 = vmatprep.subr.bf16.mxu0 0
        %958 = vmatpush2.bf16.msra.mxu0 0
        %959 = vmatprep.subr.bf16.mxu0 0
        %960 = vmatpush2.bf16.msra.mxu0 0
        %961 = vmatprep.subr.bf16.mxu0 0
        %962 = vmatpush2.bf16.msra.mxu0 0
        %963 = vmatprep.subr.bf16.mxu0 0
        %964 = vmatpush2.bf16.msra.mxu0 0
        %965 = vmatprep.subr.bf16.mxu0 0
        %966 = vmatpush2.bf16.msra.mxu0 0
        %967 = vmatprep.subr.bf16.mxu0 0
        %968 = vmatpush2.bf16.msra.mxu0 0
        %969 = vmatprep.mubr.bf16.mxu0 0
        %970 = vmatmul.mubr.bf16.gmra.mxu0 %v932
        %v971 = vpop.f32.mrf.mxu0
        %v972 = vadd.f32 0.0, %v971
        %v973 = vpop.f32.mrf.mxu0
        %v974 = vpop.f32.mrf.mxu0
        %v975 = vadd.f32 0.0, %v974
        %v976 = vpop.f32.mrf.mxu0
        %977 = vdwg.mxu0
        %v978 = vadd.f32 %v825, %v921
        %v979 = vadd.f32 %v829, %v924
        %v980 = vpack.c.bf16 %v979, %v978
        %v981 = vadd.f32 %v827, %v972
        %v982 = vadd.f32 %v831, %v975
        %v983 = vpack.c.bf16 %v982, %v981
        %v984 = vpack.c.bf16 %v871, %v868
        %v985 = vld [vmem:[#allocation2] sm:$0xf]
        %v986 = vld [vmem:[#allocation2 + $0x4] sm:$0xf]
        %v987 = vld [vmem:[#allocation2 + $0x8] sm:$0xf]
        %v988 = vld [vmem:[#allocation2 + $0xc] sm:$0xf]
        %v989 = vld [vmem:[#allocation2 + $0x10] sm:$0xf]
        %v990 = vld [vmem:[#allocation2 + $0x14] sm:$0xf]
        %v991 = vld [vmem:[#allocation2 + $0x18] sm:$0xf]
        %v992 = vld [vmem:[#allocation2 + $0x1c] sm:$0xf]
        %v993 = vld [vmem:[#allocation2 + $0x20] sm:$0xf]
        %v994 = vld [vmem:[#allocation2 + $0x24] sm:$0xf]
        %v995 = vld [vmem:[#allocation2 + $0x28] sm:$0xf]
        %v996 = vld [vmem:[#allocation2 + $0x2c] sm:$0xf]
        %v997 = vld [vmem:[#allocation2 + $0x30] sm:$0xf]
        %v998 = vld [vmem:[#allocation2 + $0x34] sm:$0xf]
        %v999 = vld [vmem:[#allocation2 + $0x38] sm:$0xf]
        %v1000 = vld [vmem:[#allocation2 + $0x3c] sm:$0xf]
        %vm1001 = vcmask 261120
        %v1003 = vsel %vm1001, %v980, 0
        %v1006 = vsel %vm1001, %v983, 0
        %1008 = vmatprep.subr.bf16.mxu0 0
        %1009 = vmatpush1.bf16.xpose.msra.mxu0 0
        %1010 = vmatprep.subr.bf16.mxu0 0
        %1011 = vmatpush1.bf16.xpose.msra.mxu0 0
        %1012 = vmatprep.subr.bf16.mxu0 0
        %1013 = vmatpush1.bf16.xpose.msra.mxu0 0
        %1014 = vmatprep.subr.bf16.mxu0 0
        %1015 = vmatpush1.bf16.xpose.msra.mxu0 0
        %1016 = vmatprep.subr.bf16.mxu0 0
        %1017 = vmatpush1.bf16.xpose.msra.mxu0 0
        %1018 = vmatprep.subr.bf16.mxu0 0
        %1019 = vmatpush1.bf16.xpose.msra.mxu0 0
        %1020 = vmatprep.subr.bf16.mxu0 0
        %1021 = vmatpush1.bf16.xpose.msra.mxu0 0
        %1022 = vmatprep.subr.bf16.mxu0 0
        %1023 = vmatpush1.bf16.xpose.msra.mxu0 %v1006
        %1024 = vmatprep.subr.bf16.mxu0 0
        %1025 = vmatpush2.bf16.xpose.msra.mxu0 0
        %1026 = vmatprep.subr.bf16.mxu0 0
        %1027 = vmatpush2.bf16.xpose.msra.mxu0 0
        %1028 = vmatprep.subr.bf16.mxu0 0
        %1029 = vmatpush2.bf16.xpose.msra.mxu0 0
        %1030 = vmatprep.subr.bf16.mxu0 0
        %1031 = vmatpush2.bf16.xpose.msra.mxu0 0
        %1032 = vmatprep.subr.bf16.mxu0 0
        %1033 = vmatpush2.bf16.xpose.msra.mxu0 0
        %1034 = vmatprep.subr.bf16.mxu0 0
        %1035 = vmatpush2.bf16.xpose.msra.mxu0 0
        %1036 = vmatprep.subr.bf16.mxu0 0
        %1037 = vmatpush2.bf16.xpose.msra.mxu0 0
        %1038 = vmatprep.subr.bf16.mxu0 0
        %1039 = vmatpush2.bf16.xpose.msra.mxu0 0
        %1040 = vmatprep.mubr.bf16.mxu0 0
        %1041 = vmatmul.mubr.bf16.gmra.mxu0 %v1003
        %v1042 = vpop.f32.mrf.mxu0
        %v1043 = vadd.f32 0.0, %v1042
        %v1044 = vpop.f32.mrf.mxu0
        %v1045 = vpop.f32.mrf.mxu0
        %v1046 = vadd.f32 0.0, %v1045
        %v1047 = vpop.f32.mrf.mxu0
        %1048 = vdwg.mxu0
        %vm1049 = vcmask 130048
        %v1050 = vsel %vm1049, %v1043, -inf
        %1051 = vmax.xlane.f32.xlu0 %v1050
        %v1052 = vpop.xlane.xlu0 %1051
        %v1053 = vsel %vm1049, %v1046, -inf
        %1054 = vmax.xlane.f32.xlu0 %v1053
        %v1055 = vpop.xlane.xlu0 %1054
        %v1056 = vsub.f32 %v1043, %v1052
        %v1057 = vsub.f32 %v1046, %v1055
        %v1058 = vmul.f32 %v1056, 1.442695
        %v1059 = vpow.pop %v1058
        %v1060 = vmul.f32 %v1057, 1.442695
        %v1061 = vpow.pop %v1060
        %v1062 = vsel %vm1049, %v1059, 0.0
        %1063 = vadd.xlane.f32.xlu0 %v1062
        %v1064 = vpop.xlane.xlu0 %1063
        %v1065 = vsel %vm1049, %v1061, 0.0
        %1066 = vadd.xlane.f32.xlu0 %v1065
        %v1067 = vpop.xlane.xlu0 %1066
        %v1068 = vrcp.pop %v1064
        %v1069 = vrcp.pop %v1067
        %v1070 = vmul.f32 %v1059, %v1068
        %v1071 = vmul.f32 %v1061, %v1069
        %v1072 = vpack.c.bf16 %v1071, %v1070
        %v1074 = vsel %vm1049, %v1072, 0
        %1076 = vmatprep.subr.bf16.mxu0 0
        %1077 = vmatpush1.bf16.msra.mxu0 0
        %1078 = vmatprep.subr.bf16.mxu0 0
        %1079 = vmatpush1.bf16.msra.mxu0 0
        %1080 = vmatprep.subr.bf16.mxu0 0
        %1081 = vmatpush1.bf16.msra.mxu0 0
        %1082 = vmatprep.subr.bf16.mxu0 0
        %1083 = vmatpush1.bf16.msra.mxu0 0
        %1084 = vmatprep.subr.bf16.mxu0 0
        %1085 = vmatpush1.bf16.msra.mxu0 0
        %1086 = vmatprep.subr.bf16.mxu0 0
        %1087 = vmatpush1.bf16.msra.mxu0 0
        %1088 = vmatprep.subr.bf16.mxu0 0
        %1089 = vmatpush1.bf16.msra.mxu0 0
        %1090 = vmatprep.subr.bf16.mxu0 0
        %1091 = vmatpush1.bf16.msra.mxu0 %v984
        %1092 = vmatprep.subr.bf16.mxu0 0
        %1093 = vmatpush2.bf16.msra.mxu0 0
        %1094 = vmatprep.subr.bf16.mxu0 0
        %1095 = vmatpush2.bf16.msra.mxu0 0
        %1096 = vmatprep.subr.bf16.mxu0 0
        %1097 = vmatpush2.bf16.msra.mxu0 0
        %1098 = vmatprep.subr.bf16.mxu0 0
        %1099 = vmatpush2.bf16.msra.mxu0 0
        %1100 = vmatprep.subr.bf16.mxu0 0
        %1101 = vmatpush2.bf16.msra.mxu0 0
        %1102 = vmatprep.subr.bf16.mxu0 0
        %1103 = vmatpush2.bf16.msra.mxu0 0
        %1104 = vmatprep.subr.bf16.mxu0 0
        %1105 = vmatpush2.bf16.msra.mxu0 0
        %1106 = vmatprep.subr.bf16.mxu0 0
        %1107 = vmatpush2.bf16.msra.mxu0 0
        %1108 = vmatprep.mubr.bf16.mxu0 0
        %1109 = vmatmul.mubr.bf16.gmra.mxu0 %v1074
        %v1110 = vpop.f32.mrf.mxu0
        %v1111 = vadd.f32 0.0, %v1110
        %v1112 = vpop.f32.mrf.mxu0
        %v1113 = vpop.f32.mrf.mxu0
        %v1114 = vadd.f32 0.0, %v1113
        %v1115 = vpop.f32.mrf.mxu0
        %1116 = vdwg.mxu0
        %v1117 = vpack.c.bf16 %v1114, %v1111
        %1119 = vrot.lane.b32.xlu0 %v980, 96
        %v1120 = vpop.permute.xlu0 %1119
        %1122 = vrot.lane.b32.xlu0 %v983, 96
        %v1123 = vpop.permute.xlu0 %1122
        %v1125 = vsel %vm1001, %v1120, 0
        %v1128 = vsel %vm1001, %v1123, 0
        %1130 = vmatprep.subr.bf16.mxu0 0
        %1131 = vmatpush1.bf16.xpose.msra.mxu0 0
        %1132 = vmatprep.subr.bf16.mxu0 0
        %1133 = vmatpush1.bf16.xpose.msra.mxu0 0
        %1134 = vmatprep.subr.bf16.mxu0 0
        %1135 = vmatpush1.bf16.xpose.msra.mxu0 0
        %1136 = vmatprep.subr.bf16.mxu0 0
        %1137 = vmatpush1.bf16.xpose.msra.mxu0 0
        %1138 = vmatprep.subr.bf16.mxu0 0
        %1139 = vmatpush1.bf16.xpose.msra.mxu0 0
        %1140 = vmatprep.subr.bf16.mxu0 0
        %1141 = vmatpush1.bf16.xpose.msra.mxu0 0
        %1142 = vmatprep.subr.bf16.mxu0 0
        %1143 = vmatpush1.bf16.xpose.msra.mxu0 0
        %1144 = vmatprep.subr.bf16.mxu0 0
        %1145 = vmatpush1.bf16.xpose.msra.mxu0 %v1128
        %1146 = vmatprep.subr.bf16.mxu0 0
        %1147 = vmatpush2.bf16.xpose.msra.mxu0 0
        %1148 = vmatprep.subr.bf16.mxu0 0
        %1149 = vmatpush2.bf16.xpose.msra.mxu0 0
        %1150 = vmatprep.subr.bf16.mxu0 0
        %1151 = vmatpush2.bf16.xpose.msra.mxu0 0
        %1152 = vmatprep.subr.bf16.mxu0 0
        %1153 = vmatpush2.bf16.xpose.msra.mxu0 0
        %1154 = vmatprep.subr.bf16.mxu0 0
        %1155 = vmatpush2.bf16.xpose.msra.mxu0 0
        %1156 = vmatprep.subr.bf16.mxu0 0
        %1157 = vmatpush2.bf16.xpose.msra.mxu0 0
        %1158 = vmatprep.subr.bf16.mxu0 0
        %1159 = vmatpush2.bf16.xpose.msra.mxu0 0
        %1160 = vmatprep.subr.bf16.mxu0 0
        %1161 = vmatpush2.bf16.xpose.msra.mxu0 0
        %1162 = vmatprep.mubr.bf16.mxu0 0
        %1163 = vmatmul.mubr.bf16.gmra.mxu0 %v1125
        %v1164 = vpop.f32.mrf.mxu0
        %v1165 = vadd.f32 0.0, %v1164
        %v1166 = vpop.f32.mrf.mxu0
        %v1167 = vpop.f32.mrf.mxu0
        %v1168 = vadd.f32 0.0, %v1167
        %v1169 = vpop.f32.mrf.mxu0
        %1170 = vdwg.mxu0
        %v1171 = vsel %vm1049, %v1165, -inf
        %1172 = vmax.xlane.f32.xlu0 %v1171
        %v1173 = vpop.xlane.xlu0 %1172
        %v1174 = vsel %vm1049, %v1168, -inf
        %1175 = vmax.xlane.f32.xlu0 %v1174
        %v1176 = vpop.xlane.xlu0 %1175
        %v1177 = vsub.f32 %v1165, %v1173
        %v1178 = vsub.f32 %v1168, %v1176
        %v1179 = vmul.f32 %v1177, 1.442695
        %v1180 = vpow.pop %v1179
        %v1181 = vmul.f32 %v1178, 1.442695
        %v1182 = vpow.pop %v1181
        %v1183 = vsel %vm1049, %v1180, 0.0
        %1184 = vadd.xlane.f32.xlu0 %v1183
        %v1185 = vpop.xlane.xlu0 %1184
        %v1186 = vsel %vm1049, %v1182, 0.0
        %1187 = vadd.xlane.f32.xlu0 %v1186
        %v1188 = vpop.xlane.xlu0 %1187
        %v1189 = vrcp.pop %v1185
        %v1190 = vrcp.pop %v1188
        %v1191 = vmul.f32 %v1180, %v1189
        %v1192 = vmul.f32 %v1182, %v1190
        %v1193 = vpack.c.bf16 %v1192, %v1191
        %1195 = vrot.lane.b32.xlu0 %v984, 96
        %v1196 = vpop.permute.xlu0 %1195
        %v1199 = vsel %vm1049, %v1193, 0
        %1201 = vmatprep.subr.bf16.mxu0 0
        %1202 = vmatpush1.bf16.msra.mxu0 0
        %1203 = vmatprep.subr.bf16.mxu0 0
        %1204 = vmatpush1.bf16.msra.mxu0 0
        %1205 = vmatprep.subr.bf16.mxu0 0
        %1206 = vmatpush1.bf16.msra.mxu0 0
        %1207 = vmatprep.subr.bf16.mxu0 0
        %1208 = vmatpush1.bf16.msra.mxu0 0
        %1209 = vmatprep.subr.bf16.mxu0 0
        %1210 = vmatpush1.bf16.msra.mxu0 0
        %1211 = vmatprep.subr.bf16.mxu0 0
        %1212 = vmatpush1.bf16.msra.mxu0 0
        %1213 = vmatprep.subr.bf16.mxu0 0
        %1214 = vmatpush1.bf16.msra.mxu0 0
        %1215 = vmatprep.subr.bf16.mxu0 0
        %1216 = vmatpush1.bf16.msra.mxu0 %v1196
        %1217 = vmatprep.subr.bf16.mxu0 0
        %1218 = vmatpush2.bf16.msra.mxu0 0
        %1219 = vmatprep.subr.bf16.mxu0 0
        %1220 = vmatpush2.bf16.msra.mxu0 0
        %1221 = vmatprep.subr.bf16.mxu0 0
        %1222 = vmatpush2.bf16.msra.mxu0 0
        %1223 = vmatprep.subr.bf16.mxu0 0
        %1224 = vmatpush2.bf16.msra.mxu0 0
        %1225 = vmatprep.subr.bf16.mxu0 0
        %1226 = vmatpush2.bf16.msra.mxu0 0
        %1227 = vmatprep.subr.bf16.mxu0 0
        %1228 = vmatpush2.bf16.msra.mxu0 0
        %1229 = vmatprep.subr.bf16.mxu0 0
        %1230 = vmatpush2.bf16.msra.mxu0 0
        %1231 = vmatprep.subr.bf16.mxu0 0
        %1232 = vmatpush2.bf16.msra.mxu0 0
        %1233 = vmatprep.mubr.bf16.mxu0 0
        %1234 = vmatmul.mubr.bf16.gmra.mxu0 %v1199
        %v1235 = vpop.f32.mrf.mxu0
        %v1236 = vadd.f32 0.0, %v1235
        %v1237 = vpop.f32.mrf.mxu0
        %v1238 = vpop.f32.mrf.mxu0
        %v1239 = vadd.f32 0.0, %v1238
        %v1240 = vpop.f32.mrf.mxu0
        %1241 = vdwg.mxu0
        %v1242 = vpack.c.bf16 %v1239, %v1236
        %v1247 = vunpack.c.l.b16 %v989
        %v1248 = vunpack.c.l.b16 %v990
        %v1249 = vunpack.c.l.b16 %v991
        %v1250 = vunpack.c.l.b16 %v992
        %v1251 = vpack.c.b16 %v1248, %v1247
        %v1252 = vpack.c.b16 %v1250, %v1249
        %v1256 = vsel %vm1001, %v1242, 0
        %1258 = vmatprep.subr.bf16.mxu0 0
        %1259 = vmatpush1.bf16.msra.mxu0 0
        %1260 = vmatprep.subr.bf16.mxu0 0
        %1261 = vmatpush1.bf16.msra.mxu0 0
        %1262 = vmatprep.subr.bf16.mxu0 0
        %1263 = vmatpush1.bf16.msra.mxu0 0
        %1264 = vmatprep.subr.bf16.mxu0 0
        %1265 = vmatpush1.bf16.msra.mxu0 0
        %1266 = vmatprep.subr.bf16.mxu0 0
        %1267 = vmatpush1.bf16.msra.mxu0 0
        %1268 = vmatprep.subr.bf16.mxu0 0
        %1269 = vmatpush1.bf16.msra.mxu0 0
        %1270 = vmatprep.subr.bf16.mxu0 0
        %1271 = vmatpush1.bf16.msra.mxu0 %v1252
        %1272 = vmatprep.subr.bf16.mxu0 0
        %1273 = vmatpush1.bf16.msra.mxu0 %v1251
        %1274 = vmatprep.subr.bf16.mxu0 0
        %1275 = vmatpush2.bf16.msra.mxu0 0
        %1276 = vmatprep.subr.bf16.mxu0 0
        %1277 = vmatpush2.bf16.msra.mxu0 0
        %1278 = vmatprep.subr.bf16.mxu0 0
        %1279 = vmatpush2.bf16.msra.mxu0 0
        %1280 = vmatprep.subr.bf16.mxu0 0
        %1281 = vmatpush2.bf16.msra.mxu0 0
        %1282 = vmatprep.subr.bf16.mxu0 0
        %1283 = vmatpush2.bf16.msra.mxu0 0
        %1284 = vmatprep.subr.bf16.mxu0 0
        %1285 = vmatpush2.bf16.msra.mxu0 0
        %1286 = vmatprep.subr.bf16.mxu0 0
        %1287 = vmatpush2.bf16.msra.mxu0 0
        %1288 = vmatprep.subr.bf16.mxu0 0
        %1289 = vmatpush2.bf16.msra.mxu0 0
        %1290 = vmatprep.mubr.bf16.mxu0 0
        %1291 = vmatmul.mubr.bf16.gmra.mxu0 %v1256
        %v1292 = vpop.f32.mrf.mxu0
        %v1293 = vadd.f32 0.0, %v1292
        %v1294 = vpop.f32.mrf.mxu0
        %v1295 = vpop.f32.mrf.mxu0
        %v1296 = vadd.f32 0.0, %v1295
        %v1297 = vpop.f32.mrf.mxu0
        %1298 = vdwg.mxu0
        %v1303 = vunpack.c.l.b16 %v985
        %v1304 = vunpack.c.l.b16 %v986
        %v1305 = vunpack.c.l.b16 %v987
        %v1306 = vunpack.c.l.b16 %v988
        %v1307 = vpack.c.b16 %v1304, %v1303
        %v1308 = vpack.c.b16 %v1306, %v1305
        %v1312 = vsel %vm1001, %v1117, 0
        %1314 = vmatprep.subr.bf16.mxu0 0
        %1315 = vmatpush1.bf16.msra.mxu0 0
        %1316 = vmatprep.subr.bf16.mxu0 0
        %1317 = vmatpush1.bf16.msra.mxu0 0
        %1318 = vmatprep.subr.bf16.mxu0 0
        %1319 = vmatpush1.bf16.msra.mxu0 0
        %1320 = vmatprep.subr.bf16.mxu0 0
        %1321 = vmatpush1.bf16.msra.mxu0 0
        %1322 = vmatprep.subr.bf16.mxu0 0
        %1323 = vmatpush1.bf16.msra.mxu0 0
        %1324 = vmatprep.subr.bf16.mxu0 0
        %1325 = vmatpush1.bf16.msra.mxu0 0
        %1326 = vmatprep.subr.bf16.mxu0 0
        %1327 = vmatpush1.bf16.msra.mxu0 %v1308
        %1328 = vmatprep.subr.bf16.mxu0 0
        %1329 = vmatpush1.bf16.msra.mxu0 %v1307
        %1330 = vmatprep.subr.bf16.mxu0 0
        %1331 = vmatpush2.bf16.msra.mxu0 0
        %1332 = vmatprep.subr.bf16.mxu0 0
        %1333 = vmatpush2.bf16.msra.mxu0 0
        %1334 = vmatprep.subr.bf16.mxu0 0
        %1335 = vmatpush2.bf16.msra.mxu0 0
        %1336 = vmatprep.subr.bf16.mxu0 0
        %1337 = vmatpush2.bf16.msra.mxu0 0
        %1338 = vmatprep.subr.bf16.mxu0 0
        %1339 = vmatpush2.bf16.msra.mxu0 0
        %1340 = vmatprep.subr.bf16.mxu0 0
        %1341 = vmatpush2.bf16.msra.mxu0 0
        %1342 = vmatprep.subr.bf16.mxu0 0
        %1343 = vmatpush2.bf16.msra.mxu0 0
        %1344 = vmatprep.subr.bf16.mxu0 0
        %1345 = vmatpush2.bf16.msra.mxu0 0
        %1346 = vmatprep.mubr.bf16.mxu0 0
        %1347 = vmatmul.mubr.bf16.gmra.mxu0 %v1312
        %v1348 = vpop.f32.mrf.mxu0
        %v1349 = vadd.f32 %v1293, %v1348
        %v1350 = vpop.f32.mrf.mxu0
        %v1351 = vpop.f32.mrf.mxu0
        %v1352 = vadd.f32 %v1296, %v1351
        %v1353 = vpop.f32.mrf.mxu0
        %1354 = vdwg.mxu0
        %1355 = vrot.lane.b32.xlu0 %v980, 64
        %v1356 = vpop.permute.xlu0 %1355
        %1357 = vrot.lane.b32.xlu0 %v983, 64
        %v1358 = vpop.permute.xlu0 %1357
        %v1360 = vsel %vm1001, %v1356, 0
        %v1363 = vsel %vm1001, %v1358, 0
        %1365 = vmatprep.subr.bf16.mxu0 0
        %1366 = vmatpush1.bf16.xpose.msra.mxu0 0
        %1367 = vmatprep.subr.bf16.mxu0 0
        %1368 = vmatpush1.bf16.xpose.msra.mxu0 0
        %1369 = vmatprep.subr.bf16.mxu0 0
        %1370 = vmatpush1.bf16.xpose.msra.mxu0 0
        %1371 = vmatprep.subr.bf16.mxu0 0
        %1372 = vmatpush1.bf16.xpose.msra.mxu0 0
        %1373 = vmatprep.subr.bf16.mxu0 0
        %1374 = vmatpush1.bf16.xpose.msra.mxu0 0
        %1375 = vmatprep.subr.bf16.mxu0 0
        %1376 = vmatpush1.bf16.xpose.msra.mxu0 0
        %1377 = vmatprep.subr.bf16.mxu0 0
        %1378 = vmatpush1.bf16.xpose.msra.mxu0 0
        %1379 = vmatprep.subr.bf16.mxu0 0
        %1380 = vmatpush1.bf16.xpose.msra.mxu0 %v1363
        %1381 = vmatprep.subr.bf16.mxu0 0
        %1382 = vmatpush2.bf16.xpose.msra.mxu0 0
        %1383 = vmatprep.subr.bf16.mxu0 0
        %1384 = vmatpush2.bf16.xpose.msra.mxu0 0
        %1385 = vmatprep.subr.bf16.mxu0 0
        %1386 = vmatpush2.bf16.xpose.msra.mxu0 0
        %1387 = vmatprep.subr.bf16.mxu0 0
        %1388 = vmatpush2.bf16.xpose.msra.mxu0 0
        %1389 = vmatprep.subr.bf16.mxu0 0
        %1390 = vmatpush2.bf16.xpose.msra.mxu0 0
        %1391 = vmatprep.subr.bf16.mxu0 0
        %1392 = vmatpush2.bf16.xpose.msra.mxu0 0
        %1393 = vmatprep.subr.bf16.mxu0 0
        %1394 = vmatpush2.bf16.xpose.msra.mxu0 0
        %1395 = vmatprep.subr.bf16.mxu0 0
        %1396 = vmatpush2.bf16.xpose.msra.mxu0 0
        %1397 = vmatprep.mubr.bf16.mxu0 0
        %1398 = vmatmul.mubr.bf16.gmra.mxu0 %v1360
        %v1399 = vpop.f32.mrf.mxu0
        %v1400 = vadd.f32 0.0, %v1399
        %v1401 = vpop.f32.mrf.mxu0
        %v1402 = vpop.f32.mrf.mxu0
        %v1403 = vadd.f32 0.0, %v1402
        %v1404 = vpop.f32.mrf.mxu0
        %1405 = vdwg.mxu0
        %v1406 = vsel %vm1049, %v1400, -inf
        %1407 = vmax.xlane.f32.xlu0 %v1406
        %v1408 = vpop.xlane.xlu0 %1407
        %v1409 = vsel %vm1049, %v1403, -inf
        %1410 = vmax.xlane.f32.xlu0 %v1409
        %v1411 = vpop.xlane.xlu0 %1410
        %v1412 = vsub.f32 %v1400, %v1408
        %v1413 = vsub.f32 %v1403, %v1411
        %v1414 = vmul.f32 %v1412, 1.442695
        %v1415 = vpow.pop %v1414
        %v1416 = vmul.f32 %v1413, 1.442695
        %v1417 = vpow.pop %v1416
        %v1418 = vsel %vm1049, %v1415, 0.0
        %1419 = vadd.xlane.f32.xlu0 %v1418
        %v1420 = vpop.xlane.xlu0 %1419
        %v1421 = vsel %vm1049, %v1417, 0.0
        %1422 = vadd.xlane.f32.xlu0 %v1421
        %v1423 = vpop.xlane.xlu0 %1422
        %v1424 = vrcp.pop %v1420
        %v1425 = vrcp.pop %v1423
        %v1426 = vmul.f32 %v1415, %v1424
        %v1427 = vmul.f32 %v1417, %v1425
        %v1428 = vpack.c.bf16 %v1427, %v1426
        %1429 = vrot.lane.b32.xlu0 %v984, 64
        %v1430 = vpop.permute.xlu0 %1429
        %v1433 = vsel %vm1049, %v1428, 0
        %1435 = vmatprep.subr.bf16.mxu0 0
        %1436 = vmatpush1.bf16.msra.mxu0 0
        %1437 = vmatprep.subr.bf16.mxu0 0
        %1438 = vmatpush1.bf16.msra.mxu0 0
        %1439 = vmatprep.subr.bf16.mxu0 0
        %1440 = vmatpush1.bf16.msra.mxu0 0
        %1441 = vmatprep.subr.bf16.mxu0 0
        %1442 = vmatpush1.bf16.msra.mxu0 0
        %1443 = vmatprep.subr.bf16.mxu0 0
        %1444 = vmatpush1.bf16.msra.mxu0 0
        %1445 = vmatprep.subr.bf16.mxu0 0
        %1446 = vmatpush1.bf16.msra.mxu0 0
        %1447 = vmatprep.subr.bf16.mxu0 0
        %1448 = vmatpush1.bf16.msra.mxu0 0
        %1449 = vmatprep.subr.bf16.mxu0 0
        %1450 = vmatpush1.bf16.msra.mxu0 %v1430
        %1451 = vmatprep.subr.bf16.mxu0 0
        %1452 = vmatpush2.bf16.msra.mxu0 0
        %1453 = vmatprep.subr.bf16.mxu0 0
        %1454 = vmatpush2.bf16.msra.mxu0 0
        %1455 = vmatprep.subr.bf16.mxu0 0
        %1456 = vmatpush2.bf16.msra.mxu0 0
        %1457 = vmatprep.subr.bf16.mxu0 0
        %1458 = vmatpush2.bf16.msra.mxu0 0
        %1459 = vmatprep.subr.bf16.mxu0 0
        %1460 = vmatpush2.bf16.msra.mxu0 0
        %1461 = vmatprep.subr.bf16.mxu0 0
        %1462 = vmatpush2.bf16.msra.mxu0 0
        %1463 = vmatprep.subr.bf16.mxu0 0
        %1464 = vmatpush2.bf16.msra.mxu0 0
        %1465 = vmatprep.subr.bf16.mxu0 0
        %1466 = vmatpush2.bf16.msra.mxu0 0
        %1467 = vmatprep.mubr.bf16.mxu0 0
        %1468 = vmatmul.mubr.bf16.gmra.mxu0 %v1433
        %v1469 = vpop.f32.mrf.mxu0
        %v1470 = vadd.f32 0.0, %v1469
        %v1471 = vpop.f32.mrf.mxu0
        %v1472 = vpop.f32.mrf.mxu0
        %v1473 = vadd.f32 0.0, %v1472
        %v1474 = vpop.f32.mrf.mxu0
        %1475 = vdwg.mxu0
        %v1476 = vpack.c.bf16 %v1473, %v1470
        %v1481 = vunpack.c.l.b16 %v993
        %v1482 = vunpack.c.l.b16 %v994
        %v1483 = vunpack.c.l.b16 %v995
        %v1484 = vunpack.c.l.b16 %v996
        %v1485 = vpack.c.b16 %v1482, %v1481
        %v1486 = vpack.c.b16 %v1484, %v1483
        %v1490 = vsel %vm1001, %v1476, 0
        %1492 = vmatprep.subr.bf16.mxu0 0
        %1493 = vmatpush1.bf16.msra.mxu0 0
        %1494 = vmatprep.subr.bf16.mxu0 0
        %1495 = vmatpush1.bf16.msra.mxu0 0
        %1496 = vmatprep.subr.bf16.mxu0 0
        %1497 = vmatpush1.bf16.msra.mxu0 0
        %1498 = vmatprep.subr.bf16.mxu0 0
        %1499 = vmatpush1.bf16.msra.mxu0 0
        %1500 = vmatprep.subr.bf16.mxu0 0
        %1501 = vmatpush1.bf16.msra.mxu0 0
        %1502 = vmatprep.subr.bf16.mxu0 0
        %1503 = vmatpush1.bf16.msra.mxu0 0
        %1504 = vmatprep.subr.bf16.mxu0 0
        %1505 = vmatpush1.bf16.msra.mxu0 %v1486
        %1506 = vmatprep.subr.bf16.mxu0 0
        %1507 = vmatpush1.bf16.msra.mxu0 %v1485
        %1508 = vmatprep.subr.bf16.mxu0 0
        %1509 = vmatpush2.bf16.msra.mxu0 0
        %1510 = vmatprep.subr.bf16.mxu0 0
        %1511 = vmatpush2.bf16.msra.mxu0 0
        %1512 = vmatprep.subr.bf16.mxu0 0
        %1513 = vmatpush2.bf16.msra.mxu0 0
        %1514 = vmatprep.subr.bf16.mxu0 0
        %1515 = vmatpush2.bf16.msra.mxu0 0
        %1516 = vmatprep.subr.bf16.mxu0 0
        %1517 = vmatpush2.bf16.msra.mxu0 0
        %1518 = vmatprep.subr.bf16.mxu0 0
        %1519 = vmatpush2.bf16.msra.mxu0 0
        %1520 = vmatprep.subr.bf16.mxu0 0
        %1521 = vmatpush2.bf16.msra.mxu0 0
        %1522 = vmatprep.subr.bf16.mxu0 0
        %1523 = vmatpush2.bf16.msra.mxu0 0
        %1524 = vmatprep.mubr.bf16.mxu0 0
        %1525 = vmatmul.mubr.bf16.gmra.mxu0 %v1490
        %v1526 = vpop.f32.mrf.mxu0
        %v1527 = vadd.f32 0.0, %v1526
        %v1528 = vpop.f32.mrf.mxu0
        %v1529 = vpop.f32.mrf.mxu0
        %v1530 = vadd.f32 0.0, %v1529
        %v1531 = vpop.f32.mrf.mxu0
        %1532 = vdwg.mxu0
        %v1533 = vadd.f32 %v1349, %v1527
        %v1534 = vadd.f32 %v1352, %v1530
        %1535 = vrot.lane.b32.xlu0 %v980, 32
        %v1536 = vpop.permute.xlu0 %1535
        %1537 = vrot.lane.b32.xlu0 %v983, 32
        %v1538 = vpop.permute.xlu0 %1537
        %v1540 = vsel %vm1001, %v1536, 0
        %v1543 = vsel %vm1001, %v1538, 0
        %1545 = vmatprep.subr.bf16.mxu0 0
        %1546 = vmatpush1.bf16.xpose.msra.mxu0 0
        %1547 = vmatprep.subr.bf16.mxu0 0
        %1548 = vmatpush1.bf16.xpose.msra.mxu0 0
        %1549 = vmatprep.subr.bf16.mxu0 0
        %1550 = vmatpush1.bf16.xpose.msra.mxu0 0
        %1551 = vmatprep.subr.bf16.mxu0 0
        %1552 = vmatpush1.bf16.xpose.msra.mxu0 0
        %1553 = vmatprep.subr.bf16.mxu0 0
        %1554 = vmatpush1.bf16.xpose.msra.mxu0 0
        %1555 = vmatprep.subr.bf16.mxu0 0
        %1556 = vmatpush1.bf16.xpose.msra.mxu0 0
        %1557 = vmatprep.subr.bf16.mxu0 0
        %1558 = vmatpush1.bf16.xpose.msra.mxu0 0
        %1559 = vmatprep.subr.bf16.mxu0 0
        %1560 = vmatpush1.bf16.xpose.msra.mxu0 %v1543
        %1561 = vmatprep.subr.bf16.mxu0 0
        %1562 = vmatpush2.bf16.xpose.msra.mxu0 0
        %1563 = vmatprep.subr.bf16.mxu0 0
        %1564 = vmatpush2.bf16.xpose.msra.mxu0 0
        %1565 = vmatprep.subr.bf16.mxu0 0
        %1566 = vmatpush2.bf16.xpose.msra.mxu0 0
        %1567 = vmatprep.subr.bf16.mxu0 0
        %1568 = vmatpush2.bf16.xpose.msra.mxu0 0
        %1569 = vmatprep.subr.bf16.mxu0 0
        %1570 = vmatpush2.bf16.xpose.msra.mxu0 0
        %1571 = vmatprep.subr.bf16.mxu0 0
        %1572 = vmatpush2.bf16.xpose.msra.mxu0 0
        %1573 = vmatprep.subr.bf16.mxu0 0
        %1574 = vmatpush2.bf16.xpose.msra.mxu0 0
        %1575 = vmatprep.subr.bf16.mxu0 0
        %1576 = vmatpush2.bf16.xpose.msra.mxu0 0
        %1577 = vmatprep.mubr.bf16.mxu0 0
        %1578 = vmatmul.mubr.bf16.gmra.mxu0 %v1540
        %v1579 = vpop.f32.mrf.mxu0
        %v1580 = vadd.f32 0.0, %v1579
        %v1581 = vpop.f32.mrf.mxu0
        %v1582 = vpop.f32.mrf.mxu0
        %v1583 = vadd.f32 0.0, %v1582
        %v1584 = vpop.f32.mrf.mxu0
        %1585 = vdwg.mxu0
        %v1586 = vsel %vm1049, %v1580, -inf
        %1587 = vmax.xlane.f32.xlu0 %v1586
        %v1588 = vpop.xlane.xlu0 %1587
        %v1589 = vsel %vm1049, %v1583, -inf
        %1590 = vmax.xlane.f32.xlu0 %v1589
        %v1591 = vpop.xlane.xlu0 %1590
        %v1592 = vsub.f32 %v1580, %v1588
        %v1593 = vsub.f32 %v1583, %v1591
        %v1594 = vmul.f32 %v1592, 1.442695
        %v1595 = vpow.pop %v1594
        %v1596 = vmul.f32 %v1593, 1.442695
        %v1597 = vpow.pop %v1596
        %v1598 = vsel %vm1049, %v1595, 0.0
        %1599 = vadd.xlane.f32.xlu0 %v1598
        %v1600 = vpop.xlane.xlu0 %1599
        %v1601 = vsel %vm1049, %v1597, 0.0
        %1602 = vadd.xlane.f32.xlu0 %v1601
        %v1603 = vpop.xlane.xlu0 %1602
        %v1604 = vrcp.pop %v1600
        %v1605 = vrcp.pop %v1603
        %v1606 = vmul.f32 %v1595, %v1604
        %v1607 = vmul.f32 %v1597, %v1605
        %v1608 = vpack.c.bf16 %v1607, %v1606
        %1609 = vrot.lane.b32.xlu0 %v984, 32
        %v1610 = vpop.permute.xlu0 %1609
        %v1613 = vsel %vm1049, %v1608, 0
        %1615 = vmatprep.subr.bf16.mxu0 0
        %1616 = vmatpush1.bf16.msra.mxu0 0
        %1617 = vmatprep.subr.bf16.mxu0 0
        %1618 = vmatpush1.bf16.msra.mxu0 0
        %1619 = vmatprep.subr.bf16.mxu0 0
        %1620 = vmatpush1.bf16.msra.mxu0 0
        %1621 = vmatprep.subr.bf16.mxu0 0
        %1622 = vmatpush1.bf16.msra.mxu0 0
        %1623 = vmatprep.subr.bf16.mxu0 0
        %1624 = vmatpush1.bf16.msra.mxu0 0
        %1625 = vmatprep.subr.bf16.mxu0 0
        %1626 = vmatpush1.bf16.msra.mxu0 0
        %1627 = vmatprep.subr.bf16.mxu0 0
        %1628 = vmatpush1.bf16.msra.mxu0 0
        %1629 = vmatprep.subr.bf16.mxu0 0
        %1630 = vmatpush1.bf16.msra.mxu0 %v1610
        %1631 = vmatprep.subr.bf16.mxu0 0
        %1632 = vmatpush2.bf16.msra.mxu0 0
        %1633 = vmatprep.subr.bf16.mxu0 0
        %1634 = vmatpush2.bf16.msra.mxu0 0
        %1635 = vmatprep.subr.bf16.mxu0 0
        %1636 = vmatpush2.bf16.msra.mxu0 0
        %1637 = vmatprep.subr.bf16.mxu0 0
        %1638 = vmatpush2.bf16.msra.mxu0 0
        %1639 = vmatprep.subr.bf16.mxu0 0
        %1640 = vmatpush2.bf16.msra.mxu0 0
        %1641 = vmatprep.subr.bf16.mxu0 0
        %1642 = vmatpush2.bf16.msra.mxu0 0
        %1643 = vmatprep.subr.bf16.mxu0 0
        %1644 = vmatpush2.bf16.msra.mxu0 0
        %1645 = vmatprep.subr.bf16.mxu0 0
        %1646 = vmatpush2.bf16.msra.mxu0 0
        %1647 = vmatprep.mubr.bf16.mxu0 0
        %1648 = vmatmul.mubr.bf16.gmra.mxu0 %v1613
        %v1649 = vpop.f32.mrf.mxu0
        %v1650 = vadd.f32 0.0, %v1649
        %v1651 = vpop.f32.mrf.mxu0
        %v1652 = vpop.f32.mrf.mxu0
        %v1653 = vadd.f32 0.0, %v1652
        %v1654 = vpop.f32.mrf.mxu0
        %1655 = vdwg.mxu0
        %v1656 = vpack.c.bf16 %v1653, %v1650
        %v1661 = vunpack.c.l.b16 %v997
        %v1662 = vunpack.c.l.b16 %v998
        %v1663 = vunpack.c.l.b16 %v999
        %v1664 = vunpack.c.l.b16 %v1000
        %v1665 = vpack.c.b16 %v1662, %v1661
        %v1666 = vpack.c.b16 %v1664, %v1663
        %v1670 = vsel %vm1001, %v1656, 0
        %1672 = vmatprep.subr.bf16.mxu0 0
        %1673 = vmatpush1.bf16.msra.mxu0 0
        %1674 = vmatprep.subr.bf16.mxu0 0
        %1675 = vmatpush1.bf16.msra.mxu0 0
        %1676 = vmatprep.subr.bf16.mxu0 0
        %1677 = vmatpush1.bf16.msra.mxu0 0
        %1678 = vmatprep.subr.bf16.mxu0 0
        %1679 = vmatpush1.bf16.msra.mxu0 0
        %1680 = vmatprep.subr.bf16.mxu0 0
        %1681 = vmatpush1.bf16.msra.mxu0 0
        %1682 = vmatprep.subr.bf16.mxu0 0
        %1683 = vmatpush1.bf16.msra.mxu0 0
        %1684 = vmatprep.subr.bf16.mxu0 0
        %1685 = vmatpush1.bf16.msra.mxu0 %v1666
        %1686 = vmatprep.subr.bf16.mxu0 0
        %1687 = vmatpush1.bf16.msra.mxu0 %v1665
        %1688 = vmatprep.subr.bf16.mxu0 0
        %1689 = vmatpush2.bf16.msra.mxu0 0
        %1690 = vmatprep.subr.bf16.mxu0 0
        %1691 = vmatpush2.bf16.msra.mxu0 0
        %1692 = vmatprep.subr.bf16.mxu0 0
        %1693 = vmatpush2.bf16.msra.mxu0 0
        %1694 = vmatprep.subr.bf16.mxu0 0
        %1695 = vmatpush2.bf16.msra.mxu0 0
        %1696 = vmatprep.subr.bf16.mxu0 0
        %1697 = vmatpush2.bf16.msra.mxu0 0
        %1698 = vmatprep.subr.bf16.mxu0 0
        %1699 = vmatpush2.bf16.msra.mxu0 0
        %1700 = vmatprep.subr.bf16.mxu0 0
        %1701 = vmatpush2.bf16.msra.mxu0 0
        %1702 = vmatprep.subr.bf16.mxu0 0
        %1703 = vmatpush2.bf16.msra.mxu0 0
        %1704 = vmatprep.mubr.bf16.mxu0 0
        %1705 = vmatmul.mubr.bf16.gmra.mxu0 %v1670
        %v1706 = vpop.f32.mrf.mxu0
        %v1707 = vadd.f32 0.0, %v1706
        %v1708 = vpop.f32.mrf.mxu0
        %v1709 = vpop.f32.mrf.mxu0
        %v1710 = vadd.f32 0.0, %v1709
        %v1711 = vpop.f32.mrf.mxu0
        %1712 = vdwg.mxu0
        %v1713 = vadd.f32 %v1533, %v1707
        %v1714 = vadd.f32 %v1534, %v1710
        %v1715 = vld [vmem:[%s12] sm:$0x1]
        %v1717 = vlaneseq
        %v1718 = vshrl.u32 %v1717, 7
        %v1719 = vsub.s32 0, %v1718
        %v1720 = vrot.slane %v1715, %v1719
        %v1722 = vadd.f32 %v1713, %v1720
        %v1723 = vadd.f32 %v1714, %v1720
        %v1724 = vpack.c.bf16 %v1723, %v1722
        %v1726 = vunpack.c.l.b16 %v1724
        %v1727 = vunpack.c.h.b16 %v1724
        %v1728 = vpack.c.b16 %v1726, %v1726
        %v1729 = vpack.c.b16 %v1727, %v1727
        %1732 = vst [vmem:[%s560] sm:$0xf] %v1728
        %1733 = vst [vmem:[%s560 + $0x4] sm:$0xf] %v1729
        %v1734 = vunpack.c.l.bf16 %v1724
        %v1735 = vunpack.c.h.bf16 %v1724
        %v1736 = vadd.f32 %v1734, %v1735
        %v1737 = vrot.slane %v1736, 4
        %v1738 = vadd.f32 %v1736, %v1737
        %v1739 = vrot.slane %v1738, 2
        %v1740 = vadd.f32 %v1738, %v1739
        %v1741 = vrot.slane %v1740, 1
        %v1742 = vadd.f32 %v1740, %v1741
        %1743 = vst [vmem:[%s563] sm:$0x1] %v1742
        %v1744 = vmul.f32 %v1734, %v1734
        %v1745 = vmul.f32 %v1735, %v1735
        %v1746 = vadd.f32 %v1744, %v1745
        %v1747 = vrot.slane %v1746, 4
        %v1748 = vadd.f32 %v1746, %v1747
        %v1749 = vrot.slane %v1748, 2
        %v1750 = vadd.f32 %v1748, %v1749
        %v1751 = vrot.slane %v1750, 1
        %v1752 = vadd.f32 %v1750, %v1751
        %1753 = vst [vmem:[%s566] sm:$0x1] %v1752
        %p1754 = scmp.lt.s32.totalorder %s28, 1
        %s1755 = scalar_select %p1754, %s28, 1
        %s1756 = smul.addr %s1755, 2
        %s1757 = smul.addr %s1756, 4
        %s1758 = scalar_lea.vmem %s13, %s1757
        %p1759 = scmp.lt.s32.totalorder %s28, 1
        %s1760 = scalar_select %p1759, %s28, 1
        %s1761 = scalar_lea.vmem %s14, %s1760
        %p1762 = scmp.lt.s32.totalorder %s28, 1
        %s1763 = scalar_select %p1762, %s28, 1
        %s1764 = scalar_lea.vmem %s15, %s1763
        // Predicated region
        $region77: #{t2v_decoder_layer.5} parent=71 // pred_check
          %p1765 = pneg %p334
        $region78: #{t2v_decoder_layer.5} parent=71 // pred_check_branch
          %1767 = sbr.rel (%p1765) target = $region80
        $region79: #{t2v_decoder_layer.5} parent=71 // pred_region
          _
        $region80: #{t2v_decoder_layer.5} parent=71 // pred_fallthru
          _
        // Predicated region
        $region81: #{t2v_decoder_layer.5} parent=71 // pred_check
          %p1768 = pneg %p360
        $region82: #{t2v_decoder_layer.5} parent=71 // pred_check_branch
          %1770 = sbr.rel (%p1768) target = $region84
        $region83: #{t2v_decoder_layer.5} parent=71 // pred_region
          _
        $region84: #{t2v_decoder_layer.5} parent=71 // pred_fallthru
          _
        // Predicated region
        $region85: #{t2v_decoder_layer.5} parent=71 // pred_check
          %p1771 = pneg %p386
        $region86: #{t2v_decoder_layer.5} parent=71 // pred_check_branch
          %1773 = sbr.rel (%p1771) target = $region88
        $region87: #{t2v_decoder_layer.5} parent=71 // pred_region
          _
        $region88: #{t2v_decoder_layer.5} parent=71 // pred_fallthru
          _
      $region72: #{t2v_decoder_layer.5} parent=5 // pred_fallthru
        _
      %p1774 = scmp.le.s32.totalorder 2, %s23
      // Predicated region
      $region89: #{t2v_decoder_layer.5} parent=5 // pred_check
        %p1775 = pneg %p1774
      $region90: #{t2v_decoder_layer.5} parent=5 // pred_check_branch
        %1777 = sbr.rel (%p1775) target = $region92
      $region91: #{t2v_decoder_layer.5} parent=5 // pred_region
        %s1778 = ssub.s32 %s23, 2
        // Predicated region
        $region93: #{t2v_decoder_layer.5} parent=91 // pred_check
          %p1779 = pneg %p340
        $region94: #{t2v_decoder_layer.5} parent=91 // pred_check_branch
          %1781 = sbr.rel (%p1779) target = $region96
        $region95: #{t2v_decoder_layer.5} parent=91 // pred_region
          %p1782 = scmp.lt.s32.totalorder %s29, 1
          %s1783 = scalar_select %p1782, %s29, 1
          %s1784 = smul.addr %s1783, 2
          %s1785 = smul.addr %s1784, 4
          %s1786 = scalar_lea.vmem %s13, %s1785
        $region96: #{t2v_decoder_layer.5} parent=91 // pred_fallthru
          _
        // Predicated region
        $region97: #{t2v_decoder_layer.5} parent=91 // pred_check
          %p1787 = pneg %p366
        $region98: #{t2v_decoder_layer.5} parent=91 // pred_check_branch
          %1789 = sbr.rel (%p1787) target = $region100
        $region99: #{t2v_decoder_layer.5} parent=91 // pred_region
          %p1790 = scmp.lt.s32.totalorder %s29, 1
          %s1791 = scalar_select %p1790, %s29, 1
          %s1792 = scalar_lea.vmem %s14, %s1791
        $region100: #{t2v_decoder_layer.5} parent=91 // pred_fallthru
          _
        // Predicated region
        $region101: #{t2v_decoder_layer.5} parent=91 // pred_check
          %p1793 = pneg %p392
        $region102: #{t2v_decoder_layer.5} parent=91 // pred_check_branch
          %1795 = sbr.rel (%p1793) target = $region104
        $region103: #{t2v_decoder_layer.5} parent=91 // pred_region
          %p1796 = scmp.lt.s32.totalorder %s29, 1
          %s1797 = scalar_select %p1796, %s29, 1
          %s1798 = scalar_lea.vmem %s15, %s1797
        $region104: #{t2v_decoder_layer.5} parent=91 // pred_fallthru
          _
      $region92: #{t2v_decoder_layer.5} parent=5 // pred_fallthru
        _
    $region6: #{t2v_decoder_layer.5} parent=1 // loop_footer
      %s27 = sadd.s32 1, %s23
    $region7: #{t2v_decoder_layer.5} parent=1 // loop_footer_branch
      %22 = sbr.rel target = $region3
    $region8: #{t2v_decoder_layer.5} parent=1 // loop_exit
      _
    %1799 = vsyncpa [#allocation3], 1
    %s1800 = scalar_lea.sflag [#allocation3], 1
    %1801 = vsyncpa %s1800, 1

</llo_original>
